<compile_context>
chip_gen: v5e
topology: v5e:2x2
jax: 0.10.0
libtpu: 0.0.40
codegen_flags: <defaults>
</compile_context>

<pallas_src>
import functools

import numpy as np

import jax
import jax.numpy as jnp
from jax import lax
from jax.experimental import pallas as pl
from jax.experimental.pallas import tpu as pltpu

NORM_EPS = 1e-12   # F.normalize default eps (applied as max(||x||, eps))
GEM_EPS = 1e-6     # GeMPooling clamp eps


def _gem_pow(xc, static_pow, p_bcast):
    """clamp-ed activations ** p. VPU-only fast paths for small integer static p."""
    if static_pow == 1:
        return xc
    if static_pow == 2:
        return xc * xc
    if static_pow == 3:
        return xc * xc * xc
    if static_pow == 4:
        x2 = xc * xc
        return x2 * x2
    # General learnable per-channel p: exp + log on the EUP.
    return jnp.exp(p_bcast * jnp.log(xc))


def _gem_inv_pow(pooled, static_pow, p_row):
    """pooled ** (1/p) on the small (tb, C) slab."""
    if static_pow == 1:
        return pooled
    if static_pow == 2:
        return jnp.sqrt(pooled)
    if static_pow == 3:
        return jnp.exp(jnp.log(pooled) * (1.0 / 3.0))
    if static_pow == 4:
        return jnp.sqrt(jnp.sqrt(pooled))
    return jnp.exp(jnp.log(pooled) / p_row)


def _cosplace_kernel(x_ref, p_col_ref, p_row_ref, w_ref, b_ref, o_ref, pooled_ref,
                     *, sub_b: int, static_pow):
    # x_ref:      (tb, C, HW)       NCHW slab: C on sublanes, HW(=49) on lanes
    # p_col_ref:  (C, 1)            GeM exponent (broadcast over the slab)
    # p_row_ref:  (1, C)            GeM exponent (broadcast over pooled rows)
    # w_ref:      (C, out_dim)      projector weight, pre-transposed, resident
    # b_ref:      (1, out_dim)      projector bias, resident
    # o_ref:      (tb, out_dim)
    # pooled_ref: (n_sub, sub_b, C) f32 scratch for pooled descriptors
    tb, C, HW = x_ref.shape
    n_sub = tb // sub_b

    if static_pow is None:
        p_bcast = p_col_ref[...][None, :, :]          # (1, C, 1), hoisted out of the loop
        p_row = p_row_ref[...]                        # (1, C)
    else:
        p_bcast = None
        p_row = None

    def process(xi):
        # xi: (sb, C, HW) f32 -> pooled (sb, C)
        # 1) per-pixel L2 normalization over channels (sublane-axis reduce);
        #    rsqrt(max(ssq, eps^2)) == 1 / max(||x||, eps) since sqrt is monotone.
        ssq = jnp.sum(xi * xi, axis=1, keepdims=True)                 # (sb, 1, HW)
        xi = xi * lax.rsqrt(jnp.maximum(ssq, NORM_EPS * NORM_EPS))
        # 2) GeM clamp + per-channel power.
        xc = jnp.maximum(xi, GEM_EPS)
        xg = _gem_pow(xc, static_pow, p_bcast)
        # 3) AvgPool2d(7): mean over the full logical HW extent (lane-axis reduce;
        #    padded lanes are masked by the compiler's logical-shape handling).
        return jnp.mean(xg, axis=2)                                   # (sb, C)

    if n_sub == 1:
        pooled = process(x_ref[...].astype(jnp.float32))              # (tb, C)
    else:
        # Process the batch tile in sub_b-row chunks so the big (sub_b, C, HW)
        # temporaries stay ~2 MiB regardless of tb (bounded live ranges).
        @pl.loop(0, n_sub)
        def _(j):
            row0 = pl.multiple_of(j * sub_b, sub_b)
            xi = x_ref[pl.ds(row0, sub_b)].astype(jnp.float32)        # (sub_b, C, HW)
            pooled_ref[j] = process(xi)                               # (sub_b, C)
        # Static-index gather of the per-chunk results (each chunk is exactly
        # 8 sublanes, so this is a cheap, tile-aligned concatenation).
        pooled = jnp.concatenate([pooled_ref[jj] for jj in range(n_sub)], axis=0)

    # 4) inverse power on the small (tb, C) slab.
    pooled = _gem_inv_pow(pooled, static_pow, p_row)
    # 5) linear projector on the MXU (K=512, N=out_dim: single tile, resident W).
    y = jnp.dot(pooled, w_ref[...], preferred_element_type=jnp.float32) + b_ref[...]
    # 6) L2-normalize over out_dim (out_dim=128 keeps the output lane-dense).
    yssq = jnp.sum(y * y, axis=-1, keepdims=True)
    o_ref[...] = (y * lax.rsqrt(jnp.maximum(yssq, NORM_EPS * NORM_EPS))).astype(o_ref.dtype)


def cosplace_aggregator(x_nchw, p, weight, bias, *, static_p=None, tb=None,
                        vmem_limit_bytes=48 * 1024 * 1024):
    """CosPlaceAggregator forward.

    x_nchw: (B, C, H, W) with C == 512, H == W == 7 (module requirement).
    p:      (C,) GeM exponents.   weight: (out_dim, C).   bias: (out_dim,).
    static_p: optional Python float; integer values in {1,2,3,4} (e.g. the GeM
              init 3.0) enable a VPU-only power fast path. Checked against p
              when p is a concrete array.
    tb:     batch tile size (default min(B, 48); keep cdiv(B, tb) >= 2 on v7x so
            both TensorCores get work).
    """
    B, C, H, W = x_nchw.shape
    out_dim, in_dim = weight.shape
    assert in_dim == C, "projector in_dim must match channel count"
    assert H == 7 and W == 7, "reference module only supports 7x7 feature maps"
    HW = H * W

    # Consume NCHW directly: merging the trailing (H, W) dims is free (no HBM
    # pass), unlike the previous channels-last transpose.
    x_r = x_nchw.reshape(B, C, HW)
    p_col = p.reshape(C, 1).astype(jnp.float32)
    p_row = p.reshape(1, C).astype(jnp.float32)
    w_t = jnp.transpose(weight).astype(jnp.float32)          # (C, out_dim), tiny
    b2 = bias.reshape(1, out_dim).astype(jnp.float32)

    if tb is None:
        # The (tb, C, HW) tile lane-pads 49->128 (~256 KiB / row at f32); tb=48
        # keeps the double-buffered input at ~24 MiB while amortizing the
        # ~0.35us per-grid-step overhead (safe on v7x's 64 MiB physical VMEM).
        tb = B if B <= 48 else 48
    sub_b = 8 if tb % 8 == 0 else tb          # sub-chunk rows processed per loop step
    assert tb % sub_b == 0
    n_sub = tb // sub_b
    grid = (pl.cdiv(B, tb),)

    static_pow = None
    if static_p is not None:
        sp = float(static_p)
        # Guard the fast path against a p that has trained away from static_p
        # (only checkable when p is concrete; under jit we trust the caller).
        p_host = None
        try:
            p_host = np.asarray(jax.device_get(p))
        except Exception:
            p_host = None
        if p_host is not None and not np.all(p_host == np.float32(sp)):
            raise ValueError("static_p fast path requested but p != static_p")
        if sp in (1.0, 2.0, 3.0, 4.0):
            static_pow = int(sp)
        # Other static values fall back to the general per-channel path.

    kernel = functools.partial(_cosplace_kernel, sub_b=sub_b, static_pow=static_pow)

    return pl.pallas_call(
        kernel,
        out_shape=jax.ShapeDtypeStruct((B, out_dim), jnp.float32),
        grid_spec=pltpu.PrefetchScalarGridSpec(
            num_scalar_prefetch=0,
            grid=grid,
            in_specs=[
                pl.BlockSpec((tb, C, HW), lambda b: (b, 0, 0)),       # batch-tiled NCHW slab
                # Constant index maps -> blocks are invariant across the grid and
                # are only DMA'd once (no need for an explicit Buffered(1)).
                pl.BlockSpec((C, 1), lambda b: (0, 0)),               # p (column), resident
                pl.BlockSpec((1, C), lambda b: (0, 0)),               # p (row), resident
                pl.BlockSpec((C, out_dim), lambda b: (0, 0)),         # W.T, resident
                pl.BlockSpec((1, out_dim), lambda b: (0, 0)),         # bias, resident
            ],
            out_specs=pl.BlockSpec((tb, out_dim), lambda b: (b, 0)),  # lane-dense output
            scratch_shapes=[pltpu.VMEM((n_sub, sub_b, C), jnp.float32)],
        ),
        compiler_params=pltpu.CompilerParams(
            dimension_semantics=("parallel",),   # batch tiles can split across v7x's 2 TCs
            vmem_limit_bytes=vmem_limit_bytes,   # <= ~56 MiB keeps v7x double-buffering intact
        ),
    )(x_r, p_col, p_row, w_t, b2)


def _reference(x_nchw, p, weight, bias):
    """Pure-JAX reference mirroring the PyTorch forward."""
    x = x_nchw.astype(jnp.float32)
    n = jnp.sqrt(jnp.sum(x * x, axis=1, keepdims=True))
    x = x / jnp.maximum(n, NORM_EPS)
    x = jnp.power(jnp.maximum(x, GEM_EPS), p[None, :, None, None])
    x = jnp.mean(x, axis=(2, 3))                                 # AvgPool2d(7) + squeeze
    x = jnp.power(x, 1.0 / p[None, :])
    y = x @ weight.T + bias[None, :]
    yn = jnp.sqrt(jnp.sum(y * y, axis=1, keepdims=True))
    return y / jnp.maximum(yn, NORM_EPS)


if __name__ == "__main__":
    # GeMPooling hard-codes feature_size == 512 (p.reshape((512,1,1))) and a 7x7
    # pool, so C must be 512 and the spatial dims 7x7.
    C, H, W = 512, 7, 7
    OUT_DIM = 128

    key = jax.random.PRNGKey(0)
    kx, kw, kb, kp, kx2 = jax.random.split(key, 5)

    bound = 1.0 / (C ** 0.5)
    weight = jax.random.uniform(kw, (OUT_DIM, C), jnp.float32, -bound, bound)
    bias = jax.random.uniform(kb, (OUT_DIM,), jnp.float32, -bound, bound)
    p_init = jnp.ones((C,), dtype=jnp.float32) * 3.0                 # GeM init_norm
    p_var = 3.0 + 0.25 * jax.random.uniform(kp, (C,), jnp.float32)   # "trained" p

    # --- (a) small batch: general per-channel path + static cube fast path ---
    B = 2
    x = jax.random.normal(kx, (B, C, H, W), dtype=jnp.float32)
    ref = jax.block_until_ready(_reference(x, p_init, weight, bias))

    out_gen = jax.block_until_ready(cosplace_aggregator(x, p_init, weight, bias))
    assert out_gen.shape == (B, OUT_DIM)
    assert jnp.allclose(out_gen, ref, atol=1e-4, rtol=1e-4)

    out_fast = jax.block_until_ready(
        cosplace_aggregator(x, p_init, weight, bias, static_p=3.0))
    assert jnp.allclose(out_fast, ref, atol=1e-4, rtol=1e-4)

    # --- (b) larger tile: exercises the in-kernel sub-chunk loop (n_sub > 1) ---
    B2 = 16
    x2 = jax.random.normal(kx2, (B2, C, H, W), dtype=jnp.float32)
    ref2 = jax.block_until_ready(_reference(x2, p_var, weight, bias))
    out2 = jax.block_until_ready(cosplace_aggregator(x2, p_var, weight, bias))
    assert out2.shape == (B2, OUT_DIM)
    assert jnp.allclose(out2, ref2, atol=2e-4, rtol=2e-4)

    # --- (c) multi-step grid with a partial last batch tile (B % tb != 0) ------
    B3 = 12
    x3 = x2[:B3]
    ref3 = jax.block_until_ready(_reference(x3, p_init, weight, bias))
    out3 = jax.block_until_ready(
        cosplace_aggregator(x3, p_init, weight, bias, static_p=3.0, tb=8))
    assert out3.shape == (B3, OUT_DIM)
    assert jnp.allclose(out3, ref3, atol=1e-4, rtol=1e-4)

    print("KERNEL_OK")
</pallas_src>

<mosaic_0001>
module attributes {stable_mosaic.version = 11 : i64} {
  func.func @_cosplace_kernel(%arg0: i32, %arg1: memref<2x512x49xf32, #tpu.memory_space<vmem>>, %arg2: memref<512x1xf32, #tpu.memory_space<vmem>>, %arg3: memref<1x512xf32, #tpu.memory_space<vmem>>, %arg4: memref<512x128xf32, #tpu.memory_space<vmem>>, %arg5: memref<1x128xf32, #tpu.memory_space<vmem>>, %arg6: memref<2x128xf32, #tpu.memory_space<vmem>>, %arg7: memref<1x2x512xf32, #tpu.memory_space<vmem>>) attributes {dimension_semantics = [#tpu.dimension_semantics<parallel>], iteration_bounds = array<i64: 1>, scalar_prefetch = 0 : i64, scratch_operands = 1 : i64, tpu.core_type = #tpu.core_type<tc>, window_params = [{transform_indices = @transform_0, window_bounds = array<i64: 2, 512, 49>}, {pipeline_mode = #tpu.pipeline_mode<synchronous>, transform_indices = @transform_1, window_bounds = array<i64: 512, 1>}, {pipeline_mode = #tpu.pipeline_mode<synchronous>, transform_indices = @transform_2, window_bounds = array<i64: 1, 512>}, {pipeline_mode = #tpu.pipeline_mode<synchronous>, transform_indices = @transform_3, window_bounds = array<i64: 512, 128>}, {pipeline_mode = #tpu.pipeline_mode<synchronous>, transform_indices = @transform_4, window_bounds = array<i64: 1, 128>}, {transform_indices = @transform_5, window_bounds = array<i64: 2, 128>}]} {
    %c0 = arith.constant 0 : index
    %c0_0 = arith.constant 0 : index
    %0 = vector.load %arg2[%c0, %c0_0] : memref<512x1xf32, #tpu.memory_space<vmem>>, vector<512x1xf32>
    %1 = vector.shape_cast %0 : vector<512x1xf32> to vector<1x512x1xf32>
    %c0_1 = arith.constant 0 : index
    %c0_2 = arith.constant 0 : index
    %2 = vector.load %arg3[%c0_1, %c0_2] : memref<1x512xf32, #tpu.memory_space<vmem>>, vector<1x512xf32>
    %c0_3 = arith.constant 0 : index
    %c0_4 = arith.constant 0 : index
    %c0_5 = arith.constant 0 : index
    %3 = vector.load %arg1[%c0_3, %c0_4, %c0_5] : memref<2x512x49xf32, #tpu.memory_space<vmem>>, vector<2x512x49xf32>
    %4 = arith.mulf %3, %3 : vector<2x512x49xf32>
    %cst = arith.constant dense<0.000000e+00> : vector<2x49xf32>
    %5 = vector.multi_reduction <add>, %4, %cst [1] : vector<2x512x49xf32> to vector<2x49xf32>
    %6 = vector.shape_cast %5 : vector<2x49xf32> to vector<2x1x49xf32>
    %cst_6 = arith.constant 1.000000e-24 : f32
    %7 = vector.broadcast %cst_6 : f32 to vector<2x1x49xf32>
    %8 = arith.maximumf %6, %7 : vector<2x1x49xf32>
    %9 = math.rsqrt %8 : vector<2x1x49xf32>
    %10 = vector.broadcast %9 : vector<2x1x49xf32> to vector<2x512x49xf32>
    %11 = arith.mulf %3, %10 : vector<2x512x49xf32>
    %cst_7 = arith.constant 9.99999997E-7 : f32
    %12 = vector.broadcast %cst_7 : f32 to vector<2x512x49xf32>
    %13 = arith.maximumf %11, %12 : vector<2x512x49xf32>
    %14 = math.log %13 : vector<2x512x49xf32>
    %15 = vector.broadcast %1 : vector<1x512x1xf32> to vector<2x512x49xf32>
    %16 = arith.mulf %15, %14 : vector<2x512x49xf32>
    %17 = math.exp %16 : vector<2x512x49xf32>
    %cst_8 = arith.constant dense<0.000000e+00> : vector<2x512xf32>
    %18 = vector.multi_reduction <add>, %17, %cst_8 [2] : vector<2x512x49xf32> to vector<2x512xf32>
    %cst_9 = arith.constant 4.900000e+01 : f32
    %19 = vector.broadcast %cst_9 : f32 to vector<2x512xf32>
    %20 = arith.divf %18, %19 : vector<2x512xf32>
    %21 = math.log %20 : vector<2x512xf32>
    %22 = vector.broadcast %2 : vector<1x512xf32> to vector<2x512xf32>
    %23 = arith.divf %21, %22 : vector<2x512xf32>
    %24 = math.exp %23 : vector<2x512xf32>
    %c0_10 = arith.constant 0 : index
    %c0_11 = arith.constant 0 : index
    %25 = vector.load %arg4[%c0_10, %c0_11] : memref<512x128xf32, #tpu.memory_space<vmem>>, vector<512x128xf32>
    %cst_12 = arith.constant dense<0.000000e+00> : vector<2x128xf32>
    %26 = tpu.matmul %24, %25, %cst_12 {dimension_numbers = #tpu.dot_dimension_numbers<[1], [0], [0], [1], [0, 0, 1, 1], [], []>} : vector<2x512xf32>, vector<512x128xf32>, vector<2x128xf32> -> vector<2x128xf32>
    %c0_13 = arith.constant 0 : index
    %c0_14 = arith.constant 0 : index
    %27 = vector.load %arg5[%c0_13, %c0_14] : memref<1x128xf32, #tpu.memory_space<vmem>>, vector<1x128xf32>
    %28 = vector.broadcast %27 : vector<1x128xf32> to vector<2x128xf32>
    %29 = arith.addf %26, %28 : vector<2x128xf32>
    %30 = arith.mulf %29, %29 : vector<2x128xf32>
    %cst_15 = arith.constant dense<0.000000e+00> : vector<2xf32>
    %31 = vector.multi_reduction <add>, %30, %cst_15 [1] : vector<2x128xf32> to vector<2xf32>
    %32 = vector.shape_cast %31 : vector<2xf32> to vector<2x1xf32>
    %cst_16 = arith.constant 1.000000e-24 : f32
    %33 = vector.broadcast %cst_16 : f32 to vector<2x1xf32>
    %34 = arith.maximumf %32, %33 : vector<2x1xf32>
    %35 = math.rsqrt %34 : vector<2x1xf32>
    %36 = vector.broadcast %35 : vector<2x1xf32> to vector<2x128xf32>
    %37 = arith.mulf %29, %36 : vector<2x128xf32>
    %c0_17 = arith.constant 0 : index
    %c0_18 = arith.constant 0 : index
    %38 = vector.load %arg6[%c0_17, %c0_18] : memref<2x128xf32, #tpu.memory_space<vmem>>, vector<2x128xf32>
    tpu.vector_store %arg6[%c0_17, %c0_18], %37 {strides = array<i32>} : memref<2x128xf32, #tpu.memory_space<vmem>>, vector<2x128xf32>,
    return
  }
  func.func @transform_0(%arg0: i32) -> (i32, i32, i32) {
    %c0_i32 = arith.constant 0 : i32
    %c0_i32_0 = arith.constant 0 : i32
    %c0_i32_1 = arith.constant 0 : i32
    return %arg0, %c0_i32, %c0_i32_0 : i32, i32, i32
  }
  func.func @transform_1(%arg0: i32) -> (i32, i32) {
    %c0_i32 = arith.constant 0 : i32
    %c0_i32_0 = arith.constant 0 : i32
    %c0_i32_1 = arith.constant 0 : i32
    return %c0_i32, %c0_i32_0 : i32, i32
  }
  func.func @transform_2(%arg0: i32) -> (i32, i32) {
    %c0_i32 = arith.constant 0 : i32
    %c0_i32_0 = arith.constant 0 : i32
    %c0_i32_1 = arith.constant 0 : i32
    return %c0_i32, %c0_i32_0 : i32, i32
  }
  func.func @transform_3(%arg0: i32) -> (i32, i32) {
    %c0_i32 = arith.constant 0 : i32
    %c0_i32_0 = arith.constant 0 : i32
    %c0_i32_1 = arith.constant 0 : i32
    return %c0_i32, %c0_i32_0 : i32, i32
  }
  func.func @transform_4(%arg0: i32) -> (i32, i32) {
    %c0_i32 = arith.constant 0 : i32
    %c0_i32_0 = arith.constant 0 : i32
    %c0_i32_1 = arith.constant 0 : i32
    return %c0_i32, %c0_i32_0 : i32, i32
  }
  func.func @transform_5(%arg0: i32) -> (i32, i32) {
    %c0_i32 = arith.constant 0 : i32
    %c0_i32_0 = arith.constant 0 : i32
    return %arg0, %c0_i32 : i32, i32
  }
}

</mosaic_0001>

<llo_original>
// kernel: tpu_custom_call.1
$region0: #{tpu_custom_call.1}
  #allocation0 [shape = 'u32[]', space=smem, size = 0x4, offset = 0x4, fixed_abs, tag = 'smem constant byte address 0x4 - core index']
  #allocation1 [shape = 'u32[72,128]{1,0:T(1,128)}', space=vmem, size = 0x9000, scoped, tag = 'internal scratch']
  #allocation2 [shape = 'f32[1,2,512]{2,1,0:T(2,128)}', space=vmem, size = 0x1000, scoped, tag = 'scratch operand']
  %s0 = inlined_call_operand.vmem [shape: f32[2,512,49], index: 0, kind: input, shape index: {}]
  %s1 = inlined_call_operand.vmem [shape: f32[512,1], index: 1, kind: input, shape index: {}]
  %s2 = inlined_call_operand.vmem [shape: f32[1,512], index: 2, kind: input, shape index: {}]
  %s3 = inlined_call_operand.vmem [shape: f32[512,128], index: 3, kind: input, shape index: {}]
  %s4 = inlined_call_operand.vmem [shape: f32[1,128], index: 4, kind: input, shape index: {}]
  %s5 = inlined_call_operand.hbm [shape: f32[2,128], index: 5, kind: output, shape index: {}]
  %s6 = sld [smem:[#allocation0]]
  $region30: #{tpu_custom_call.1} parent=0
    _
  %s8 = ssub.s32 1, %s6
  %s9 = scalar_select 0, %s8, %s6
  $region1: #{tpu_custom_call.1} parent=0
    #allocation3 [shape = 'u8[1024]{0}', space=vmem, size = 0x400, scoped, tag = 'output window, operand 0, single buffered']
    #allocation4 [shape = 's32[1]{0}', space=sflag, size = 0x4, scoped, tag = 'scoped memory for tpu_custom_call.1']
    %10 = vsyncpa [#allocation4], 0
    // Predicated region
    $region2: #{tpu_custom_call.1} parent=1 // pred_check
      _
    $region3: #{tpu_custom_call.1} parent=1 // pred_check_branch
      %12 = sbr.rel (0) target = $region5
    $region4: #{tpu_custom_call.1} parent=1 // pred_region
      _
    $region5: #{tpu_custom_call.1} parent=1 // pred_fallthru
      _
    // Predicated region
    $region6: #{tpu_custom_call.1} parent=1 // pred_check
      _
    $region7: #{tpu_custom_call.1} parent=1 // pred_check_branch
      %14 = sbr.rel (0) target = $region9
    $region8: #{tpu_custom_call.1} parent=1 // pred_region
      _
    $region9: #{tpu_custom_call.1} parent=1 // pred_fallthru
      _
    // Predicated region
    $region10: #{tpu_custom_call.1} parent=1 // pred_check
      _
    $region11: #{tpu_custom_call.1} parent=1 // pred_check_branch
      %16 = sbr.rel (0) target = $region13
    $region12: #{tpu_custom_call.1} parent=1 // pred_region
      _
    $region13: #{tpu_custom_call.1} parent=1 // pred_fallthru
      _
    // Predicated region
    $region14: #{tpu_custom_call.1} parent=1 // pred_check
      _
    $region15: #{tpu_custom_call.1} parent=1 // pred_check_branch
      %18 = sbr.rel (0) target = $region17
    $region16: #{tpu_custom_call.1} parent=1 // pred_region
      _
    $region17: #{tpu_custom_call.1} parent=1 // pred_fallthru
      _
    // Predicated region
    $region18: #{tpu_custom_call.1} parent=1 // pred_check
      _
    $region19: #{tpu_custom_call.1} parent=1 // pred_check_branch
      %20 = sbr.rel (0) target = $region21
    $region20: #{tpu_custom_call.1} parent=1 // pred_region
      _
    $region21: #{tpu_custom_call.1} parent=1 // pred_fallthru
      _
    %v21 = vld [vmem:[%s1] sm:$0xff]
    %v22 = vld [vmem:[%s1 + $0x8] sm:$0xff]
    %v23 = vld [vmem:[%s1 + $0x10] sm:$0xff]
    %v24 = vld [vmem:[%s1 + $0x18] sm:$0xff]
    %v25 = vld [vmem:[%s1 + $0x20] sm:$0xff]
    %v26 = vld [vmem:[%s1 + $0x28] sm:$0xff]
    %v27 = vld [vmem:[%s1 + $0x30] sm:$0xff]
    %v28 = vld [vmem:[%s1 + $0x38] sm:$0xff]
    %v29 = vld [vmem:[%s1 + $0x40] sm:$0xff]
    %v30 = vld [vmem:[%s1 + $0x48] sm:$0xff]
    %v31 = vld [vmem:[%s1 + $0x50] sm:$0xff]
    %v32 = vld [vmem:[%s1 + $0x58] sm:$0xff]
    %v33 = vld [vmem:[%s1 + $0x60] sm:$0xff]
    %v34 = vld [vmem:[%s1 + $0x68] sm:$0xff]
    %v35 = vld [vmem:[%s1 + $0x70] sm:$0xff]
    %v36 = vld [vmem:[%s1 + $0x78] sm:$0xff]
    %v37 = vld [vmem:[%s1 + $0x80] sm:$0xff]
    %v38 = vld [vmem:[%s1 + $0x88] sm:$0xff]
    %v39 = vld [vmem:[%s1 + $0x90] sm:$0xff]
    %v40 = vld [vmem:[%s1 + $0x98] sm:$0xff]
    %v41 = vld [vmem:[%s1 + $0xa0] sm:$0xff]
    %v42 = vld [vmem:[%s1 + $0xa8] sm:$0xff]
    %v43 = vld [vmem:[%s1 + $0xb0] sm:$0xff]
    %v44 = vld [vmem:[%s1 + $0xb8] sm:$0xff]
    %v45 = vld [vmem:[%s1 + $0xc0] sm:$0xff]
    %v46 = vld [vmem:[%s1 + $0xc8] sm:$0xff]
    %v47 = vld [vmem:[%s1 + $0xd0] sm:$0xff]
    %v48 = vld [vmem:[%s1 + $0xd8] sm:$0xff]
    %v49 = vld [vmem:[%s1 + $0xe0] sm:$0xff]
    %v50 = vld [vmem:[%s1 + $0xe8] sm:$0xff]
    %v51 = vld [vmem:[%s1 + $0xf0] sm:$0xff]
    %v52 = vld [vmem:[%s1 + $0xf8] sm:$0xff]
    %v53 = vld [vmem:[%s1 + $0x100] sm:$0xff]
    %v54 = vld [vmem:[%s1 + $0x108] sm:$0xff]
    %v55 = vld [vmem:[%s1 + $0x110] sm:$0xff]
    %v56 = vld [vmem:[%s1 + $0x118] sm:$0xff]
    %v57 = vld [vmem:[%s1 + $0x120] sm:$0xff]
    %v58 = vld [vmem:[%s1 + $0x128] sm:$0xff]
    %v59 = vld [vmem:[%s1 + $0x130] sm:$0xff]
    %v60 = vld [vmem:[%s1 + $0x138] sm:$0xff]
    %v61 = vld [vmem:[%s1 + $0x140] sm:$0xff]
    %v62 = vld [vmem:[%s1 + $0x148] sm:$0xff]
    %v63 = vld [vmem:[%s1 + $0x150] sm:$0xff]
    %v64 = vld [vmem:[%s1 + $0x158] sm:$0xff]
    %v65 = vld [vmem:[%s1 + $0x160] sm:$0xff]
    %v66 = vld [vmem:[%s1 + $0x168] sm:$0xff]
    %v67 = vld [vmem:[%s1 + $0x170] sm:$0xff]
    %v68 = vld [vmem:[%s1 + $0x178] sm:$0xff]
    %v69 = vld [vmem:[%s1 + $0x180] sm:$0xff]
    %v70 = vld [vmem:[%s1 + $0x188] sm:$0xff]
    %v71 = vld [vmem:[%s1 + $0x190] sm:$0xff]
    %v72 = vld [vmem:[%s1 + $0x198] sm:$0xff]
    %v73 = vld [vmem:[%s1 + $0x1a0] sm:$0xff]
    %v74 = vld [vmem:[%s1 + $0x1a8] sm:$0xff]
    %v75 = vld [vmem:[%s1 + $0x1b0] sm:$0xff]
    %v76 = vld [vmem:[%s1 + $0x1b8] sm:$0xff]
    %v77 = vld [vmem:[%s1 + $0x1c0] sm:$0xff]
    %v78 = vld [vmem:[%s1 + $0x1c8] sm:$0xff]
    %v79 = vld [vmem:[%s1 + $0x1d0] sm:$0xff]
    %v80 = vld [vmem:[%s1 + $0x1d8] sm:$0xff]
    %v81 = vld [vmem:[%s1 + $0x1e0] sm:$0xff]
    %v82 = vld [vmem:[%s1 + $0x1e8] sm:$0xff]
    %v83 = vld [vmem:[%s1 + $0x1f0] sm:$0xff]
    %v84 = vld [vmem:[%s1 + $0x1f8] sm:$0xff]
    %v85 = vld [vmem:[%s2] sm:$0xf]
    %v86 = vld [vmem:[%s0] sm:$0xff]
    %v87 = vld [vmem:[%s0 + $0x8] sm:$0xff]
    %v88 = vld [vmem:[%s0 + $0x10] sm:$0xff]
    %v89 = vld [vmem:[%s0 + $0x18] sm:$0xff]
    %v90 = vld [vmem:[%s0 + $0x20] sm:$0xff]
    %v91 = vld [vmem:[%s0 + $0x28] sm:$0xff]
    %v92 = vld [vmem:[%s0 + $0x30] sm:$0xff]
    %v93 = vld [vmem:[%s0 + $0x38] sm:$0xff]
    %v94 = vld [vmem:[%s0 + $0x40] sm:$0xff]
    %v95 = vld [vmem:[%s0 + $0x48] sm:$0xff]
    %v96 = vld [vmem:[%s0 + $0x50] sm:$0xff]
    %v97 = vld [vmem:[%s0 + $0x58] sm:$0xff]
    %v98 = vld [vmem:[%s0 + $0x60] sm:$0xff]
    %v99 = vld [vmem:[%s0 + $0x68] sm:$0xff]
    %v100 = vld [vmem:[%s0 + $0x70] sm:$0xff]
    %v101 = vld [vmem:[%s0 + $0x78] sm:$0xff]
    %v102 = vld [vmem:[%s0 + $0x80] sm:$0xff]
    %v103 = vld [vmem:[%s0 + $0x88] sm:$0xff]
    %v104 = vld [vmem:[%s0 + $0x90] sm:$0xff]
    %v105 = vld [vmem:[%s0 + $0x98] sm:$0xff]
    %v106 = vld [vmem:[%s0 + $0xa0] sm:$0xff]
    %v107 = vld [vmem:[%s0 + $0xa8] sm:$0xff]
    %v108 = vld [vmem:[%s0 + $0xb0] sm:$0xff]
    %v109 = vld [vmem:[%s0 + $0xb8] sm:$0xff]
    %v110 = vld [vmem:[%s0 + $0xc0] sm:$0xff]
    %v111 = vld [vmem:[%s0 + $0xc8] sm:$0xff]
    %v112 = vld [vmem:[%s0 + $0xd0] sm:$0xff]
    %v113 = vld [vmem:[%s0 + $0xd8] sm:$0xff]
    %v114 = vld [vmem:[%s0 + $0xe0] sm:$0xff]
    %v115 = vld [vmem:[%s0 + $0xe8] sm:$0xff]
    %v116 = vld [vmem:[%s0 + $0xf0] sm:$0xff]
    %v117 = vld [vmem:[%s0 + $0xf8] sm:$0xff]
    %v118 = vld [vmem:[%s0 + $0x100] sm:$0xff]
    %v119 = vld [vmem:[%s0 + $0x108] sm:$0xff]
    %v120 = vld [vmem:[%s0 + $0x110] sm:$0xff]
    %v121 = vld [vmem:[%s0 + $0x118] sm:$0xff]
    %v122 = vld [vmem:[%s0 + $0x120] sm:$0xff]
    %v123 = vld [vmem:[%s0 + $0x128] sm:$0xff]
    %v124 = vld [vmem:[%s0 + $0x130] sm:$0xff]
    %v125 = vld [vmem:[%s0 + $0x138] sm:$0xff]
    %v126 = vld [vmem:[%s0 + $0x140] sm:$0xff]
    %v127 = vld [vmem:[%s0 + $0x148] sm:$0xff]
    %v128 = vld [vmem:[%s0 + $0x150] sm:$0xff]
    %v129 = vld [vmem:[%s0 + $0x158] sm:$0xff]
    %v130 = vld [vmem:[%s0 + $0x160] sm:$0xff]
    %v131 = vld [vmem:[%s0 + $0x168] sm:$0xff]
    %v132 = vld [vmem:[%s0 + $0x170] sm:$0xff]
    %v133 = vld [vmem:[%s0 + $0x178] sm:$0xff]
    %v134 = vld [vmem:[%s0 + $0x180] sm:$0xff]
    %v135 = vld [vmem:[%s0 + $0x188] sm:$0xff]
    %v136 = vld [vmem:[%s0 + $0x190] sm:$0xff]
    %v137 = vld [vmem:[%s0 + $0x198] sm:$0xff]
    %v138 = vld [vmem:[%s0 + $0x1a0] sm:$0xff]
    %v139 = vld [vmem:[%s0 + $0x1a8] sm:$0xff]
    %v140 = vld [vmem:[%s0 + $0x1b0] sm:$0xff]
    %v141 = vld [vmem:[%s0 + $0x1b8] sm:$0xff]
    %v142 = vld [vmem:[%s0 + $0x1c0] sm:$0xff]
    %v143 = vld [vmem:[%s0 + $0x1c8] sm:$0xff]
    %v144 = vld [vmem:[%s0 + $0x1d0] sm:$0xff]
    %v145 = vld [vmem:[%s0 + $0x1d8] sm:$0xff]
    %v146 = vld [vmem:[%s0 + $0x1e0] sm:$0xff]
    %v147 = vld [vmem:[%s0 + $0x1e8] sm:$0xff]
    %v148 = vld [vmem:[%s0 + $0x1f0] sm:$0xff]
    %v149 = vld [vmem:[%s0 + $0x1f8] sm:$0xff]
    %v150 = vld [vmem:[%s0 + $0x200] sm:$0xff]
    %v151 = vld [vmem:[%s0 + $0x208] sm:$0xff]
    %v152 = vld [vmem:[%s0 + $0x210] sm:$0xff]
    %v153 = vld [vmem:[%s0 + $0x218] sm:$0xff]
    %v154 = vld [vmem:[%s0 + $0x220] sm:$0xff]
    %v155 = vld [vmem:[%s0 + $0x228] sm:$0xff]
    %v156 = vld [vmem:[%s0 + $0x230] sm:$0xff]
    %v157 = vld [vmem:[%s0 + $0x238] sm:$0xff]
    %v158 = vld [vmem:[%s0 + $0x240] sm:$0xff]
    %v159 = vld [vmem:[%s0 + $0x248] sm:$0xff]
    %v160 = vld [vmem:[%s0 + $0x250] sm:$0xff]
    %v161 = vld [vmem:[%s0 + $0x258] sm:$0xff]
    %v162 = vld [vmem:[%s0 + $0x260] sm:$0xff]
    %v163 = vld [vmem:[%s0 + $0x268] sm:$0xff]
    %v164 = vld [vmem:[%s0 + $0x270] sm:$0xff]
    %v165 = vld [vmem:[%s0 + $0x278] sm:$0xff]
    %v166 = vld [vmem:[%s0 + $0x280] sm:$0xff]
    %v167 = vld [vmem:[%s0 + $0x288] sm:$0xff]
    %v168 = vld [vmem:[%s0 + $0x290] sm:$0xff]
    %v169 = vld [vmem:[%s0 + $0x298] sm:$0xff]
    %v170 = vld [vmem:[%s0 + $0x2a0] sm:$0xff]
    %v171 = vld [vmem:[%s0 + $0x2a8] sm:$0xff]
    %v172 = vld [vmem:[%s0 + $0x2b0] sm:$0xff]
    %v173 = vld [vmem:[%s0 + $0x2b8] sm:$0xff]
    %v174 = vld [vmem:[%s0 + $0x2c0] sm:$0xff]
    %v175 = vld [vmem:[%s0 + $0x2c8] sm:$0xff]
    %v176 = vld [vmem:[%s0 + $0x2d0] sm:$0xff]
    %v177 = vld [vmem:[%s0 + $0x2d8] sm:$0xff]
    %v178 = vld [vmem:[%s0 + $0x2e0] sm:$0xff]
    %v179 = vld [vmem:[%s0 + $0x2e8] sm:$0xff]
    %v180 = vld [vmem:[%s0 + $0x2f0] sm:$0xff]
    %v181 = vld [vmem:[%s0 + $0x2f8] sm:$0xff]
    %v182 = vld [vmem:[%s0 + $0x300] sm:$0xff]
    %v183 = vld [vmem:[%s0 + $0x308] sm:$0xff]
    %v184 = vld [vmem:[%s0 + $0x310] sm:$0xff]
    %v185 = vld [vmem:[%s0 + $0x318] sm:$0xff]
    %v186 = vld [vmem:[%s0 + $0x320] sm:$0xff]
    %v187 = vld [vmem:[%s0 + $0x328] sm:$0xff]
    %v188 = vld [vmem:[%s0 + $0x330] sm:$0xff]
    %v189 = vld [vmem:[%s0 + $0x338] sm:$0xff]
    %v190 = vld [vmem:[%s0 + $0x340] sm:$0xff]
    %v191 = vld [vmem:[%s0 + $0x348] sm:$0xff]
    %v192 = vld [vmem:[%s0 + $0x350] sm:$0xff]
    %v193 = vld [vmem:[%s0 + $0x358] sm:$0xff]
    %v194 = vld [vmem:[%s0 + $0x360] sm:$0xff]
    %v195 = vld [vmem:[%s0 + $0x368] sm:$0xff]
    %v196 = vld [vmem:[%s0 + $0x370] sm:$0xff]
    %v197 = vld [vmem:[%s0 + $0x378] sm:$0xff]
    %v198 = vld [vmem:[%s0 + $0x380] sm:$0xff]
    %v199 = vld [vmem:[%s0 + $0x388] sm:$0xff]
    %v200 = vld [vmem:[%s0 + $0x390] sm:$0xff]
    %v201 = vld [vmem:[%s0 + $0x398] sm:$0xff]
    %v202 = vld [vmem:[%s0 + $0x3a0] sm:$0xff]
    %v203 = vld [vmem:[%s0 + $0x3a8] sm:$0xff]
    %v204 = vld [vmem:[%s0 + $0x3b0] sm:$0xff]
    %v205 = vld [vmem:[%s0 + $0x3b8] sm:$0xff]
    %v206 = vld [vmem:[%s0 + $0x3c0] sm:$0xff]
    %v207 = vld [vmem:[%s0 + $0x3c8] sm:$0xff]
    %v208 = vld [vmem:[%s0 + $0x3d0] sm:$0xff]
    %v209 = vld [vmem:[%s0 + $0x3d8] sm:$0xff]
    %v210 = vld [vmem:[%s0 + $0x3e0] sm:$0xff]
    %v211 = vld [vmem:[%s0 + $0x3e8] sm:$0xff]
    %v212 = vld [vmem:[%s0 + $0x3f0] sm:$0xff]
    %v213 = vld [vmem:[%s0 + $0x3f8] sm:$0xff]
    %v214 = vmul.f32 %v86, %v86
    %v215 = vmul.f32 %v87, %v87
    %v216 = vmul.f32 %v88, %v88
    %v217 = vmul.f32 %v89, %v89
    %v218 = vmul.f32 %v90, %v90
    %v219 = vmul.f32 %v91, %v91
    %v220 = vmul.f32 %v92, %v92
    %v221 = vmul.f32 %v93, %v93
    %v222 = vmul.f32 %v94, %v94
    %v223 = vmul.f32 %v95, %v95
    %v224 = vmul.f32 %v96, %v96
    %v225 = vmul.f32 %v97, %v97
    %v226 = vmul.f32 %v98, %v98
    %v227 = vmul.f32 %v99, %v99
    %v228 = vmul.f32 %v100, %v100
    %v229 = vmul.f32 %v101, %v101
    %v230 = vmul.f32 %v102, %v102
    %v231 = vmul.f32 %v103, %v103
    %v232 = vmul.f32 %v104, %v104
    %v233 = vmul.f32 %v105, %v105
    %v234 = vmul.f32 %v106, %v106
    %v235 = vmul.f32 %v107, %v107
    %v236 = vmul.f32 %v108, %v108
    %v237 = vmul.f32 %v109, %v109
    %v238 = vmul.f32 %v110, %v110
    %v239 = vmul.f32 %v111, %v111
    %v240 = vmul.f32 %v112, %v112
    %v241 = vmul.f32 %v113, %v113
    %v242 = vmul.f32 %v114, %v114
    %v243 = vmul.f32 %v115, %v115
    %v244 = vmul.f32 %v116, %v116
    %v245 = vmul.f32 %v117, %v117
    %v246 = vmul.f32 %v118, %v118
    %v247 = vmul.f32 %v119, %v119
    %v248 = vmul.f32 %v120, %v120
    %v249 = vmul.f32 %v121, %v121
    %v250 = vmul.f32 %v122, %v122
    %v251 = vmul.f32 %v123, %v123
    %v252 = vmul.f32 %v124, %v124
    %v253 = vmul.f32 %v125, %v125
    %v254 = vmul.f32 %v126, %v126
    %v255 = vmul.f32 %v127, %v127
    %v256 = vmul.f32 %v128, %v128
    %v257 = vmul.f32 %v129, %v129
    %v258 = vmul.f32 %v130, %v130
    %v259 = vmul.f32 %v131, %v131
    %v260 = vmul.f32 %v132, %v132
    %v261 = vmul.f32 %v133, %v133
    %v262 = vmul.f32 %v134, %v134
    %v263 = vmul.f32 %v135, %v135
    %v264 = vmul.f32 %v136, %v136
    %v265 = vmul.f32 %v137, %v137
    %v266 = vmul.f32 %v138, %v138
    %v267 = vmul.f32 %v139, %v139
    %v268 = vmul.f32 %v140, %v140
    %v269 = vmul.f32 %v141, %v141
    %v270 = vmul.f32 %v142, %v142
    %v271 = vmul.f32 %v143, %v143
    %v272 = vmul.f32 %v144, %v144
    %v273 = vmul.f32 %v145, %v145
    %v274 = vmul.f32 %v146, %v146
    %v275 = vmul.f32 %v147, %v147
    %v276 = vmul.f32 %v148, %v148
    %v277 = vmul.f32 %v149, %v149
    %v278 = vmul.f32 %v150, %v150
    %v279 = vmul.f32 %v151, %v151
    %v280 = vmul.f32 %v152, %v152
    %v281 = vmul.f32 %v153, %v153
    %v282 = vmul.f32 %v154, %v154
    %v283 = vmul.f32 %v155, %v155
    %v284 = vmul.f32 %v156, %v156
    %v285 = vmul.f32 %v157, %v157
    %v286 = vmul.f32 %v158, %v158
    %v287 = vmul.f32 %v159, %v159
    %v288 = vmul.f32 %v160, %v160
    %v289 = vmul.f32 %v161, %v161
    %v290 = vmul.f32 %v162, %v162
    %v291 = vmul.f32 %v163, %v163
    %v292 = vmul.f32 %v164, %v164
    %v293 = vmul.f32 %v165, %v165
    %v294 = vmul.f32 %v166, %v166
    %v295 = vmul.f32 %v167, %v167
    %v296 = vmul.f32 %v168, %v168
    %v297 = vmul.f32 %v169, %v169
    %v298 = vmul.f32 %v170, %v170
    %v299 = vmul.f32 %v171, %v171
    %v300 = vmul.f32 %v172, %v172
    %v301 = vmul.f32 %v173, %v173
    %v302 = vmul.f32 %v174, %v174
    %v303 = vmul.f32 %v175, %v175
    %v304 = vmul.f32 %v176, %v176
    %v305 = vmul.f32 %v177, %v177
    %v306 = vmul.f32 %v178, %v178
    %v307 = vmul.f32 %v179, %v179
    %v308 = vmul.f32 %v180, %v180
    %v309 = vmul.f32 %v181, %v181
    %v310 = vmul.f32 %v182, %v182
    %v311 = vmul.f32 %v183, %v183
    %v312 = vmul.f32 %v184, %v184
    %v313 = vmul.f32 %v185, %v185
    %v314 = vmul.f32 %v186, %v186
    %v315 = vmul.f32 %v187, %v187
    %v316 = vmul.f32 %v188, %v188
    %v317 = vmul.f32 %v189, %v189
    %v318 = vmul.f32 %v190, %v190
    %v319 = vmul.f32 %v191, %v191
    %v320 = vmul.f32 %v192, %v192
    %v321 = vmul.f32 %v193, %v193
    %v322 = vmul.f32 %v194, %v194
    %v323 = vmul.f32 %v195, %v195
    %v324 = vmul.f32 %v196, %v196
    %v325 = vmul.f32 %v197, %v197
    %v326 = vmul.f32 %v198, %v198
    %v327 = vmul.f32 %v199, %v199
    %v328 = vmul.f32 %v200, %v200
    %v329 = vmul.f32 %v201, %v201
    %v330 = vmul.f32 %v202, %v202
    %v331 = vmul.f32 %v203, %v203
    %v332 = vmul.f32 %v204, %v204
    %v333 = vmul.f32 %v205, %v205
    %v334 = vmul.f32 %v206, %v206
    %v335 = vmul.f32 %v207, %v207
    %v336 = vmul.f32 %v208, %v208
    %v337 = vmul.f32 %v209, %v209
    %v338 = vmul.f32 %v210, %v210
    %v339 = vmul.f32 %v211, %v211
    %v340 = vmul.f32 %v212, %v212
    %v341 = vmul.f32 %v213, %v213
    %vm342 = vcmask 400384
    %v343 = vsel %vm342, %v214, 0.0
    %v344 = vsel %vm342, %v215, 0.0
    %v345 = vadd.f32 %v343, %v344
    %v346 = vsel %vm342, %v216, 0.0
    %v347 = vadd.f32 %v345, %v346
    %v348 = vsel %vm342, %v217, 0.0
    %v349 = vadd.f32 %v347, %v348
    %v350 = vsel %vm342, %v218, 0.0
    %v351 = vadd.f32 %v349, %v350
    %v352 = vsel %vm342, %v219, 0.0
    %v353 = vadd.f32 %v351, %v352
    %v354 = vsel %vm342, %v220, 0.0
    %v355 = vadd.f32 %v353, %v354
    %v356 = vsel %vm342, %v221, 0.0
    %v357 = vadd.f32 %v355, %v356
    %v358 = vsel %vm342, %v222, 0.0
    %v359 = vadd.f32 %v357, %v358
    %v360 = vsel %vm342, %v223, 0.0
    %v361 = vadd.f32 %v359, %v360
    %v362 = vsel %vm342, %v224, 0.0
    %v363 = vadd.f32 %v361, %v362
    %v364 = vsel %vm342, %v225, 0.0
    %v365 = vadd.f32 %v363, %v364
    %v366 = vsel %vm342, %v226, 0.0
    %v367 = vadd.f32 %v365, %v366
    %v368 = vsel %vm342, %v227, 0.0
    %v369 = vadd.f32 %v367, %v368
    %v370 = vsel %vm342, %v228, 0.0
    %v371 = vadd.f32 %v369, %v370
    %v372 = vsel %vm342, %v229, 0.0
    %v373 = vadd.f32 %v371, %v372
    %v374 = vsel %vm342, %v230, 0.0
    %v375 = vadd.f32 %v373, %v374
    %v376 = vsel %vm342, %v231, 0.0
    %v377 = vadd.f32 %v375, %v376
    %v378 = vsel %vm342, %v232, 0.0
    %v379 = vadd.f32 %v377, %v378
    %v380 = vsel %vm342, %v233, 0.0
    %v381 = vadd.f32 %v379, %v380
    %v382 = vsel %vm342, %v234, 0.0
    %v383 = vadd.f32 %v381, %v382
    %v384 = vsel %vm342, %v235, 0.0
    %v385 = vadd.f32 %v383, %v384
    %v386 = vsel %vm342, %v236, 0.0
    %v387 = vadd.f32 %v385, %v386
    %v388 = vsel %vm342, %v237, 0.0
    %v389 = vadd.f32 %v387, %v388
    %v390 = vsel %vm342, %v238, 0.0
    %v391 = vadd.f32 %v389, %v390
    %v392 = vsel %vm342, %v239, 0.0
    %v393 = vadd.f32 %v391, %v392
    %v394 = vsel %vm342, %v240, 0.0
    %v395 = vadd.f32 %v393, %v394
    %v396 = vsel %vm342, %v241, 0.0
    %v397 = vadd.f32 %v395, %v396
    %v398 = vsel %vm342, %v242, 0.0
    %v399 = vadd.f32 %v397, %v398
    %v400 = vsel %vm342, %v243, 0.0
    %v401 = vadd.f32 %v399, %v400
    %v402 = vsel %vm342, %v244, 0.0
    %v403 = vadd.f32 %v401, %v402
    %v404 = vsel %vm342, %v245, 0.0
    %v405 = vadd.f32 %v403, %v404
    %v406 = vsel %vm342, %v246, 0.0
    %v407 = vadd.f32 %v405, %v406
    %v408 = vsel %vm342, %v247, 0.0
    %v409 = vadd.f32 %v407, %v408
    %v410 = vsel %vm342, %v248, 0.0
    %v411 = vadd.f32 %v409, %v410
    %v412 = vsel %vm342, %v249, 0.0
    %v413 = vadd.f32 %v411, %v412
    %v414 = vsel %vm342, %v250, 0.0
    %v415 = vadd.f32 %v413, %v414
    %v416 = vsel %vm342, %v251, 0.0
    %v417 = vadd.f32 %v415, %v416
    %v418 = vsel %vm342, %v252, 0.0
    %v419 = vadd.f32 %v417, %v418
    %v420 = vsel %vm342, %v253, 0.0
    %v421 = vadd.f32 %v419, %v420
    %v422 = vsel %vm342, %v254, 0.0
    %v423 = vadd.f32 %v421, %v422
    %v424 = vsel %vm342, %v255, 0.0
    %v425 = vadd.f32 %v423, %v424
    %v426 = vsel %vm342, %v256, 0.0
    %v427 = vadd.f32 %v425, %v426
    %v428 = vsel %vm342, %v257, 0.0
    %v429 = vadd.f32 %v427, %v428
    %v430 = vsel %vm342, %v258, 0.0
    %v431 = vadd.f32 %v429, %v430
    %v432 = vsel %vm342, %v259, 0.0
    %v433 = vadd.f32 %v431, %v432
    %v434 = vsel %vm342, %v260, 0.0
    %v435 = vadd.f32 %v433, %v434
    %v436 = vsel %vm342, %v261, 0.0
    %v437 = vadd.f32 %v435, %v436
    %v438 = vsel %vm342, %v262, 0.0
    %v439 = vadd.f32 %v437, %v438
    %v440 = vsel %vm342, %v263, 0.0
    %v441 = vadd.f32 %v439, %v440
    %v442 = vsel %vm342, %v264, 0.0
    %v443 = vadd.f32 %v441, %v442
    %v444 = vsel %vm342, %v265, 0.0
    %v445 = vadd.f32 %v443, %v444
    %v446 = vsel %vm342, %v266, 0.0
    %v447 = vadd.f32 %v445, %v446
    %v448 = vsel %vm342, %v267, 0.0
    %v449 = vadd.f32 %v447, %v448
    %v450 = vsel %vm342, %v268, 0.0
    %v451 = vadd.f32 %v449, %v450
    %v452 = vsel %vm342, %v269, 0.0
    %v453 = vadd.f32 %v451, %v452
    %v454 = vsel %vm342, %v270, 0.0
    %v455 = vadd.f32 %v453, %v454
    %v456 = vsel %vm342, %v271, 0.0
    %v457 = vadd.f32 %v455, %v456
    %v458 = vsel %vm342, %v272, 0.0
    %v459 = vadd.f32 %v457, %v458
    %v460 = vsel %vm342, %v273, 0.0
    %v461 = vadd.f32 %v459, %v460
    %v462 = vsel %vm342, %v274, 0.0
    %v463 = vadd.f32 %v461, %v462
    %v464 = vsel %vm342, %v275, 0.0
    %v465 = vadd.f32 %v463, %v464
    %v466 = vsel %vm342, %v276, 0.0
    %v467 = vadd.f32 %v465, %v466
    %v468 = vsel %vm342, %v277, 0.0
    %v469 = vadd.f32 %v467, %v468
    %v470 = vrot.slane %v469, 4
    %v471 = vadd.f32 %v469, %v470
    %v472 = vrot.slane %v471, 2
    %v473 = vadd.f32 %v471, %v472
    %v474 = vrot.slane %v473, 1
    %v475 = vadd.f32 %v473, %v474
    %v476 = vsel %vm342, %v278, 0.0
    %v477 = vsel %vm342, %v279, 0.0
    %v478 = vadd.f32 %v476, %v477
    %v479 = vsel %vm342, %v280, 0.0
    %v480 = vadd.f32 %v478, %v479
    %v481 = vsel %vm342, %v281, 0.0
    %v482 = vadd.f32 %v480, %v481
    %v483 = vsel %vm342, %v282, 0.0
    %v484 = vadd.f32 %v482, %v483
    %v485 = vsel %vm342, %v283, 0.0
    %v486 = vadd.f32 %v484, %v485
    %v487 = vsel %vm342, %v284, 0.0
    %v488 = vadd.f32 %v486, %v487
    %v489 = vsel %vm342, %v285, 0.0
    %v490 = vadd.f32 %v488, %v489
    %v491 = vsel %vm342, %v286, 0.0
    %v492 = vadd.f32 %v490, %v491
    %v493 = vsel %vm342, %v287, 0.0
    %v494 = vadd.f32 %v492, %v493
    %v495 = vsel %vm342, %v288, 0.0
    %v496 = vadd.f32 %v494, %v495
    %v497 = vsel %vm342, %v289, 0.0
    %v498 = vadd.f32 %v496, %v497
    %v499 = vsel %vm342, %v290, 0.0
    %v500 = vadd.f32 %v498, %v499
    %v501 = vsel %vm342, %v291, 0.0
    %v502 = vadd.f32 %v500, %v501
    %v503 = vsel %vm342, %v292, 0.0
    %v504 = vadd.f32 %v502, %v503
    %v505 = vsel %vm342, %v293, 0.0
    %v506 = vadd.f32 %v504, %v505
    %v507 = vsel %vm342, %v294, 0.0
    %v508 = vadd.f32 %v506, %v507
    %v509 = vsel %vm342, %v295, 0.0
    %v510 = vadd.f32 %v508, %v509
    %v511 = vsel %vm342, %v296, 0.0
    %v512 = vadd.f32 %v510, %v511
    %v513 = vsel %vm342, %v297, 0.0
    %v514 = vadd.f32 %v512, %v513
    %v515 = vsel %vm342, %v298, 0.0
    %v516 = vadd.f32 %v514, %v515
    %v517 = vsel %vm342, %v299, 0.0
    %v518 = vadd.f32 %v516, %v517
    %v519 = vsel %vm342, %v300, 0.0
    %v520 = vadd.f32 %v518, %v519
    %v521 = vsel %vm342, %v301, 0.0
    %v522 = vadd.f32 %v520, %v521
    %v523 = vsel %vm342, %v302, 0.0
    %v524 = vadd.f32 %v522, %v523
    %v525 = vsel %vm342, %v303, 0.0
    %v526 = vadd.f32 %v524, %v525
    %v527 = vsel %vm342, %v304, 0.0
    %v528 = vadd.f32 %v526, %v527
    %v529 = vsel %vm342, %v305, 0.0
    %v530 = vadd.f32 %v528, %v529
    %v531 = vsel %vm342, %v306, 0.0
    %v532 = vadd.f32 %v530, %v531
    %v533 = vsel %vm342, %v307, 0.0
    %v534 = vadd.f32 %v532, %v533
    %v535 = vsel %vm342, %v308, 0.0
    %v536 = vadd.f32 %v534, %v535
    %v537 = vsel %vm342, %v309, 0.0
    %v538 = vadd.f32 %v536, %v537
    %v539 = vsel %vm342, %v310, 0.0
    %v540 = vadd.f32 %v538, %v539
    %v541 = vsel %vm342, %v311, 0.0
    %v542 = vadd.f32 %v540, %v541
    %v543 = vsel %vm342, %v312, 0.0
    %v544 = vadd.f32 %v542, %v543
    %v545 = vsel %vm342, %v313, 0.0
    %v546 = vadd.f32 %v544, %v545
    %v547 = vsel %vm342, %v314, 0.0
    %v548 = vadd.f32 %v546, %v547
    %v549 = vsel %vm342, %v315, 0.0
    %v550 = vadd.f32 %v548, %v549
    %v551 = vsel %vm342, %v316, 0.0
    %v552 = vadd.f32 %v550, %v551
    %v553 = vsel %vm342, %v317, 0.0
    %v554 = vadd.f32 %v552, %v553
    %v555 = vsel %vm342, %v318, 0.0
    %v556 = vadd.f32 %v554, %v555
    %v557 = vsel %vm342, %v319, 0.0
    %v558 = vadd.f32 %v556, %v557
    %v559 = vsel %vm342, %v320, 0.0
    %v560 = vadd.f32 %v558, %v559
    %v561 = vsel %vm342, %v321, 0.0
    %v562 = vadd.f32 %v560, %v561
    %v563 = vsel %vm342, %v322, 0.0
    %v564 = vadd.f32 %v562, %v563
    %v565 = vsel %vm342, %v323, 0.0
    %v566 = vadd.f32 %v564, %v565
    %v567 = vsel %vm342, %v324, 0.0
    %v568 = vadd.f32 %v566, %v567
    %v569 = vsel %vm342, %v325, 0.0
    %v570 = vadd.f32 %v568, %v569
    %v571 = vsel %vm342, %v326, 0.0
    %v572 = vadd.f32 %v570, %v571
    %v573 = vsel %vm342, %v327, 0.0
    %v574 = vadd.f32 %v572, %v573
    %v575 = vsel %vm342, %v328, 0.0
    %v576 = vadd.f32 %v574, %v575
    %v577 = vsel %vm342, %v329, 0.0
    %v578 = vadd.f32 %v576, %v577
    %v579 = vsel %vm342, %v330, 0.0
    %v580 = vadd.f32 %v578, %v579
    %v581 = vsel %vm342, %v331, 0.0
    %v582 = vadd.f32 %v580, %v581
    %v583 = vsel %vm342, %v332, 0.0
    %v584 = vadd.f32 %v582, %v583
    %v585 = vsel %vm342, %v333, 0.0
    %v586 = vadd.f32 %v584, %v585
    %v587 = vsel %vm342, %v334, 0.0
    %v588 = vadd.f32 %v586, %v587
    %v589 = vsel %vm342, %v335, 0.0
    %v590 = vadd.f32 %v588, %v589
    %v591 = vsel %vm342, %v336, 0.0
    %v592 = vadd.f32 %v590, %v591
    %v593 = vsel %vm342, %v337, 0.0
    %v594 = vadd.f32 %v592, %v593
    %v595 = vsel %vm342, %v338, 0.0
    %v596 = vadd.f32 %v594, %v595
    %v597 = vsel %vm342, %v339, 0.0
    %v598 = vadd.f32 %v596, %v597
    %v599 = vsel %vm342, %v340, 0.0
    %v600 = vadd.f32 %v598, %v599
    %v601 = vsel %vm342, %v341, 0.0
    %v602 = vadd.f32 %v600, %v601
    %v603 = vrot.slane %v602, 4
    %v604 = vadd.f32 %v602, %v603
    %v605 = vrot.slane %v604, 2
    %v606 = vadd.f32 %v604, %v605
    %v607 = vrot.slane %v606, 1
    %v608 = vadd.f32 %v606, %v607
    %v609 = vmax.f32 %v475, 1e-24
    %v610 = vmax.f32 %v608, 1e-24
    %v611 = vrsqrt.pop %v609
    %v612 = vmul.f32 %v611, %v609
    %v613 = vmul.f32 %v612, %v611
    %v614 = vmul.f32 0.5, %v613
    %v615 = vsub.f32 1.5, %v614
    %v616 = vmul.f32 %v611, %v615
    %vm617 = vweird.f32 %v609
    %vm618 = vweird.f32 %v611
    %vm619 = vmor %vm617, %vm618
    %v620 = vsel %vm619, %v611, %v616
    %v621 = vrsqrt.pop %v610
    %v622 = vmul.f32 %v621, %v610
    %v623 = vmul.f32 %v622, %v621
    %v624 = vmul.f32 0.5, %v623
    %v625 = vsub.f32 1.5, %v624
    %v626 = vmul.f32 %v621, %v625
    %vm627 = vweird.f32 %v610
    %vm628 = vweird.f32 %v621
    %vm629 = vmor %vm627, %vm628
    %v630 = vsel %vm629, %v621, %v626
    %v631 = vmul.f32 %v86, %v620
    %v632 = vmul.f32 %v87, %v620
    %v633 = vmul.f32 %v88, %v620
    %v634 = vmul.f32 %v89, %v620
    %v635 = vmul.f32 %v90, %v620
    %v636 = vmul.f32 %v91, %v620
    %v637 = vmul.f32 %v92, %v620
    %v638 = vmul.f32 %v93, %v620
    %v639 = vmul.f32 %v94, %v620
    %v640 = vmul.f32 %v95, %v620
    %v641 = vmul.f32 %v96, %v620
    %v642 = vmul.f32 %v97, %v620
    %v643 = vmul.f32 %v98, %v620
    %v644 = vmul.f32 %v99, %v620
    %v645 = vmul.f32 %v100, %v620
    %v646 = vmul.f32 %v101, %v620
    %v647 = vmul.f32 %v102, %v620
    %v648 = vmul.f32 %v103, %v620
    %v649 = vmul.f32 %v104, %v620
    %v650 = vmul.f32 %v105, %v620
    %v651 = vmul.f32 %v106, %v620
    %v652 = vmul.f32 %v107, %v620
    %v653 = vmul.f32 %v108, %v620
    %v654 = vmul.f32 %v109, %v620
    %v655 = vmul.f32 %v110, %v620
    %v656 = vmul.f32 %v111, %v620
    %v657 = vmul.f32 %v112, %v620
    %v658 = vmul.f32 %v113, %v620
    %v659 = vmul.f32 %v114, %v620
    %v660 = vmul.f32 %v115, %v620
    %v661 = vmul.f32 %v116, %v620
    %v662 = vmul.f32 %v117, %v620
    %v663 = vmul.f32 %v118, %v620
    %v664 = vmul.f32 %v119, %v620
    %v665 = vmul.f32 %v120, %v620
    %v666 = vmul.f32 %v121, %v620
    %v667 = vmul.f32 %v122, %v620
    %v668 = vmul.f32 %v123, %v620
    %v669 = vmul.f32 %v124, %v620
    %v670 = vmul.f32 %v125, %v620
    %v671 = vmul.f32 %v126, %v620
    %v672 = vmul.f32 %v127, %v620
    %v673 = vmul.f32 %v128, %v620
    %v674 = vmul.f32 %v129, %v620
    %v675 = vmul.f32 %v130, %v620
    %v676 = vmul.f32 %v131, %v620
    %v677 = vmul.f32 %v132, %v620
    %v678 = vmul.f32 %v133, %v620
    %v679 = vmul.f32 %v134, %v620
    %v680 = vmul.f32 %v135, %v620
    %v681 = vmul.f32 %v136, %v620
    %v682 = vmul.f32 %v137, %v620
    %v683 = vmul.f32 %v138, %v620
    %v684 = vmul.f32 %v139, %v620
    %v685 = vmul.f32 %v140, %v620
    %v686 = vmul.f32 %v141, %v620
    %v687 = vmul.f32 %v142, %v620
    %v688 = vmul.f32 %v143, %v620
    %v689 = vmul.f32 %v144, %v620
    %v690 = vmul.f32 %v145, %v620
    %v691 = vmul.f32 %v146, %v620
    %v692 = vmul.f32 %v147, %v620
    %v693 = vmul.f32 %v148, %v620
    %v694 = vmul.f32 %v149, %v620
    %v695 = vmul.f32 %v150, %v630
    %v696 = vmul.f32 %v151, %v630
    %v697 = vmul.f32 %v152, %v630
    %v698 = vmul.f32 %v153, %v630
    %v699 = vmul.f32 %v154, %v630
    %v700 = vmul.f32 %v155, %v630
    %v701 = vmul.f32 %v156, %v630
    %v702 = vmul.f32 %v157, %v630
    %v703 = vmul.f32 %v158, %v630
    %v704 = vmul.f32 %v159, %v630
    %v705 = vmul.f32 %v160, %v630
    %v706 = vmul.f32 %v161, %v630
    %v707 = vmul.f32 %v162, %v630
    %v708 = vmul.f32 %v163, %v630
    %v709 = vmul.f32 %v164, %v630
    %v710 = vmul.f32 %v165, %v630
    %v711 = vmul.f32 %v166, %v630
    %v712 = vmul.f32 %v167, %v630
    %v713 = vmul.f32 %v168, %v630
    %v714 = vmul.f32 %v169, %v630
    %v715 = vmul.f32 %v170, %v630
    %v716 = vmul.f32 %v171, %v630
    %v717 = vmul.f32 %v172, %v630
    %v718 = vmul.f32 %v173, %v630
    %v719 = vmul.f32 %v174, %v630
    %v720 = vmul.f32 %v175, %v630
    %v721 = vmul.f32 %v176, %v630
    %v722 = vmul.f32 %v177, %v630
    %v723 = vmul.f32 %v178, %v630
    %v724 = vmul.f32 %v179, %v630
    %v725 = vmul.f32 %v180, %v630
    %v726 = vmul.f32 %v181, %v630
    %v727 = vmul.f32 %v182, %v630
    %v728 = vmul.f32 %v183, %v630
    %v729 = vmul.f32 %v184, %v630
    %v730 = vmul.f32 %v185, %v630
    %v731 = vmul.f32 %v186, %v630
    %v732 = vmul.f32 %v187, %v630
    %v733 = vmul.f32 %v188, %v630
    %v734 = vmul.f32 %v189, %v630
    %v735 = vmul.f32 %v190, %v630
    %v736 = vmul.f32 %v191, %v630
    %v737 = vmul.f32 %v192, %v630
    %v738 = vmul.f32 %v193, %v630
    %v739 = vmul.f32 %v194, %v630
    %v740 = vmul.f32 %v195, %v630
    %v741 = vmul.f32 %v196, %v630
    %v742 = vmul.f32 %v197, %v630
    %v743 = vmul.f32 %v198, %v630
    %v744 = vmul.f32 %v199, %v630
    %v745 = vmul.f32 %v200, %v630
    %v746 = vmul.f32 %v201, %v630
    %v747 = vmul.f32 %v202, %v630
    %v748 = vmul.f32 %v203, %v630
    %v749 = vmul.f32 %v204, %v630
    %v750 = vmul.f32 %v205, %v630
    %v751 = vmul.f32 %v206, %v630
    %v752 = vmul.f32 %v207, %v630
    %v753 = vmul.f32 %v208, %v630
    %v754 = vmul.f32 %v209, %v630
    %v755 = vmul.f32 %v210, %v630
    %v756 = vmul.f32 %v211, %v630
    %v757 = vmul.f32 %v212, %v630
    %v758 = vmul.f32 %v213, %v630
    %v759 = vmax.f32 %v631, 1e-06
    %v760 = vmax.f32 %v632, 1e-06
    %v761 = vmax.f32 %v633, 1e-06
    %v762 = vmax.f32 %v634, 1e-06
    %v763 = vmax.f32 %v635, 1e-06
    %v764 = vmax.f32 %v636, 1e-06
    %v765 = vmax.f32 %v637, 1e-06
    %v766 = vmax.f32 %v638, 1e-06
    %v767 = vmax.f32 %v639, 1e-06
    %v768 = vmax.f32 %v640, 1e-06
    %v769 = vmax.f32 %v641, 1e-06
    %v770 = vmax.f32 %v642, 1e-06
    %v771 = vmax.f32 %v643, 1e-06
    %v772 = vmax.f32 %v644, 1e-06
    %v773 = vmax.f32 %v645, 1e-06
    %v774 = vmax.f32 %v646, 1e-06
    %v775 = vmax.f32 %v647, 1e-06
    %v776 = vmax.f32 %v648, 1e-06
    %v777 = vmax.f32 %v649, 1e-06
    %v778 = vmax.f32 %v650, 1e-06
    %v779 = vmax.f32 %v651, 1e-06
    %v780 = vmax.f32 %v652, 1e-06
    %v781 = vmax.f32 %v653, 1e-06
    %v782 = vmax.f32 %v654, 1e-06
    %v783 = vmax.f32 %v655, 1e-06
    %v784 = vmax.f32 %v656, 1e-06
    %v785 = vmax.f32 %v657, 1e-06
    %v786 = vmax.f32 %v658, 1e-06
    %v787 = vmax.f32 %v659, 1e-06
    %v788 = vmax.f32 %v660, 1e-06
    %v789 = vmax.f32 %v661, 1e-06
    %v790 = vmax.f32 %v662, 1e-06
    %v791 = vmax.f32 %v663, 1e-06
    %v792 = vmax.f32 %v664, 1e-06
    %v793 = vmax.f32 %v665, 1e-06
    %v794 = vmax.f32 %v666, 1e-06
    %v795 = vmax.f32 %v667, 1e-06
    %v796 = vmax.f32 %v668, 1e-06
    %v797 = vmax.f32 %v669, 1e-06
    %v798 = vmax.f32 %v670, 1e-06
    %v799 = vmax.f32 %v671, 1e-06
    %v800 = vmax.f32 %v672, 1e-06
    %v801 = vmax.f32 %v673, 1e-06
    %v802 = vmax.f32 %v674, 1e-06
    %v803 = vmax.f32 %v675, 1e-06
    %v804 = vmax.f32 %v676, 1e-06
    %v805 = vmax.f32 %v677, 1e-06
    %v806 = vmax.f32 %v678, 1e-06
    %v807 = vmax.f32 %v679, 1e-06
    %v808 = vmax.f32 %v680, 1e-06
    %v809 = vmax.f32 %v681, 1e-06
    %v810 = vmax.f32 %v682, 1e-06
    %v811 = vmax.f32 %v683, 1e-06
    %v812 = vmax.f32 %v684, 1e-06
    %v813 = vmax.f32 %v685, 1e-06
    %v814 = vmax.f32 %v686, 1e-06
    %v815 = vmax.f32 %v687, 1e-06
    %v816 = vmax.f32 %v688, 1e-06
    %v817 = vmax.f32 %v689, 1e-06
    %v818 = vmax.f32 %v690, 1e-06
    %v819 = vmax.f32 %v691, 1e-06
    %v820 = vmax.f32 %v692, 1e-06
    %v821 = vmax.f32 %v693, 1e-06
    %v822 = vmax.f32 %v694, 1e-06
    %v823 = vmax.f32 %v695, 1e-06
    %v824 = vmax.f32 %v696, 1e-06
    %v825 = vmax.f32 %v697, 1e-06
    %v826 = vmax.f32 %v698, 1e-06
    %v827 = vmax.f32 %v699, 1e-06
    %v828 = vmax.f32 %v700, 1e-06
    %v829 = vmax.f32 %v701, 1e-06
    %v830 = vmax.f32 %v702, 1e-06
    %v831 = vmax.f32 %v703, 1e-06
    %v832 = vmax.f32 %v704, 1e-06
    %v833 = vmax.f32 %v705, 1e-06
    %v834 = vmax.f32 %v706, 1e-06
    %v835 = vmax.f32 %v707, 1e-06
    %v836 = vmax.f32 %v708, 1e-06
    %v837 = vmax.f32 %v709, 1e-06
    %v838 = vmax.f32 %v710, 1e-06
    %v839 = vmax.f32 %v711, 1e-06
    %v840 = vmax.f32 %v712, 1e-06
    %v841 = vmax.f32 %v713, 1e-06
    %v842 = vmax.f32 %v714, 1e-06
    %v843 = vmax.f32 %v715, 1e-06
    %v844 = vmax.f32 %v716, 1e-06
    %v845 = vmax.f32 %v717, 1e-06
    %v846 = vmax.f32 %v718, 1e-06
    %v847 = vmax.f32 %v719, 1e-06
    %v848 = vmax.f32 %v720, 1e-06
    %v849 = vmax.f32 %v721, 1e-06
    %v850 = vmax.f32 %v722, 1e-06
    %v851 = vmax.f32 %v723, 1e-06
    %v852 = vmax.f32 %v724, 1e-06
    %v853 = vmax.f32 %v725, 1e-06
    %v854 = vmax.f32 %v726, 1e-06
    %v855 = vmax.f32 %v727, 1e-06
    %v856 = vmax.f32 %v728, 1e-06
    %v857 = vmax.f32 %v729, 1e-06
    %v858 = vmax.f32 %v730, 1e-06
    %v859 = vmax.f32 %v731, 1e-06
    %v860 = vmax.f32 %v732, 1e-06
    %v861 = vmax.f32 %v733, 1e-06
    %v862 = vmax.f32 %v734, 1e-06
    %v863 = vmax.f32 %v735, 1e-06
    %v864 = vmax.f32 %v736, 1e-06
    %v865 = vmax.f32 %v737, 1e-06
    %v866 = vmax.f32 %v738, 1e-06
    %v867 = vmax.f32 %v739, 1e-06
    %v868 = vmax.f32 %v740, 1e-06
    %v869 = vmax.f32 %v741, 1e-06
    %v870 = vmax.f32 %v742, 1e-06
    %v871 = vmax.f32 %v743, 1e-06
    %v872 = vmax.f32 %v744, 1e-06
    %v873 = vmax.f32 %v745, 1e-06
    %v874 = vmax.f32 %v746, 1e-06
    %v875 = vmax.f32 %v747, 1e-06
    %v876 = vmax.f32 %v748, 1e-06
    %v877 = vmax.f32 %v749, 1e-06
    %v878 = vmax.f32 %v750, 1e-06
    %v879 = vmax.f32 %v751, 1e-06
    %v880 = vmax.f32 %v752, 1e-06
    %v881 = vmax.f32 %v753, 1e-06
    %v882 = vmax.f32 %v754, 1e-06
    %v883 = vmax.f32 %v755, 1e-06
    %v884 = vmax.f32 %v756, 1e-06
    %v885 = vmax.f32 %v757, 1e-06
    %v886 = vmax.f32 %v758, 1e-06
    %v887 = vlog2.pop %v759
    %v888 = vmul.f32 %v887, 0.6931472
    %v889 = vlog2.pop %v760
    %v890 = vmul.f32 %v889, 0.6931472
    %v891 = vlog2.pop %v761
    %v892 = vmul.f32 %v891, 0.6931472
    %v893 = vlog2.pop %v762
    %v894 = vmul.f32 %v893, 0.6931472
    %v895 = vlog2.pop %v763
    %v896 = vmul.f32 %v895, 0.6931472
    %v897 = vlog2.pop %v764
    %v898 = vmul.f32 %v897, 0.6931472
    %v899 = vlog2.pop %v765
    %v900 = vmul.f32 %v899, 0.6931472
    %v901 = vlog2.pop %v766
    %v902 = vmul.f32 %v901, 0.6931472
    %v903 = vlog2.pop %v767
    %v904 = vmul.f32 %v903, 0.6931472
    %v905 = vlog2.pop %v768
    %v906 = vmul.f32 %v905, 0.6931472
    %v907 = vlog2.pop %v769
    %v908 = vmul.f32 %v907, 0.6931472
    %v909 = vlog2.pop %v770
    %v910 = vmul.f32 %v909, 0.6931472
    %v911 = vlog2.pop %v771
    %v912 = vmul.f32 %v911, 0.6931472
    %v913 = vlog2.pop %v772
    %v914 = vmul.f32 %v913, 0.6931472
    %v915 = vlog2.pop %v773
    %v916 = vmul.f32 %v915, 0.6931472
    %v917 = vlog2.pop %v774
    %v918 = vmul.f32 %v917, 0.6931472
    %v919 = vlog2.pop %v775
    %v920 = vmul.f32 %v919, 0.6931472
    %v921 = vlog2.pop %v776
    %v922 = vmul.f32 %v921, 0.6931472
    %v923 = vlog2.pop %v777
    %v924 = vmul.f32 %v923, 0.6931472
    %v925 = vlog2.pop %v778
    %v926 = vmul.f32 %v925, 0.6931472
    %v927 = vlog2.pop %v779
    %v928 = vmul.f32 %v927, 0.6931472
    %v929 = vlog2.pop %v780
    %v930 = vmul.f32 %v929, 0.6931472
    %v931 = vlog2.pop %v781
    %v932 = vmul.f32 %v931, 0.6931472
    %v933 = vlog2.pop %v782
    %v934 = vmul.f32 %v933, 0.6931472
    %v935 = vlog2.pop %v783
    %v936 = vmul.f32 %v935, 0.6931472
    %v937 = vlog2.pop %v784
    %v938 = vmul.f32 %v937, 0.6931472
    %v939 = vlog2.pop %v785
    %v940 = vmul.f32 %v939, 0.6931472
    %v941 = vlog2.pop %v786
    %v942 = vmul.f32 %v941, 0.6931472
    %v943 = vlog2.pop %v787
    %v944 = vmul.f32 %v943, 0.6931472
    %v945 = vlog2.pop %v788
    %v946 = vmul.f32 %v945, 0.6931472
    %v947 = vlog2.pop %v789
    %v948 = vmul.f32 %v947, 0.6931472
    %v949 = vlog2.pop %v790
    %v950 = vmul.f32 %v949, 0.6931472
    %v951 = vlog2.pop %v791
    %v952 = vmul.f32 %v951, 0.6931472
    %v953 = vlog2.pop %v792
    %v954 = vmul.f32 %v953, 0.6931472
    %v955 = vlog2.pop %v793
    %v956 = vmul.f32 %v955, 0.6931472
    %v957 = vlog2.pop %v794
    %v958 = vmul.f32 %v957, 0.6931472
    %v959 = vlog2.pop %v795
    %v960 = vmul.f32 %v959, 0.6931472
    %v961 = vlog2.pop %v796
    %v962 = vmul.f32 %v961, 0.6931472
    %v963 = vlog2.pop %v797
    %v964 = vmul.f32 %v963, 0.6931472
    %v965 = vlog2.pop %v798
    %v966 = vmul.f32 %v965, 0.6931472
    %v967 = vlog2.pop %v799
    %v968 = vmul.f32 %v967, 0.6931472
    %v969 = vlog2.pop %v800
    %v970 = vmul.f32 %v969, 0.6931472
    %v971 = vlog2.pop %v801
    %v972 = vmul.f32 %v971, 0.6931472
    %v973 = vlog2.pop %v802
    %v974 = vmul.f32 %v973, 0.6931472
    %v975 = vlog2.pop %v803
    %v976 = vmul.f32 %v975, 0.6931472
    %v977 = vlog2.pop %v804
    %v978 = vmul.f32 %v977, 0.6931472
    %v979 = vlog2.pop %v805
    %v980 = vmul.f32 %v979, 0.6931472
    %v981 = vlog2.pop %v806
    %v982 = vmul.f32 %v981, 0.6931472
    %v983 = vlog2.pop %v807
    %v984 = vmul.f32 %v983, 0.6931472
    %v985 = vlog2.pop %v808
    %v986 = vmul.f32 %v985, 0.6931472
    %v987 = vlog2.pop %v809
    %v988 = vmul.f32 %v987, 0.6931472
    %v989 = vlog2.pop %v810
    %v990 = vmul.f32 %v989, 0.6931472
    %v991 = vlog2.pop %v811
    %v992 = vmul.f32 %v991, 0.6931472
    %v993 = vlog2.pop %v812
    %v994 = vmul.f32 %v993, 0.6931472
    %v995 = vlog2.pop %v813
    %v996 = vmul.f32 %v995, 0.6931472
    %v997 = vlog2.pop %v814
    %v998 = vmul.f32 %v997, 0.6931472
    %v999 = vlog2.pop %v815
    %v1000 = vmul.f32 %v999, 0.6931472
    %v1001 = vlog2.pop %v816
    %v1002 = vmul.f32 %v1001, 0.6931472
    %v1003 = vlog2.pop %v817
    %v1004 = vmul.f32 %v1003, 0.6931472
    %v1005 = vlog2.pop %v818
    %v1006 = vmul.f32 %v1005, 0.6931472
    %v1007 = vlog2.pop %v819
    %v1008 = vmul.f32 %v1007, 0.6931472
    %v1009 = vlog2.pop %v820
    %v1010 = vmul.f32 %v1009, 0.6931472
    %v1011 = vlog2.pop %v821
    %v1012 = vmul.f32 %v1011, 0.6931472
    %v1013 = vlog2.pop %v822
    %v1014 = vmul.f32 %v1013, 0.6931472
    %v1015 = vlog2.pop %v823
    %v1016 = vmul.f32 %v1015, 0.6931472
    %v1017 = vlog2.pop %v824
    %v1018 = vmul.f32 %v1017, 0.6931472
    %v1019 = vlog2.pop %v825
    %v1020 = vmul.f32 %v1019, 0.6931472
    %v1021 = vlog2.pop %v826
    %v1022 = vmul.f32 %v1021, 0.6931472
    %v1023 = vlog2.pop %v827
    %v1024 = vmul.f32 %v1023, 0.6931472
    %v1025 = vlog2.pop %v828
    %v1026 = vmul.f32 %v1025, 0.6931472
    %v1027 = vlog2.pop %v829
    %v1028 = vmul.f32 %v1027, 0.6931472
    %v1029 = vlog2.pop %v830
    %v1030 = vmul.f32 %v1029, 0.6931472
    %v1031 = vlog2.pop %v831
    %v1032 = vmul.f32 %v1031, 0.6931472
    %v1033 = vlog2.pop %v832
    %v1034 = vmul.f32 %v1033, 0.6931472
    %v1035 = vlog2.pop %v833
    %v1036 = vmul.f32 %v1035, 0.6931472
    %v1037 = vlog2.pop %v834
    %v1038 = vmul.f32 %v1037, 0.6931472
    %v1039 = vlog2.pop %v835
    %v1040 = vmul.f32 %v1039, 0.6931472
    %v1041 = vlog2.pop %v836
    %v1042 = vmul.f32 %v1041, 0.6931472
    %v1043 = vlog2.pop %v837
    %v1044 = vmul.f32 %v1043, 0.6931472
    %v1045 = vlog2.pop %v838
    %v1046 = vmul.f32 %v1045, 0.6931472
    %v1047 = vlog2.pop %v839
    %v1048 = vmul.f32 %v1047, 0.6931472
    %v1049 = vlog2.pop %v840
    %v1050 = vmul.f32 %v1049, 0.6931472
    %v1051 = vlog2.pop %v841
    %v1052 = vmul.f32 %v1051, 0.6931472
    %v1053 = vlog2.pop %v842
    %v1054 = vmul.f32 %v1053, 0.6931472
    %v1055 = vlog2.pop %v843
    %v1056 = vmul.f32 %v1055, 0.6931472
    %v1057 = vlog2.pop %v844
    %v1058 = vmul.f32 %v1057, 0.6931472
    %v1059 = vlog2.pop %v845
    %v1060 = vmul.f32 %v1059, 0.6931472
    %v1061 = vlog2.pop %v846
    %v1062 = vmul.f32 %v1061, 0.6931472
    %v1063 = vlog2.pop %v847
    %v1064 = vmul.f32 %v1063, 0.6931472
    %v1065 = vlog2.pop %v848
    %v1066 = vmul.f32 %v1065, 0.6931472
    %v1067 = vlog2.pop %v849
    %v1068 = vmul.f32 %v1067, 0.6931472
    %v1069 = vlog2.pop %v850
    %v1070 = vmul.f32 %v1069, 0.6931472
    %v1071 = vlog2.pop %v851
    %v1072 = vmul.f32 %v1071, 0.6931472
    %v1073 = vlog2.pop %v852
    %v1074 = vmul.f32 %v1073, 0.6931472
    %v1075 = vlog2.pop %v853
    %v1076 = vmul.f32 %v1075, 0.6931472
    %v1077 = vlog2.pop %v854
    %v1078 = vmul.f32 %v1077, 0.6931472
    %v1079 = vlog2.pop %v855
    %v1080 = vmul.f32 %v1079, 0.6931472
    %v1081 = vlog2.pop %v856
    %v1082 = vmul.f32 %v1081, 0.6931472
    %v1083 = vlog2.pop %v857
    %v1084 = vmul.f32 %v1083, 0.6931472
    %v1085 = vlog2.pop %v858
    %v1086 = vmul.f32 %v1085, 0.6931472
    %v1087 = vlog2.pop %v859
    %v1088 = vmul.f32 %v1087, 0.6931472
    %v1089 = vlog2.pop %v860
    %v1090 = vmul.f32 %v1089, 0.6931472
    %v1091 = vlog2.pop %v861
    %v1092 = vmul.f32 %v1091, 0.6931472
    %v1093 = vlog2.pop %v862
    %v1094 = vmul.f32 %v1093, 0.6931472
    %v1095 = vlog2.pop %v863
    %v1096 = vmul.f32 %v1095, 0.6931472
    %v1097 = vlog2.pop %v864
    %v1098 = vmul.f32 %v1097, 0.6931472
    %v1099 = vlog2.pop %v865
    %v1100 = vmul.f32 %v1099, 0.6931472
    %v1101 = vlog2.pop %v866
    %v1102 = vmul.f32 %v1101, 0.6931472
    %v1103 = vlog2.pop %v867
    %v1104 = vmul.f32 %v1103, 0.6931472
    %v1105 = vlog2.pop %v868
    %v1106 = vmul.f32 %v1105, 0.6931472
    %v1107 = vlog2.pop %v869
    %v1108 = vmul.f32 %v1107, 0.6931472
    %v1109 = vlog2.pop %v870
    %v1110 = vmul.f32 %v1109, 0.6931472
    %v1111 = vlog2.pop %v871
    %v1112 = vmul.f32 %v1111, 0.6931472
    %v1113 = vlog2.pop %v872
    %v1114 = vmul.f32 %v1113, 0.6931472
    %v1115 = vlog2.pop %v873
    %v1116 = vmul.f32 %v1115, 0.6931472
    %v1117 = vlog2.pop %v874
    %v1118 = vmul.f32 %v1117, 0.6931472
    %v1119 = vlog2.pop %v875
    %v1120 = vmul.f32 %v1119, 0.6931472
    %v1121 = vlog2.pop %v876
    %v1122 = vmul.f32 %v1121, 0.6931472
    %v1123 = vlog2.pop %v877
    %v1124 = vmul.f32 %v1123, 0.6931472
    %v1125 = vlog2.pop %v878
    %v1126 = vmul.f32 %v1125, 0.6931472
    %v1127 = vlog2.pop %v879
    %v1128 = vmul.f32 %v1127, 0.6931472
    %v1129 = vlog2.pop %v880
    %v1130 = vmul.f32 %v1129, 0.6931472
    %v1131 = vlog2.pop %v881
    %v1132 = vmul.f32 %v1131, 0.6931472
    %v1133 = vlog2.pop %v882
    %v1134 = vmul.f32 %v1133, 0.6931472
    %v1135 = vlog2.pop %v883
    %v1136 = vmul.f32 %v1135, 0.6931472
    %v1137 = vlog2.pop %v884
    %v1138 = vmul.f32 %v1137, 0.6931472
    %v1139 = vlog2.pop %v885
    %v1140 = vmul.f32 %v1139, 0.6931472
    %v1141 = vlog2.pop %v886
    %v1142 = vmul.f32 %v1141, 0.6931472
    %1144 = vset.pattern.permute.xlu0 0
    %1145 = vperm.xlu0 %1144, %v21
    %v1146 = vpop.permute.xlu0 %1145
    %1149 = vset.pattern.permute.xlu0 0
    %1150 = vperm.xlu0 %1149, %v22
    %v1151 = vpop.permute.xlu0 %1150
    %1154 = vset.pattern.permute.xlu0 0
    %1155 = vperm.xlu0 %1154, %v23
    %v1156 = vpop.permute.xlu0 %1155
    %1159 = vset.pattern.permute.xlu0 0
    %1160 = vperm.xlu0 %1159, %v24
    %v1161 = vpop.permute.xlu0 %1160
    %1164 = vset.pattern.permute.xlu0 0
    %1165 = vperm.xlu0 %1164, %v25
    %v1166 = vpop.permute.xlu0 %1165
    %1169 = vset.pattern.permute.xlu0 0
    %1170 = vperm.xlu0 %1169, %v26
    %v1171 = vpop.permute.xlu0 %1170
    %1174 = vset.pattern.permute.xlu0 0
    %1175 = vperm.xlu0 %1174, %v27
    %v1176 = vpop.permute.xlu0 %1175
    %1179 = vset.pattern.permute.xlu0 0
    %1180 = vperm.xlu0 %1179, %v28
    %v1181 = vpop.permute.xlu0 %1180
    %1184 = vset.pattern.permute.xlu0 0
    %1185 = vperm.xlu0 %1184, %v29
    %v1186 = vpop.permute.xlu0 %1185
    %1189 = vset.pattern.permute.xlu0 0
    %1190 = vperm.xlu0 %1189, %v30
    %v1191 = vpop.permute.xlu0 %1190
    %1194 = vset.pattern.permute.xlu0 0
    %1195 = vperm.xlu0 %1194, %v31
    %v1196 = vpop.permute.xlu0 %1195
    %1199 = vset.pattern.permute.xlu0 0
    %1200 = vperm.xlu0 %1199, %v32
    %v1201 = vpop.permute.xlu0 %1200
    %1204 = vset.pattern.permute.xlu0 0
    %1205 = vperm.xlu0 %1204, %v33
    %v1206 = vpop.permute.xlu0 %1205
    %1209 = vset.pattern.permute.xlu0 0
    %1210 = vperm.xlu0 %1209, %v34
    %v1211 = vpop.permute.xlu0 %1210
    %1214 = vset.pattern.permute.xlu0 0
    %1215 = vperm.xlu0 %1214, %v35
    %v1216 = vpop.permute.xlu0 %1215
    %1219 = vset.pattern.permute.xlu0 0
    %1220 = vperm.xlu0 %1219, %v36
    %v1221 = vpop.permute.xlu0 %1220
    %1224 = vset.pattern.permute.xlu0 0
    %1225 = vperm.xlu0 %1224, %v37
    %v1226 = vpop.permute.xlu0 %1225
    %1229 = vset.pattern.permute.xlu0 0
    %1230 = vperm.xlu0 %1229, %v38
    %v1231 = vpop.permute.xlu0 %1230
    %1234 = vset.pattern.permute.xlu0 0
    %1235 = vperm.xlu0 %1234, %v39
    %v1236 = vpop.permute.xlu0 %1235
    %1239 = vset.pattern.permute.xlu0 0
    %1240 = vperm.xlu0 %1239, %v40
    %v1241 = vpop.permute.xlu0 %1240
    %1244 = vset.pattern.permute.xlu0 0
    %1245 = vperm.xlu0 %1244, %v41
    %v1246 = vpop.permute.xlu0 %1245
    %1249 = vset.pattern.permute.xlu0 0
    %1250 = vperm.xlu0 %1249, %v42
    %v1251 = vpop.permute.xlu0 %1250
    %1254 = vset.pattern.permute.xlu0 0
    %1255 = vperm.xlu0 %1254, %v43
    %v1256 = vpop.permute.xlu0 %1255
    %1259 = vset.pattern.permute.xlu0 0
    %1260 = vperm.xlu0 %1259, %v44
    %v1261 = vpop.permute.xlu0 %1260
    %1264 = vset.pattern.permute.xlu0 0
    %1265 = vperm.xlu0 %1264, %v45
    %v1266 = vpop.permute.xlu0 %1265
    %1269 = vset.pattern.permute.xlu0 0
    %1270 = vperm.xlu0 %1269, %v46
    %v1271 = vpop.permute.xlu0 %1270
    %1274 = vset.pattern.permute.xlu0 0
    %1275 = vperm.xlu0 %1274, %v47
    %v1276 = vpop.permute.xlu0 %1275
    %1279 = vset.pattern.permute.xlu0 0
    %1280 = vperm.xlu0 %1279, %v48
    %v1281 = vpop.permute.xlu0 %1280
    %1284 = vset.pattern.permute.xlu0 0
    %1285 = vperm.xlu0 %1284, %v49
    %v1286 = vpop.permute.xlu0 %1285
    %1289 = vset.pattern.permute.xlu0 0
    %1290 = vperm.xlu0 %1289, %v50
    %v1291 = vpop.permute.xlu0 %1290
    %1294 = vset.pattern.permute.xlu0 0
    %1295 = vperm.xlu0 %1294, %v51
    %v1296 = vpop.permute.xlu0 %1295
    %1299 = vset.pattern.permute.xlu0 0
    %1300 = vperm.xlu0 %1299, %v52
    %v1301 = vpop.permute.xlu0 %1300
    %1304 = vset.pattern.permute.xlu0 0
    %1305 = vperm.xlu0 %1304, %v53
    %v1306 = vpop.permute.xlu0 %1305
    %1309 = vset.pattern.permute.xlu0 0
    %1310 = vperm.xlu0 %1309, %v54
    %v1311 = vpop.permute.xlu0 %1310
    %1314 = vset.pattern.permute.xlu0 0
    %1315 = vperm.xlu0 %1314, %v55
    %v1316 = vpop.permute.xlu0 %1315
    %1319 = vset.pattern.permute.xlu0 0
    %1320 = vperm.xlu0 %1319, %v56
    %v1321 = vpop.permute.xlu0 %1320
    %1324 = vset.pattern.permute.xlu0 0
    %1325 = vperm.xlu0 %1324, %v57
    %v1326 = vpop.permute.xlu0 %1325
    %1329 = vset.pattern.permute.xlu0 0
    %1330 = vperm.xlu0 %1329, %v58
    %v1331 = vpop.permute.xlu0 %1330
    %1334 = vset.pattern.permute.xlu0 0
    %1335 = vperm.xlu0 %1334, %v59
    %v1336 = vpop.permute.xlu0 %1335
    %1339 = vset.pattern.permute.xlu0 0
    %1340 = vperm.xlu0 %1339, %v60
    %v1341 = vpop.permute.xlu0 %1340
    %1344 = vset.pattern.permute.xlu0 0
    %1345 = vperm.xlu0 %1344, %v61
    %v1346 = vpop.permute.xlu0 %1345
    %1349 = vset.pattern.permute.xlu0 0
    %1350 = vperm.xlu0 %1349, %v62
    %v1351 = vpop.permute.xlu0 %1350
    %1354 = vset.pattern.permute.xlu0 0
    %1355 = vperm.xlu0 %1354, %v63
    %v1356 = vpop.permute.xlu0 %1355
    %1359 = vset.pattern.permute.xlu0 0
    %1360 = vperm.xlu0 %1359, %v64
    %v1361 = vpop.permute.xlu0 %1360
    %1364 = vset.pattern.permute.xlu0 0
    %1365 = vperm.xlu0 %1364, %v65
    %v1366 = vpop.permute.xlu0 %1365
    %1369 = vset.pattern.permute.xlu0 0
    %1370 = vperm.xlu0 %1369, %v66
    %v1371 = vpop.permute.xlu0 %1370
    %1374 = vset.pattern.permute.xlu0 0
    %1375 = vperm.xlu0 %1374, %v67
    %v1376 = vpop.permute.xlu0 %1375
    %1379 = vset.pattern.permute.xlu0 0
    %1380 = vperm.xlu0 %1379, %v68
    %v1381 = vpop.permute.xlu0 %1380
    %1384 = vset.pattern.permute.xlu0 0
    %1385 = vperm.xlu0 %1384, %v69
    %v1386 = vpop.permute.xlu0 %1385
    %1389 = vset.pattern.permute.xlu0 0
    %1390 = vperm.xlu0 %1389, %v70
    %v1391 = vpop.permute.xlu0 %1390
    %1394 = vset.pattern.permute.xlu0 0
    %1395 = vperm.xlu0 %1394, %v71
    %v1396 = vpop.permute.xlu0 %1395
    %1399 = vset.pattern.permute.xlu0 0
    %1400 = vperm.xlu0 %1399, %v72
    %v1401 = vpop.permute.xlu0 %1400
    %1404 = vset.pattern.permute.xlu0 0
    %1405 = vperm.xlu0 %1404, %v73
    %v1406 = vpop.permute.xlu0 %1405
    %1409 = vset.pattern.permute.xlu0 0
    %1410 = vperm.xlu0 %1409, %v74
    %v1411 = vpop.permute.xlu0 %1410
    %1414 = vset.pattern.permute.xlu0 0
    %1415 = vperm.xlu0 %1414, %v75
    %v1416 = vpop.permute.xlu0 %1415
    %1419 = vset.pattern.permute.xlu0 0
    %1420 = vperm.xlu0 %1419, %v76
    %v1421 = vpop.permute.xlu0 %1420
    %1424 = vset.pattern.permute.xlu0 0
    %1425 = vperm.xlu0 %1424, %v77
    %v1426 = vpop.permute.xlu0 %1425
    %1429 = vset.pattern.permute.xlu0 0
    %1430 = vperm.xlu0 %1429, %v78
    %v1431 = vpop.permute.xlu0 %1430
    %1434 = vset.pattern.permute.xlu0 0
    %1435 = vperm.xlu0 %1434, %v79
    %v1436 = vpop.permute.xlu0 %1435
    %1439 = vset.pattern.permute.xlu0 0
    %1440 = vperm.xlu0 %1439, %v80
    %v1441 = vpop.permute.xlu0 %1440
    %1444 = vset.pattern.permute.xlu0 0
    %1445 = vperm.xlu0 %1444, %v81
    %v1446 = vpop.permute.xlu0 %1445
    %1449 = vset.pattern.permute.xlu0 0
    %1450 = vperm.xlu0 %1449, %v82
    %v1451 = vpop.permute.xlu0 %1450
    %1454 = vset.pattern.permute.xlu0 0
    %1455 = vperm.xlu0 %1454, %v83
    %v1456 = vpop.permute.xlu0 %1455
    %1459 = vset.pattern.permute.xlu0 0
    %1460 = vperm.xlu0 %1459, %v84
    %v1461 = vpop.permute.xlu0 %1460
    %v1463 = vmul.f32 %v1146, %v888
    %v1464 = vmul.f32 %v1151, %v890
    %v1465 = vmul.f32 %v1156, %v892
    %v1466 = vmul.f32 %v1161, %v894
    %v1467 = vmul.f32 %v1166, %v896
    %v1468 = vmul.f32 %v1171, %v898
    %v1469 = vmul.f32 %v1176, %v900
    %v1470 = vmul.f32 %v1181, %v902
    %v1471 = vmul.f32 %v1186, %v904
    %v1472 = vmul.f32 %v1191, %v906
    %v1473 = vmul.f32 %v1196, %v908
    %v1474 = vmul.f32 %v1201, %v910
    %v1475 = vmul.f32 %v1206, %v912
    %v1476 = vmul.f32 %v1211, %v914
    %v1477 = vmul.f32 %v1216, %v916
    %v1478 = vmul.f32 %v1221, %v918
    %v1479 = vmul.f32 %v1226, %v920
    %v1480 = vmul.f32 %v1231, %v922
    %v1481 = vmul.f32 %v1236, %v924
    %v1482 = vmul.f32 %v1241, %v926
    %v1483 = vmul.f32 %v1246, %v928
    %v1484 = vmul.f32 %v1251, %v930
    %v1485 = vmul.f32 %v1256, %v932
    %v1486 = vmul.f32 %v1261, %v934
    %v1487 = vmul.f32 %v1266, %v936
    %v1488 = vmul.f32 %v1271, %v938
    %v1489 = vmul.f32 %v1276, %v940
    %v1490 = vmul.f32 %v1281, %v942
    %v1491 = vmul.f32 %v1286, %v944
    %v1492 = vmul.f32 %v1291, %v946
    %v1493 = vmul.f32 %v1296, %v948
    %v1494 = vmul.f32 %v1301, %v950
    %v1495 = vmul.f32 %v1306, %v952
    %v1496 = vmul.f32 %v1311, %v954
    %v1497 = vmul.f32 %v1316, %v956
    %v1498 = vmul.f32 %v1321, %v958
    %v1499 = vmul.f32 %v1326, %v960
    %v1500 = vmul.f32 %v1331, %v962
    %v1501 = vmul.f32 %v1336, %v964
    %v1502 = vmul.f32 %v1341, %v966
    %v1503 = vmul.f32 %v1346, %v968
    %v1504 = vmul.f32 %v1351, %v970
    %v1505 = vmul.f32 %v1356, %v972
    %v1506 = vmul.f32 %v1361, %v974
    %v1507 = vmul.f32 %v1366, %v976
    %v1508 = vmul.f32 %v1371, %v978
    %v1509 = vmul.f32 %v1376, %v980
    %v1510 = vmul.f32 %v1381, %v982
    %v1511 = vmul.f32 %v1386, %v984
    %v1512 = vmul.f32 %v1391, %v986
    %v1513 = vmul.f32 %v1396, %v988
    %v1514 = vmul.f32 %v1401, %v990
    %v1515 = vmul.f32 %v1406, %v992
    %v1516 = vmul.f32 %v1411, %v994
    %v1517 = vmul.f32 %v1416, %v996
    %v1518 = vmul.f32 %v1421, %v998
    %v1519 = vmul.f32 %v1426, %v1000
    %v1520 = vmul.f32 %v1431, %v1002
    %v1521 = vmul.f32 %v1436, %v1004
    %v1522 = vmul.f32 %v1441, %v1006
    %v1523 = vmul.f32 %v1446, %v1008
    %v1524 = vmul.f32 %v1451, %v1010
    %v1525 = vmul.f32 %v1456, %v1012
    %v1526 = vmul.f32 %v1461, %v1014
    %v1527 = vmul.f32 %v1146, %v1016
    %v1528 = vmul.f32 %v1151, %v1018
    %v1529 = vmul.f32 %v1156, %v1020
    %v1530 = vmul.f32 %v1161, %v1022
    %v1531 = vmul.f32 %v1166, %v1024
    %v1532 = vmul.f32 %v1171, %v1026
    %v1533 = vmul.f32 %v1176, %v1028
    %v1534 = vmul.f32 %v1181, %v1030
    %v1535 = vmul.f32 %v1186, %v1032
    %v1536 = vmul.f32 %v1191, %v1034
    %v1537 = vmul.f32 %v1196, %v1036
    %v1538 = vmul.f32 %v1201, %v1038
    %v1539 = vmul.f32 %v1206, %v1040
    %v1540 = vmul.f32 %v1211, %v1042
    %v1541 = vmul.f32 %v1216, %v1044
    %v1542 = vmul.f32 %v1221, %v1046
    %v1543 = vmul.f32 %v1226, %v1048
    %v1544 = vmul.f32 %v1231, %v1050
    %v1545 = vmul.f32 %v1236, %v1052
    %v1546 = vmul.f32 %v1241, %v1054
    %v1547 = vmul.f32 %v1246, %v1056
    %v1548 = vmul.f32 %v1251, %v1058
    %v1549 = vmul.f32 %v1256, %v1060
    %v1550 = vmul.f32 %v1261, %v1062
    %v1551 = vmul.f32 %v1266, %v1064
    %v1552 = vmul.f32 %v1271, %v1066
    %v1553 = vmul.f32 %v1276, %v1068
    %v1554 = vmul.f32 %v1281, %v1070
    %v1555 = vmul.f32 %v1286, %v1072
    %v1556 = vmul.f32 %v1291, %v1074
    %v1557 = vmul.f32 %v1296, %v1076
    %v1558 = vmul.f32 %v1301, %v1078
    %v1559 = vmul.f32 %v1306, %v1080
    %v1560 = vmul.f32 %v1311, %v1082
    %v1561 = vmul.f32 %v1316, %v1084
    %v1562 = vmul.f32 %v1321, %v1086
    %v1563 = vmul.f32 %v1326, %v1088
    %v1564 = vmul.f32 %v1331, %v1090
    %v1565 = vmul.f32 %v1336, %v1092
    %v1566 = vmul.f32 %v1341, %v1094
    %v1567 = vmul.f32 %v1346, %v1096
    %v1568 = vmul.f32 %v1351, %v1098
    %v1569 = vmul.f32 %v1356, %v1100
    %v1570 = vmul.f32 %v1361, %v1102
    %v1571 = vmul.f32 %v1366, %v1104
    %v1572 = vmul.f32 %v1371, %v1106
    %v1573 = vmul.f32 %v1376, %v1108
    %v1574 = vmul.f32 %v1381, %v1110
    %v1575 = vmul.f32 %v1386, %v1112
    %v1576 = vmul.f32 %v1391, %v1114
    %v1577 = vmul.f32 %v1396, %v1116
    %v1578 = vmul.f32 %v1401, %v1118
    %v1579 = vmul.f32 %v1406, %v1120
    %v1580 = vmul.f32 %v1411, %v1122
    %v1581 = vmul.f32 %v1416, %v1124
    %v1582 = vmul.f32 %v1421, %v1126
    %v1583 = vmul.f32 %v1426, %v1128
    %v1584 = vmul.f32 %v1431, %v1130
    %v1585 = vmul.f32 %v1436, %v1132
    %v1586 = vmul.f32 %v1441, %v1134
    %v1587 = vmul.f32 %v1446, %v1136
    %v1588 = vmul.f32 %v1451, %v1138
    %v1589 = vmul.f32 %v1456, %v1140
    %v1590 = vmul.f32 %v1461, %v1142
    %v1591 = vmul.f32 %v1463, 1.442695
    %v1592 = vpow.pop %v1591
    %v1593 = vmul.f32 %v1464, 1.442695
    %v1594 = vpow.pop %v1593
    %v1595 = vmul.f32 %v1465, 1.442695
    %v1596 = vpow.pop %v1595
    %v1597 = vmul.f32 %v1466, 1.442695
    %v1598 = vpow.pop %v1597
    %v1599 = vmul.f32 %v1467, 1.442695
    %v1600 = vpow.pop %v1599
    %v1601 = vmul.f32 %v1468, 1.442695
    %v1602 = vpow.pop %v1601
    %v1603 = vmul.f32 %v1469, 1.442695
    %v1604 = vpow.pop %v1603
    %v1605 = vmul.f32 %v1470, 1.442695
    %v1606 = vpow.pop %v1605
    %v1607 = vmul.f32 %v1471, 1.442695
    %v1608 = vpow.pop %v1607
    %v1609 = vmul.f32 %v1472, 1.442695
    %v1610 = vpow.pop %v1609
    %v1611 = vmul.f32 %v1473, 1.442695
    %v1612 = vpow.pop %v1611
    %v1613 = vmul.f32 %v1474, 1.442695
    %v1614 = vpow.pop %v1613
    %v1615 = vmul.f32 %v1475, 1.442695
    %v1616 = vpow.pop %v1615
    %v1617 = vmul.f32 %v1476, 1.442695
    %v1618 = vpow.pop %v1617
    %v1619 = vmul.f32 %v1477, 1.442695
    %v1620 = vpow.pop %v1619
    %v1621 = vmul.f32 %v1478, 1.442695
    %v1622 = vpow.pop %v1621
    %v1623 = vmul.f32 %v1479, 1.442695
    %v1624 = vpow.pop %v1623
    %v1625 = vmul.f32 %v1480, 1.442695
    %v1626 = vpow.pop %v1625
    %v1627 = vmul.f32 %v1481, 1.442695
    %v1628 = vpow.pop %v1627
    %v1629 = vmul.f32 %v1482, 1.442695
    %v1630 = vpow.pop %v1629
    %v1631 = vmul.f32 %v1483, 1.442695
    %v1632 = vpow.pop %v1631
    %v1633 = vmul.f32 %v1484, 1.442695
    %v1634 = vpow.pop %v1633
    %v1635 = vmul.f32 %v1485, 1.442695
    %v1636 = vpow.pop %v1635
    %v1637 = vmul.f32 %v1486, 1.442695
    %v1638 = vpow.pop %v1637
    %v1639 = vmul.f32 %v1487, 1.442695
    %v1640 = vpow.pop %v1639
    %v1641 = vmul.f32 %v1488, 1.442695
    %v1642 = vpow.pop %v1641
    %v1643 = vmul.f32 %v1489, 1.442695
    %v1644 = vpow.pop %v1643
    %v1645 = vmul.f32 %v1490, 1.442695
    %v1646 = vpow.pop %v1645
    %v1647 = vmul.f32 %v1491, 1.442695
    %v1648 = vpow.pop %v1647
    %v1649 = vmul.f32 %v1492, 1.442695
    %v1650 = vpow.pop %v1649
    %v1651 = vmul.f32 %v1493, 1.442695
    %v1652 = vpow.pop %v1651
    %v1653 = vmul.f32 %v1494, 1.442695
    %v1654 = vpow.pop %v1653
    %v1655 = vmul.f32 %v1495, 1.442695
    %v1656 = vpow.pop %v1655
    %v1657 = vmul.f32 %v1496, 1.442695
    %v1658 = vpow.pop %v1657
    %v1659 = vmul.f32 %v1497, 1.442695
    %v1660 = vpow.pop %v1659
    %v1661 = vmul.f32 %v1498, 1.442695
    %v1662 = vpow.pop %v1661
    %v1663 = vmul.f32 %v1499, 1.442695
    %v1664 = vpow.pop %v1663
    %v1665 = vmul.f32 %v1500, 1.442695
    %v1666 = vpow.pop %v1665
    %v1667 = vmul.f32 %v1501, 1.442695
    %v1668 = vpow.pop %v1667
    %v1669 = vmul.f32 %v1502, 1.442695
    %v1670 = vpow.pop %v1669
    %v1671 = vmul.f32 %v1503, 1.442695
    %v1672 = vpow.pop %v1671
    %v1673 = vmul.f32 %v1504, 1.442695
    %v1674 = vpow.pop %v1673
    %v1675 = vmul.f32 %v1505, 1.442695
    %v1676 = vpow.pop %v1675
    %v1677 = vmul.f32 %v1506, 1.442695
    %v1678 = vpow.pop %v1677
    %v1679 = vmul.f32 %v1507, 1.442695
    %v1680 = vpow.pop %v1679
    %v1681 = vmul.f32 %v1508, 1.442695
    %v1682 = vpow.pop %v1681
    %v1683 = vmul.f32 %v1509, 1.442695
    %v1684 = vpow.pop %v1683
    %v1685 = vmul.f32 %v1510, 1.442695
    %v1686 = vpow.pop %v1685
    %v1687 = vmul.f32 %v1511, 1.442695
    %v1688 = vpow.pop %v1687
    %v1689 = vmul.f32 %v1512, 1.442695
    %v1690 = vpow.pop %v1689
    %v1691 = vmul.f32 %v1513, 1.442695
    %v1692 = vpow.pop %v1691
    %v1693 = vmul.f32 %v1514, 1.442695
    %v1694 = vpow.pop %v1693
    %v1695 = vmul.f32 %v1515, 1.442695
    %v1696 = vpow.pop %v1695
    %v1697 = vmul.f32 %v1516, 1.442695
    %v1698 = vpow.pop %v1697
    %v1699 = vmul.f32 %v1517, 1.442695
    %v1700 = vpow.pop %v1699
    %v1701 = vmul.f32 %v1518, 1.442695
    %v1702 = vpow.pop %v1701
    %v1703 = vmul.f32 %v1519, 1.442695
    %v1704 = vpow.pop %v1703
    %v1705 = vmul.f32 %v1520, 1.442695
    %v1706 = vpow.pop %v1705
    %v1707 = vmul.f32 %v1521, 1.442695
    %v1708 = vpow.pop %v1707
    %v1709 = vmul.f32 %v1522, 1.442695
    %v1710 = vpow.pop %v1709
    %v1711 = vmul.f32 %v1523, 1.442695
    %v1712 = vpow.pop %v1711
    %v1713 = vmul.f32 %v1524, 1.442695
    %v1714 = vpow.pop %v1713
    %v1715 = vmul.f32 %v1525, 1.442695
    %v1716 = vpow.pop %v1715
    %v1717 = vmul.f32 %v1526, 1.442695
    %v1718 = vpow.pop %v1717
    %v1719 = vmul.f32 %v1527, 1.442695
    %v1720 = vpow.pop %v1719
    %v1721 = vmul.f32 %v1528, 1.442695
    %v1722 = vpow.pop %v1721
    %v1723 = vmul.f32 %v1529, 1.442695
    %v1724 = vpow.pop %v1723
    %v1725 = vmul.f32 %v1530, 1.442695
    %v1726 = vpow.pop %v1725
    %v1727 = vmul.f32 %v1531, 1.442695
    %v1728 = vpow.pop %v1727
    %v1729 = vmul.f32 %v1532, 1.442695
    %v1730 = vpow.pop %v1729
    %v1731 = vmul.f32 %v1533, 1.442695
    %v1732 = vpow.pop %v1731
    %v1733 = vmul.f32 %v1534, 1.442695
    %v1734 = vpow.pop %v1733
    %v1735 = vmul.f32 %v1535, 1.442695
    %v1736 = vpow.pop %v1735
    %v1737 = vmul.f32 %v1536, 1.442695
    %v1738 = vpow.pop %v1737
    %v1739 = vmul.f32 %v1537, 1.442695
    %v1740 = vpow.pop %v1739
    %v1741 = vmul.f32 %v1538, 1.442695
    %v1742 = vpow.pop %v1741
    %v1743 = vmul.f32 %v1539, 1.442695
    %v1744 = vpow.pop %v1743
    %v1745 = vmul.f32 %v1540, 1.442695
    %v1746 = vpow.pop %v1745
    %v1747 = vmul.f32 %v1541, 1.442695
    %v1748 = vpow.pop %v1747
    %v1749 = vmul.f32 %v1542, 1.442695
    %v1750 = vpow.pop %v1749
    %v1751 = vmul.f32 %v1543, 1.442695
    %v1752 = vpow.pop %v1751
    %v1753 = vmul.f32 %v1544, 1.442695
    %v1754 = vpow.pop %v1753
    %v1755 = vmul.f32 %v1545, 1.442695
    %v1756 = vpow.pop %v1755
    %v1757 = vmul.f32 %v1546, 1.442695
    %v1758 = vpow.pop %v1757
    %v1759 = vmul.f32 %v1547, 1.442695
    %v1760 = vpow.pop %v1759
    %v1761 = vmul.f32 %v1548, 1.442695
    %v1762 = vpow.pop %v1761
    %v1763 = vmul.f32 %v1549, 1.442695
    %v1764 = vpow.pop %v1763
    %v1765 = vmul.f32 %v1550, 1.442695
    %v1766 = vpow.pop %v1765
    %v1767 = vmul.f32 %v1551, 1.442695
    %v1768 = vpow.pop %v1767
    %v1769 = vmul.f32 %v1552, 1.442695
    %v1770 = vpow.pop %v1769
    %v1771 = vmul.f32 %v1553, 1.442695
    %v1772 = vpow.pop %v1771
    %v1773 = vmul.f32 %v1554, 1.442695
    %v1774 = vpow.pop %v1773
    %v1775 = vmul.f32 %v1555, 1.442695
    %v1776 = vpow.pop %v1775
    %v1777 = vmul.f32 %v1556, 1.442695
    %v1778 = vpow.pop %v1777
    %v1779 = vmul.f32 %v1557, 1.442695
    %v1780 = vpow.pop %v1779
    %v1781 = vmul.f32 %v1558, 1.442695
    %v1782 = vpow.pop %v1781
    %v1783 = vmul.f32 %v1559, 1.442695
    %v1784 = vpow.pop %v1783
    %v1785 = vmul.f32 %v1560, 1.442695
    %v1786 = vpow.pop %v1785
    %v1787 = vmul.f32 %v1561, 1.442695
    %v1788 = vpow.pop %v1787
    %v1789 = vmul.f32 %v1562, 1.442695
    %v1790 = vpow.pop %v1789
    %v1791 = vmul.f32 %v1563, 1.442695
    %v1792 = vpow.pop %v1791
    %v1793 = vmul.f32 %v1564, 1.442695
    %v1794 = vpow.pop %v1793
    %v1795 = vmul.f32 %v1565, 1.442695
    %v1796 = vpow.pop %v1795
    %v1797 = vmul.f32 %v1566, 1.442695
    %v1798 = vpow.pop %v1797
    %v1799 = vmul.f32 %v1567, 1.442695
    %v1800 = vpow.pop %v1799
    %v1801 = vmul.f32 %v1568, 1.442695
    %v1802 = vpow.pop %v1801
    %v1803 = vmul.f32 %v1569, 1.442695
    %v1804 = vpow.pop %v1803
    %v1805 = vmul.f32 %v1570, 1.442695
    %v1806 = vpow.pop %v1805
    %v1807 = vmul.f32 %v1571, 1.442695
    %v1808 = vpow.pop %v1807
    %v1809 = vmul.f32 %v1572, 1.442695
    %v1810 = vpow.pop %v1809
    %v1811 = vmul.f32 %v1573, 1.442695
    %v1812 = vpow.pop %v1811
    %v1813 = vmul.f32 %v1574, 1.442695
    %v1814 = vpow.pop %v1813
    %v1815 = vmul.f32 %v1575, 1.442695
    %v1816 = vpow.pop %v1815
    %v1817 = vmul.f32 %v1576, 1.442695
    %v1818 = vpow.pop %v1817
    %v1819 = vmul.f32 %v1577, 1.442695
    %v1820 = vpow.pop %v1819
    %v1821 = vmul.f32 %v1578, 1.442695
    %v1822 = vpow.pop %v1821
    %v1823 = vmul.f32 %v1579, 1.442695
    %v1824 = vpow.pop %v1823
    %v1825 = vmul.f32 %v1580, 1.442695
    %v1826 = vpow.pop %v1825
    %v1827 = vmul.f32 %v1581, 1.442695
    %v1828 = vpow.pop %v1827
    %v1829 = vmul.f32 %v1582, 1.442695
    %v1830 = vpow.pop %v1829
    %v1831 = vmul.f32 %v1583, 1.442695
    %v1832 = vpow.pop %v1831
    %v1833 = vmul.f32 %v1584, 1.442695
    %v1834 = vpow.pop %v1833
    %v1835 = vmul.f32 %v1585, 1.442695
    %v1836 = vpow.pop %v1835
    %v1837 = vmul.f32 %v1586, 1.442695
    %v1838 = vpow.pop %v1837
    %v1839 = vmul.f32 %v1587, 1.442695
    %v1840 = vpow.pop %v1839
    %v1841 = vmul.f32 %v1588, 1.442695
    %v1842 = vpow.pop %v1841
    %v1843 = vmul.f32 %v1589, 1.442695
    %v1844 = vpow.pop %v1843
    %v1845 = vmul.f32 %v1590, 1.442695
    %v1846 = vpow.pop %v1845
    %v1847 = vsel %vm342, %v1592, 0.0
    %1848 = vadd.xlane.f32.xlu0 %v1847
    %v1849 = vpop.xlane.xlu0 %1848
    %v1850 = vsel %vm342, %v1594, 0.0
    %1851 = vadd.xlane.f32.xlu0 %v1850
    %v1852 = vpop.xlane.xlu0 %1851
    %v1853 = vsel %vm342, %v1596, 0.0
    %1854 = vadd.xlane.f32.xlu0 %v1853
    %v1855 = vpop.xlane.xlu0 %1854
    %v1856 = vsel %vm342, %v1598, 0.0
    %1857 = vadd.xlane.f32.xlu0 %v1856
    %v1858 = vpop.xlane.xlu0 %1857
    %v1859 = vsel %vm342, %v1600, 0.0
    %1860 = vadd.xlane.f32.xlu0 %v1859
    %v1861 = vpop.xlane.xlu0 %1860
    %v1862 = vsel %vm342, %v1602, 0.0
    %1863 = vadd.xlane.f32.xlu0 %v1862
    %v1864 = vpop.xlane.xlu0 %1863
    %v1865 = vsel %vm342, %v1604, 0.0
    %1866 = vadd.xlane.f32.xlu0 %v1865
    %v1867 = vpop.xlane.xlu0 %1866
    %v1868 = vsel %vm342, %v1606, 0.0
    %1869 = vadd.xlane.f32.xlu0 %v1868
    %v1870 = vpop.xlane.xlu0 %1869
    %v1871 = vsel %vm342, %v1608, 0.0
    %1872 = vadd.xlane.f32.xlu0 %v1871
    %v1873 = vpop.xlane.xlu0 %1872
    %v1874 = vsel %vm342, %v1610, 0.0
    %1875 = vadd.xlane.f32.xlu0 %v1874
    %v1876 = vpop.xlane.xlu0 %1875
    %v1877 = vsel %vm342, %v1612, 0.0
    %1878 = vadd.xlane.f32.xlu0 %v1877
    %v1879 = vpop.xlane.xlu0 %1878
    %v1880 = vsel %vm342, %v1614, 0.0
    %1881 = vadd.xlane.f32.xlu0 %v1880
    %v1882 = vpop.xlane.xlu0 %1881
    %v1883 = vsel %vm342, %v1616, 0.0
    %1884 = vadd.xlane.f32.xlu0 %v1883
    %v1885 = vpop.xlane.xlu0 %1884
    %v1886 = vsel %vm342, %v1618, 0.0
    %1887 = vadd.xlane.f32.xlu0 %v1886
    %v1888 = vpop.xlane.xlu0 %1887
    %v1889 = vsel %vm342, %v1620, 0.0
    %1890 = vadd.xlane.f32.xlu0 %v1889
    %v1891 = vpop.xlane.xlu0 %1890
    %v1892 = vsel %vm342, %v1622, 0.0
    %1893 = vadd.xlane.f32.xlu0 %v1892
    %v1894 = vpop.xlane.xlu0 %1893
    %v1895 = vsel %vm342, %v1624, 0.0
    %1896 = vadd.xlane.f32.xlu0 %v1895
    %v1897 = vpop.xlane.xlu0 %1896
    %v1898 = vsel %vm342, %v1626, 0.0
    %1899 = vadd.xlane.f32.xlu0 %v1898
    %v1900 = vpop.xlane.xlu0 %1899
    %v1901 = vsel %vm342, %v1628, 0.0
    %1902 = vadd.xlane.f32.xlu0 %v1901
    %v1903 = vpop.xlane.xlu0 %1902
    %v1904 = vsel %vm342, %v1630, 0.0
    %1905 = vadd.xlane.f32.xlu0 %v1904
    %v1906 = vpop.xlane.xlu0 %1905
    %v1907 = vsel %vm342, %v1632, 0.0
    %1908 = vadd.xlane.f32.xlu0 %v1907
    %v1909 = vpop.xlane.xlu0 %1908
    %v1910 = vsel %vm342, %v1634, 0.0
    %1911 = vadd.xlane.f32.xlu0 %v1910
    %v1912 = vpop.xlane.xlu0 %1911
    %v1913 = vsel %vm342, %v1636, 0.0
    %1914 = vadd.xlane.f32.xlu0 %v1913
    %v1915 = vpop.xlane.xlu0 %1914
    %v1916 = vsel %vm342, %v1638, 0.0
    %1917 = vadd.xlane.f32.xlu0 %v1916
    %v1918 = vpop.xlane.xlu0 %1917
    %v1919 = vsel %vm342, %v1640, 0.0
    %1920 = vadd.xlane.f32.xlu0 %v1919
    %v1921 = vpop.xlane.xlu0 %1920
    %v1922 = vsel %vm342, %v1642, 0.0
    %1923 = vadd.xlane.f32.xlu0 %v1922
    %v1924 = vpop.xlane.xlu0 %1923
    %v1925 = vsel %vm342, %v1644, 0.0
    %1926 = vadd.xlane.f32.xlu0 %v1925
    %v1927 = vpop.xlane.xlu0 %1926
    %v1928 = vsel %vm342, %v1646, 0.0
    %1929 = vadd.xlane.f32.xlu0 %v1928
    %v1930 = vpop.xlane.xlu0 %1929
    %v1931 = vsel %vm342, %v1648, 0.0
    %1932 = vadd.xlane.f32.xlu0 %v1931
    %v1933 = vpop.xlane.xlu0 %1932
    %v1934 = vsel %vm342, %v1650, 0.0
    %1935 = vadd.xlane.f32.xlu0 %v1934
    %v1936 = vpop.xlane.xlu0 %1935
    %v1937 = vsel %vm342, %v1652, 0.0
    %1938 = vadd.xlane.f32.xlu0 %v1937
    %v1939 = vpop.xlane.xlu0 %1938
    %v1940 = vsel %vm342, %v1654, 0.0
    %1941 = vadd.xlane.f32.xlu0 %v1940
    %v1942 = vpop.xlane.xlu0 %1941
    %v1943 = vsel %vm342, %v1656, 0.0
    %1944 = vadd.xlane.f32.xlu0 %v1943
    %v1945 = vpop.xlane.xlu0 %1944
    %v1946 = vsel %vm342, %v1658, 0.0
    %1947 = vadd.xlane.f32.xlu0 %v1946
    %v1948 = vpop.xlane.xlu0 %1947
    %v1949 = vsel %vm342, %v1660, 0.0
    %1950 = vadd.xlane.f32.xlu0 %v1949
    %v1951 = vpop.xlane.xlu0 %1950
    %v1952 = vsel %vm342, %v1662, 0.0
    %1953 = vadd.xlane.f32.xlu0 %v1952
    %v1954 = vpop.xlane.xlu0 %1953
    %v1955 = vsel %vm342, %v1664, 0.0
    %1956 = vadd.xlane.f32.xlu0 %v1955
    %v1957 = vpop.xlane.xlu0 %1956
    %v1958 = vsel %vm342, %v1666, 0.0
    %1959 = vadd.xlane.f32.xlu0 %v1958
    %v1960 = vpop.xlane.xlu0 %1959
    %v1961 = vsel %vm342, %v1668, 0.0
    %1962 = vadd.xlane.f32.xlu0 %v1961
    %v1963 = vpop.xlane.xlu0 %1962
    %v1964 = vsel %vm342, %v1670, 0.0
    %1965 = vadd.xlane.f32.xlu0 %v1964
    %v1966 = vpop.xlane.xlu0 %1965
    %v1967 = vsel %vm342, %v1672, 0.0
    %1968 = vadd.xlane.f32.xlu0 %v1967
    %v1969 = vpop.xlane.xlu0 %1968
    %v1970 = vsel %vm342, %v1674, 0.0
    %1971 = vadd.xlane.f32.xlu0 %v1970
    %v1972 = vpop.xlane.xlu0 %1971
    %v1973 = vsel %vm342, %v1676, 0.0
    %1974 = vadd.xlane.f32.xlu0 %v1973
    %v1975 = vpop.xlane.xlu0 %1974
    %v1976 = vsel %vm342, %v1678, 0.0
    %1977 = vadd.xlane.f32.xlu0 %v1976
    %v1978 = vpop.xlane.xlu0 %1977
    %v1979 = vsel %vm342, %v1680, 0.0
    %1980 = vadd.xlane.f32.xlu0 %v1979
    %v1981 = vpop.xlane.xlu0 %1980
    %v1982 = vsel %vm342, %v1682, 0.0
    %1983 = vadd.xlane.f32.xlu0 %v1982
    %v1984 = vpop.xlane.xlu0 %1983
    %v1985 = vsel %vm342, %v1684, 0.0
    %1986 = vadd.xlane.f32.xlu0 %v1985
    %v1987 = vpop.xlane.xlu0 %1986
    %v1988 = vsel %vm342, %v1686, 0.0
    %1989 = vadd.xlane.f32.xlu0 %v1988
    %v1990 = vpop.xlane.xlu0 %1989
    %v1991 = vsel %vm342, %v1688, 0.0
    %1992 = vadd.xlane.f32.xlu0 %v1991
    %v1993 = vpop.xlane.xlu0 %1992
    %v1994 = vsel %vm342, %v1690, 0.0
    %1995 = vadd.xlane.f32.xlu0 %v1994
    %v1996 = vpop.xlane.xlu0 %1995
    %v1997 = vsel %vm342, %v1692, 0.0
    %1998 = vadd.xlane.f32.xlu0 %v1997
    %v1999 = vpop.xlane.xlu0 %1998
    %v2000 = vsel %vm342, %v1694, 0.0
    %2001 = vadd.xlane.f32.xlu0 %v2000
    %v2002 = vpop.xlane.xlu0 %2001
    %v2003 = vsel %vm342, %v1696, 0.0
    %2004 = vadd.xlane.f32.xlu0 %v2003
    %v2005 = vpop.xlane.xlu0 %2004
    %v2006 = vsel %vm342, %v1698, 0.0
    %2007 = vadd.xlane.f32.xlu0 %v2006
    %v2008 = vpop.xlane.xlu0 %2007
    %v2009 = vsel %vm342, %v1700, 0.0
    %2010 = vadd.xlane.f32.xlu0 %v2009
    %v2011 = vpop.xlane.xlu0 %2010
    %v2012 = vsel %vm342, %v1702, 0.0
    %2013 = vadd.xlane.f32.xlu0 %v2012
    %v2014 = vpop.xlane.xlu0 %2013
    %v2015 = vsel %vm342, %v1704, 0.0
    %2016 = vadd.xlane.f32.xlu0 %v2015
    %v2017 = vpop.xlane.xlu0 %2016
    %v2018 = vsel %vm342, %v1706, 0.0
    %2019 = vadd.xlane.f32.xlu0 %v2018
    %v2020 = vpop.xlane.xlu0 %2019
    %v2021 = vsel %vm342, %v1708, 0.0
    %2022 = vadd.xlane.f32.xlu0 %v2021
    %v2023 = vpop.xlane.xlu0 %2022
    %v2024 = vsel %vm342, %v1710, 0.0
    %2025 = vadd.xlane.f32.xlu0 %v2024
    %v2026 = vpop.xlane.xlu0 %2025
    %v2027 = vsel %vm342, %v1712, 0.0
    %2028 = vadd.xlane.f32.xlu0 %v2027
    %v2029 = vpop.xlane.xlu0 %2028
    %v2030 = vsel %vm342, %v1714, 0.0
    %2031 = vadd.xlane.f32.xlu0 %v2030
    %v2032 = vpop.xlane.xlu0 %2031
    %v2033 = vsel %vm342, %v1716, 0.0
    %2034 = vadd.xlane.f32.xlu0 %v2033
    %v2035 = vpop.xlane.xlu0 %2034
    %v2036 = vsel %vm342, %v1718, 0.0
    %2037 = vadd.xlane.f32.xlu0 %v2036
    %v2038 = vpop.xlane.xlu0 %2037
    %v2039 = vsel %vm342, %v1720, 0.0
    %2040 = vadd.xlane.f32.xlu0 %v2039
    %v2041 = vpop.xlane.xlu0 %2040
    %v2042 = vsel %vm342, %v1722, 0.0
    %2043 = vadd.xlane.f32.xlu0 %v2042
    %v2044 = vpop.xlane.xlu0 %2043
    %v2045 = vsel %vm342, %v1724, 0.0
    %2046 = vadd.xlane.f32.xlu0 %v2045
    %v2047 = vpop.xlane.xlu0 %2046
    %v2048 = vsel %vm342, %v1726, 0.0
    %2049 = vadd.xlane.f32.xlu0 %v2048
    %v2050 = vpop.xlane.xlu0 %2049
    %v2051 = vsel %vm342, %v1728, 0.0
    %2052 = vadd.xlane.f32.xlu0 %v2051
    %v2053 = vpop.xlane.xlu0 %2052
    %v2054 = vsel %vm342, %v1730, 0.0
    %2055 = vadd.xlane.f32.xlu0 %v2054
    %v2056 = vpop.xlane.xlu0 %2055
    %v2057 = vsel %vm342, %v1732, 0.0
    %2058 = vadd.xlane.f32.xlu0 %v2057
    %v2059 = vpop.xlane.xlu0 %2058
    %v2060 = vsel %vm342, %v1734, 0.0
    %2061 = vadd.xlane.f32.xlu0 %v2060
    %v2062 = vpop.xlane.xlu0 %2061
    %v2063 = vsel %vm342, %v1736, 0.0
    %2064 = vadd.xlane.f32.xlu0 %v2063
    %v2065 = vpop.xlane.xlu0 %2064
    %v2066 = vsel %vm342, %v1738, 0.0
    %2067 = vadd.xlane.f32.xlu0 %v2066
    %v2068 = vpop.xlane.xlu0 %2067
    %v2069 = vsel %vm342, %v1740, 0.0
    %2070 = vadd.xlane.f32.xlu0 %v2069
    %v2071 = vpop.xlane.xlu0 %2070
    %v2072 = vsel %vm342, %v1742, 0.0
    %2073 = vadd.xlane.f32.xlu0 %v2072
    %v2074 = vpop.xlane.xlu0 %2073
    %v2075 = vsel %vm342, %v1744, 0.0
    %2076 = vadd.xlane.f32.xlu0 %v2075
    %v2077 = vpop.xlane.xlu0 %2076
    %v2078 = vsel %vm342, %v1746, 0.0
    %2079 = vadd.xlane.f32.xlu0 %v2078
    %v2080 = vpop.xlane.xlu0 %2079
    %v2081 = vsel %vm342, %v1748, 0.0
    %2082 = vadd.xlane.f32.xlu0 %v2081
    %v2083 = vpop.xlane.xlu0 %2082
    %v2084 = vsel %vm342, %v1750, 0.0
    %2085 = vadd.xlane.f32.xlu0 %v2084
    %v2086 = vpop.xlane.xlu0 %2085
    %v2087 = vsel %vm342, %v1752, 0.0
    %2088 = vadd.xlane.f32.xlu0 %v2087
    %v2089 = vpop.xlane.xlu0 %2088
    %v2090 = vsel %vm342, %v1754, 0.0
    %2091 = vadd.xlane.f32.xlu0 %v2090
    %v2092 = vpop.xlane.xlu0 %2091
    %v2093 = vsel %vm342, %v1756, 0.0
    %2094 = vadd.xlane.f32.xlu0 %v2093
    %v2095 = vpop.xlane.xlu0 %2094
    %v2096 = vsel %vm342, %v1758, 0.0
    %2097 = vadd.xlane.f32.xlu0 %v2096
    %v2098 = vpop.xlane.xlu0 %2097
    %v2099 = vsel %vm342, %v1760, 0.0
    %2100 = vadd.xlane.f32.xlu0 %v2099
    %v2101 = vpop.xlane.xlu0 %2100
    %v2102 = vsel %vm342, %v1762, 0.0
    %2103 = vadd.xlane.f32.xlu0 %v2102
    %v2104 = vpop.xlane.xlu0 %2103
    %v2105 = vsel %vm342, %v1764, 0.0
    %2106 = vadd.xlane.f32.xlu0 %v2105
    %v2107 = vpop.xlane.xlu0 %2106
    %v2108 = vsel %vm342, %v1766, 0.0
    %2109 = vadd.xlane.f32.xlu0 %v2108
    %v2110 = vpop.xlane.xlu0 %2109
    %v2111 = vsel %vm342, %v1768, 0.0
    %2112 = vadd.xlane.f32.xlu0 %v2111
    %v2113 = vpop.xlane.xlu0 %2112
    %v2114 = vsel %vm342, %v1770, 0.0
    %2115 = vadd.xlane.f32.xlu0 %v2114
    %v2116 = vpop.xlane.xlu0 %2115
    %v2117 = vsel %vm342, %v1772, 0.0
    %2118 = vadd.xlane.f32.xlu0 %v2117
    %v2119 = vpop.xlane.xlu0 %2118
    %v2120 = vsel %vm342, %v1774, 0.0
    %2121 = vadd.xlane.f32.xlu0 %v2120
    %v2122 = vpop.xlane.xlu0 %2121
    %v2123 = vsel %vm342, %v1776, 0.0
    %2124 = vadd.xlane.f32.xlu0 %v2123
    %v2125 = vpop.xlane.xlu0 %2124
    %v2126 = vsel %vm342, %v1778, 0.0
    %2127 = vadd.xlane.f32.xlu0 %v2126
    %v2128 = vpop.xlane.xlu0 %2127
    %v2129 = vsel %vm342, %v1780, 0.0
    %2130 = vadd.xlane.f32.xlu0 %v2129
    %v2131 = vpop.xlane.xlu0 %2130
    %v2132 = vsel %vm342, %v1782, 0.0
    %2133 = vadd.xlane.f32.xlu0 %v2132
    %v2134 = vpop.xlane.xlu0 %2133
    %v2135 = vsel %vm342, %v1784, 0.0
    %2136 = vadd.xlane.f32.xlu0 %v2135
    %v2137 = vpop.xlane.xlu0 %2136
    %v2138 = vsel %vm342, %v1786, 0.0
    %2139 = vadd.xlane.f32.xlu0 %v2138
    %v2140 = vpop.xlane.xlu0 %2139
    %v2141 = vsel %vm342, %v1788, 0.0
    %2142 = vadd.xlane.f32.xlu0 %v2141
    %v2143 = vpop.xlane.xlu0 %2142
    %v2144 = vsel %vm342, %v1790, 0.0
    %2145 = vadd.xlane.f32.xlu0 %v2144
    %v2146 = vpop.xlane.xlu0 %2145
    %v2147 = vsel %vm342, %v1792, 0.0
    %2148 = vadd.xlane.f32.xlu0 %v2147
    %v2149 = vpop.xlane.xlu0 %2148
    %v2150 = vsel %vm342, %v1794, 0.0
    %2151 = vadd.xlane.f32.xlu0 %v2150
    %v2152 = vpop.xlane.xlu0 %2151
    %v2153 = vsel %vm342, %v1796, 0.0
    %2154 = vadd.xlane.f32.xlu0 %v2153
    %v2155 = vpop.xlane.xlu0 %2154
    %v2156 = vsel %vm342, %v1798, 0.0
    %2157 = vadd.xlane.f32.xlu0 %v2156
    %v2158 = vpop.xlane.xlu0 %2157
    %v2159 = vsel %vm342, %v1800, 0.0
    %2160 = vadd.xlane.f32.xlu0 %v2159
    %v2161 = vpop.xlane.xlu0 %2160
    %v2162 = vsel %vm342, %v1802, 0.0
    %2163 = vadd.xlane.f32.xlu0 %v2162
    %v2164 = vpop.xlane.xlu0 %2163
    %v2165 = vsel %vm342, %v1804, 0.0
    %2166 = vadd.xlane.f32.xlu0 %v2165
    %v2167 = vpop.xlane.xlu0 %2166
    %v2168 = vsel %vm342, %v1806, 0.0
    %2169 = vadd.xlane.f32.xlu0 %v2168
    %v2170 = vpop.xlane.xlu0 %2169
    %v2171 = vsel %vm342, %v1808, 0.0
    %2172 = vadd.xlane.f32.xlu0 %v2171
    %v2173 = vpop.xlane.xlu0 %2172
    %v2174 = vsel %vm342, %v1810, 0.0
    %2175 = vadd.xlane.f32.xlu0 %v2174
    %v2176 = vpop.xlane.xlu0 %2175
    %v2177 = vsel %vm342, %v1812, 0.0
    %2178 = vadd.xlane.f32.xlu0 %v2177
    %v2179 = vpop.xlane.xlu0 %2178
    %v2180 = vsel %vm342, %v1814, 0.0
    %2181 = vadd.xlane.f32.xlu0 %v2180
    %v2182 = vpop.xlane.xlu0 %2181
    %v2183 = vsel %vm342, %v1816, 0.0
    %2184 = vadd.xlane.f32.xlu0 %v2183
    %v2185 = vpop.xlane.xlu0 %2184
    %v2186 = vsel %vm342, %v1818, 0.0
    %2187 = vadd.xlane.f32.xlu0 %v2186
    %v2188 = vpop.xlane.xlu0 %2187
    %v2189 = vsel %vm342, %v1820, 0.0
    %2190 = vadd.xlane.f32.xlu0 %v2189
    %v2191 = vpop.xlane.xlu0 %2190
    %v2192 = vsel %vm342, %v1822, 0.0
    %2193 = vadd.xlane.f32.xlu0 %v2192
    %v2194 = vpop.xlane.xlu0 %2193
    %v2195 = vsel %vm342, %v1824, 0.0
    %2196 = vadd.xlane.f32.xlu0 %v2195
    %v2197 = vpop.xlane.xlu0 %2196
    %v2198 = vsel %vm342, %v1826, 0.0
    %2199 = vadd.xlane.f32.xlu0 %v2198
    %v2200 = vpop.xlane.xlu0 %2199
    %v2201 = vsel %vm342, %v1828, 0.0
    %2202 = vadd.xlane.f32.xlu0 %v2201
    %v2203 = vpop.xlane.xlu0 %2202
    %v2204 = vsel %vm342, %v1830, 0.0
    %2205 = vadd.xlane.f32.xlu0 %v2204
    %v2206 = vpop.xlane.xlu0 %2205
    %v2207 = vsel %vm342, %v1832, 0.0
    %2208 = vadd.xlane.f32.xlu0 %v2207
    %v2209 = vpop.xlane.xlu0 %2208
    %v2210 = vsel %vm342, %v1834, 0.0
    %2211 = vadd.xlane.f32.xlu0 %v2210
    %v2212 = vpop.xlane.xlu0 %2211
    %v2213 = vsel %vm342, %v1836, 0.0
    %2214 = vadd.xlane.f32.xlu0 %v2213
    %v2215 = vpop.xlane.xlu0 %2214
    %v2216 = vsel %vm342, %v1838, 0.0
    %2217 = vadd.xlane.f32.xlu0 %v2216
    %v2218 = vpop.xlane.xlu0 %2217
    %v2219 = vsel %vm342, %v1840, 0.0
    %2220 = vadd.xlane.f32.xlu0 %v2219
    %v2221 = vpop.xlane.xlu0 %2220
    %v2222 = vsel %vm342, %v1842, 0.0
    %2223 = vadd.xlane.f32.xlu0 %v2222
    %v2224 = vpop.xlane.xlu0 %2223
    %v2225 = vsel %vm342, %v1844, 0.0
    %2226 = vadd.xlane.f32.xlu0 %v2225
    %v2227 = vpop.xlane.xlu0 %2226
    %v2228 = vsel %vm342, %v1846, 0.0
    %2229 = vadd.xlane.f32.xlu0 %v2228
    %v2230 = vpop.xlane.xlu0 %2229
    %v2231 = vrcp.pop 49.0
    %v2232 = vmul.f32 49.0, %v2231
    %v2233 = vsub.f32 1.0, %v2232
    %v2234 = vmul.f32 %v2231, %v2233
    %v2235 = vadd.f32 %v2231, %v2234
    %vm2236 = vweird.f32 %v2231
    %v2237 = vsel %vm2236, %v2231, %v2235
    %v2238 = vmul.f32 %v1849, %v2237
    %v2239 = vmul.f32 %v1852, %v2237
    %v2240 = vmul.f32 %v1855, %v2237
    %v2241 = vmul.f32 %v1858, %v2237
    %v2242 = vmul.f32 %v1861, %v2237
    %v2243 = vmul.f32 %v1864, %v2237
    %v2244 = vmul.f32 %v1867, %v2237
    %v2245 = vmul.f32 %v1870, %v2237
    %v2246 = vmul.f32 %v1873, %v2237
    %v2247 = vmul.f32 %v1876, %v2237
    %v2248 = vmul.f32 %v1879, %v2237
    %v2249 = vmul.f32 %v1882, %v2237
    %v2250 = vmul.f32 %v1885, %v2237
    %v2251 = vmul.f32 %v1888, %v2237
    %v2252 = vmul.f32 %v1891, %v2237
    %v2253 = vmul.f32 %v1894, %v2237
    %v2254 = vmul.f32 %v1897, %v2237
    %v2255 = vmul.f32 %v1900, %v2237
    %v2256 = vmul.f32 %v1903, %v2237
    %v2257 = vmul.f32 %v1906, %v2237
    %v2258 = vmul.f32 %v1909, %v2237
    %v2259 = vmul.f32 %v1912, %v2237
    %v2260 = vmul.f32 %v1915, %v2237
    %v2261 = vmul.f32 %v1918, %v2237
    %v2262 = vmul.f32 %v1921, %v2237
    %v2263 = vmul.f32 %v1924, %v2237
    %v2264 = vmul.f32 %v1927, %v2237
    %v2265 = vmul.f32 %v1930, %v2237
    %v2266 = vmul.f32 %v1933, %v2237
    %v2267 = vmul.f32 %v1936, %v2237
    %v2268 = vmul.f32 %v1939, %v2237
    %v2269 = vmul.f32 %v1942, %v2237
    %v2270 = vmul.f32 %v1945, %v2237
    %v2271 = vmul.f32 %v1948, %v2237
    %v2272 = vmul.f32 %v1951, %v2237
    %v2273 = vmul.f32 %v1954, %v2237
    %v2274 = vmul.f32 %v1957, %v2237
    %v2275 = vmul.f32 %v1960, %v2237
    %v2276 = vmul.f32 %v1963, %v2237
    %v2277 = vmul.f32 %v1966, %v2237
    %v2278 = vmul.f32 %v1969, %v2237
    %v2279 = vmul.f32 %v1972, %v2237
    %v2280 = vmul.f32 %v1975, %v2237
    %v2281 = vmul.f32 %v1978, %v2237
    %v2282 = vmul.f32 %v1981, %v2237
    %v2283 = vmul.f32 %v1984, %v2237
    %v2284 = vmul.f32 %v1987, %v2237
    %v2285 = vmul.f32 %v1990, %v2237
    %v2286 = vmul.f32 %v1993, %v2237
    %v2287 = vmul.f32 %v1996, %v2237
    %v2288 = vmul.f32 %v1999, %v2237
    %v2289 = vmul.f32 %v2002, %v2237
    %v2290 = vmul.f32 %v2005, %v2237
    %v2291 = vmul.f32 %v2008, %v2237
    %v2292 = vmul.f32 %v2011, %v2237
    %v2293 = vmul.f32 %v2014, %v2237
    %v2294 = vmul.f32 %v2017, %v2237
    %v2295 = vmul.f32 %v2020, %v2237
    %v2296 = vmul.f32 %v2023, %v2237
    %v2297 = vmul.f32 %v2026, %v2237
    %v2298 = vmul.f32 %v2029, %v2237
    %v2299 = vmul.f32 %v2032, %v2237
    %v2300 = vmul.f32 %v2035, %v2237
    %v2301 = vmul.f32 %v2038, %v2237
    %v2302 = vmul.f32 %v2041, %v2237
    %v2303 = vmul.f32 %v2044, %v2237
    %v2304 = vmul.f32 %v2047, %v2237
    %v2305 = vmul.f32 %v2050, %v2237
    %v2306 = vmul.f32 %v2053, %v2237
    %v2307 = vmul.f32 %v2056, %v2237
    %v2308 = vmul.f32 %v2059, %v2237
    %v2309 = vmul.f32 %v2062, %v2237
    %v2310 = vmul.f32 %v2065, %v2237
    %v2311 = vmul.f32 %v2068, %v2237
    %v2312 = vmul.f32 %v2071, %v2237
    %v2313 = vmul.f32 %v2074, %v2237
    %v2314 = vmul.f32 %v2077, %v2237
    %v2315 = vmul.f32 %v2080, %v2237
    %v2316 = vmul.f32 %v2083, %v2237
    %v2317 = vmul.f32 %v2086, %v2237
    %v2318 = vmul.f32 %v2089, %v2237
    %v2319 = vmul.f32 %v2092, %v2237
    %v2320 = vmul.f32 %v2095, %v2237
    %v2321 = vmul.f32 %v2098, %v2237
    %v2322 = vmul.f32 %v2101, %v2237
    %v2323 = vmul.f32 %v2104, %v2237
    %v2324 = vmul.f32 %v2107, %v2237
    %v2325 = vmul.f32 %v2110, %v2237
    %v2326 = vmul.f32 %v2113, %v2237
    %v2327 = vmul.f32 %v2116, %v2237
    %v2328 = vmul.f32 %v2119, %v2237
    %v2329 = vmul.f32 %v2122, %v2237
    %v2330 = vmul.f32 %v2125, %v2237
    %v2331 = vmul.f32 %v2128, %v2237
    %v2332 = vmul.f32 %v2131, %v2237
    %v2333 = vmul.f32 %v2134, %v2237
    %v2334 = vmul.f32 %v2137, %v2237
    %v2335 = vmul.f32 %v2140, %v2237
    %v2336 = vmul.f32 %v2143, %v2237
    %v2337 = vmul.f32 %v2146, %v2237
    %v2338 = vmul.f32 %v2149, %v2237
    %v2339 = vmul.f32 %v2152, %v2237
    %v2340 = vmul.f32 %v2155, %v2237
    %v2341 = vmul.f32 %v2158, %v2237
    %v2342 = vmul.f32 %v2161, %v2237
    %v2343 = vmul.f32 %v2164, %v2237
    %v2344 = vmul.f32 %v2167, %v2237
    %v2345 = vmul.f32 %v2170, %v2237
    %v2346 = vmul.f32 %v2173, %v2237
    %v2347 = vmul.f32 %v2176, %v2237
    %v2348 = vmul.f32 %v2179, %v2237
    %v2349 = vmul.f32 %v2182, %v2237
    %v2350 = vmul.f32 %v2185, %v2237
    %v2351 = vmul.f32 %v2188, %v2237
    %v2352 = vmul.f32 %v2191, %v2237
    %v2353 = vmul.f32 %v2194, %v2237
    %v2354 = vmul.f32 %v2197, %v2237
    %v2355 = vmul.f32 %v2200, %v2237
    %v2356 = vmul.f32 %v2203, %v2237
    %v2357 = vmul.f32 %v2206, %v2237
    %v2358 = vmul.f32 %v2209, %v2237
    %v2359 = vmul.f32 %v2212, %v2237
    %v2360 = vmul.f32 %v2215, %v2237
    %v2361 = vmul.f32 %v2218, %v2237
    %v2362 = vmul.f32 %v2221, %v2237
    %v2363 = vmul.f32 %v2224, %v2237
    %v2364 = vmul.f32 %v2227, %v2237
    %v2365 = vmul.f32 %v2230, %v2237
    %v2366 = vlog2.pop %v2238
    %v2367 = vmul.f32 %v2366, 0.6931472
    %v2368 = vlog2.pop %v2239
    %v2369 = vmul.f32 %v2368, 0.6931472
    %v2370 = vlog2.pop %v2240
    %v2371 = vmul.f32 %v2370, 0.6931472
    %v2372 = vlog2.pop %v2241
    %v2373 = vmul.f32 %v2372, 0.6931472
    %v2374 = vlog2.pop %v2242
    %v2375 = vmul.f32 %v2374, 0.6931472
    %v2376 = vlog2.pop %v2243
    %v2377 = vmul.f32 %v2376, 0.6931472
    %v2378 = vlog2.pop %v2244
    %v2379 = vmul.f32 %v2378, 0.6931472
    %v2380 = vlog2.pop %v2245
    %v2381 = vmul.f32 %v2380, 0.6931472
    %v2382 = vlog2.pop %v2246
    %v2383 = vmul.f32 %v2382, 0.6931472
    %v2384 = vlog2.pop %v2247
    %v2385 = vmul.f32 %v2384, 0.6931472
    %v2386 = vlog2.pop %v2248
    %v2387 = vmul.f32 %v2386, 0.6931472
    %v2388 = vlog2.pop %v2249
    %v2389 = vmul.f32 %v2388, 0.6931472
    %v2390 = vlog2.pop %v2250
    %v2391 = vmul.f32 %v2390, 0.6931472
    %v2392 = vlog2.pop %v2251
    %v2393 = vmul.f32 %v2392, 0.6931472
    %v2394 = vlog2.pop %v2252
    %v2395 = vmul.f32 %v2394, 0.6931472
    %v2396 = vlog2.pop %v2253
    %v2397 = vmul.f32 %v2396, 0.6931472
    %v2398 = vlog2.pop %v2254
    %v2399 = vmul.f32 %v2398, 0.6931472
    %v2400 = vlog2.pop %v2255
    %v2401 = vmul.f32 %v2400, 0.6931472
    %v2402 = vlog2.pop %v2256
    %v2403 = vmul.f32 %v2402, 0.6931472
    %v2404 = vlog2.pop %v2257
    %v2405 = vmul.f32 %v2404, 0.6931472
    %v2406 = vlog2.pop %v2258
    %v2407 = vmul.f32 %v2406, 0.6931472
    %v2408 = vlog2.pop %v2259
    %v2409 = vmul.f32 %v2408, 0.6931472
    %v2410 = vlog2.pop %v2260
    %v2411 = vmul.f32 %v2410, 0.6931472
    %v2412 = vlog2.pop %v2261
    %v2413 = vmul.f32 %v2412, 0.6931472
    %v2414 = vlog2.pop %v2262
    %v2415 = vmul.f32 %v2414, 0.6931472
    %v2416 = vlog2.pop %v2263
    %v2417 = vmul.f32 %v2416, 0.6931472
    %v2418 = vlog2.pop %v2264
    %v2419 = vmul.f32 %v2418, 0.6931472
    %v2420 = vlog2.pop %v2265
    %v2421 = vmul.f32 %v2420, 0.6931472
    %v2422 = vlog2.pop %v2266
    %v2423 = vmul.f32 %v2422, 0.6931472
    %v2424 = vlog2.pop %v2267
    %v2425 = vmul.f32 %v2424, 0.6931472
    %v2426 = vlog2.pop %v2268
    %v2427 = vmul.f32 %v2426, 0.6931472
    %v2428 = vlog2.pop %v2269
    %v2429 = vmul.f32 %v2428, 0.6931472
    %v2430 = vlog2.pop %v2270
    %v2431 = vmul.f32 %v2430, 0.6931472
    %v2432 = vlog2.pop %v2271
    %v2433 = vmul.f32 %v2432, 0.6931472
    %v2434 = vlog2.pop %v2272
    %v2435 = vmul.f32 %v2434, 0.6931472
    %v2436 = vlog2.pop %v2273
    %v2437 = vmul.f32 %v2436, 0.6931472
    %v2438 = vlog2.pop %v2274
    %v2439 = vmul.f32 %v2438, 0.6931472
    %v2440 = vlog2.pop %v2275
    %v2441 = vmul.f32 %v2440, 0.6931472
    %v2442 = vlog2.pop %v2276
    %v2443 = vmul.f32 %v2442, 0.6931472
    %v2444 = vlog2.pop %v2277
    %v2445 = vmul.f32 %v2444, 0.6931472
    %v2446 = vlog2.pop %v2278
    %v2447 = vmul.f32 %v2446, 0.6931472
    %v2448 = vlog2.pop %v2279
    %v2449 = vmul.f32 %v2448, 0.6931472
    %v2450 = vlog2.pop %v2280
    %v2451 = vmul.f32 %v2450, 0.6931472
    %v2452 = vlog2.pop %v2281
    %v2453 = vmul.f32 %v2452, 0.6931472
    %v2454 = vlog2.pop %v2282
    %v2455 = vmul.f32 %v2454, 0.6931472
    %v2456 = vlog2.pop %v2283
    %v2457 = vmul.f32 %v2456, 0.6931472
    %v2458 = vlog2.pop %v2284
    %v2459 = vmul.f32 %v2458, 0.6931472
    %v2460 = vlog2.pop %v2285
    %v2461 = vmul.f32 %v2460, 0.6931472
    %v2462 = vlog2.pop %v2286
    %v2463 = vmul.f32 %v2462, 0.6931472
    %v2464 = vlog2.pop %v2287
    %v2465 = vmul.f32 %v2464, 0.6931472
    %v2466 = vlog2.pop %v2288
    %v2467 = vmul.f32 %v2466, 0.6931472
    %v2468 = vlog2.pop %v2289
    %v2469 = vmul.f32 %v2468, 0.6931472
    %v2470 = vlog2.pop %v2290
    %v2471 = vmul.f32 %v2470, 0.6931472
    %v2472 = vlog2.pop %v2291
    %v2473 = vmul.f32 %v2472, 0.6931472
    %v2474 = vlog2.pop %v2292
    %v2475 = vmul.f32 %v2474, 0.6931472
    %v2476 = vlog2.pop %v2293
    %v2477 = vmul.f32 %v2476, 0.6931472
    %v2478 = vlog2.pop %v2294
    %v2479 = vmul.f32 %v2478, 0.6931472
    %v2480 = vlog2.pop %v2295
    %v2481 = vmul.f32 %v2480, 0.6931472
    %v2482 = vlog2.pop %v2296
    %v2483 = vmul.f32 %v2482, 0.6931472
    %v2484 = vlog2.pop %v2297
    %v2485 = vmul.f32 %v2484, 0.6931472
    %v2486 = vlog2.pop %v2298
    %v2487 = vmul.f32 %v2486, 0.6931472
    %v2488 = vlog2.pop %v2299
    %v2489 = vmul.f32 %v2488, 0.6931472
    %v2490 = vlog2.pop %v2300
    %v2491 = vmul.f32 %v2490, 0.6931472
    %v2492 = vlog2.pop %v2301
    %v2493 = vmul.f32 %v2492, 0.6931472
    %v2494 = vlog2.pop %v2302
    %v2495 = vmul.f32 %v2494, 0.6931472
    %v2496 = vlog2.pop %v2303
    %v2497 = vmul.f32 %v2496, 0.6931472
    %v2498 = vlog2.pop %v2304
    %v2499 = vmul.f32 %v2498, 0.6931472
    %v2500 = vlog2.pop %v2305
    %v2501 = vmul.f32 %v2500, 0.6931472
    %v2502 = vlog2.pop %v2306
    %v2503 = vmul.f32 %v2502, 0.6931472
    %v2504 = vlog2.pop %v2307
    %v2505 = vmul.f32 %v2504, 0.6931472
    %v2506 = vlog2.pop %v2308
    %v2507 = vmul.f32 %v2506, 0.6931472
    %v2508 = vlog2.pop %v2309
    %v2509 = vmul.f32 %v2508, 0.6931472
    %v2510 = vlog2.pop %v2310
    %v2511 = vmul.f32 %v2510, 0.6931472
    %v2512 = vlog2.pop %v2311
    %v2513 = vmul.f32 %v2512, 0.6931472
    %v2514 = vlog2.pop %v2312
    %v2515 = vmul.f32 %v2514, 0.6931472
    %v2516 = vlog2.pop %v2313
    %v2517 = vmul.f32 %v2516, 0.6931472
    %v2518 = vlog2.pop %v2314
    %v2519 = vmul.f32 %v2518, 0.6931472
    %v2520 = vlog2.pop %v2315
    %v2521 = vmul.f32 %v2520, 0.6931472
    %v2522 = vlog2.pop %v2316
    %v2523 = vmul.f32 %v2522, 0.6931472
    %v2524 = vlog2.pop %v2317
    %v2525 = vmul.f32 %v2524, 0.6931472
    %v2526 = vlog2.pop %v2318
    %v2527 = vmul.f32 %v2526, 0.6931472
    %v2528 = vlog2.pop %v2319
    %v2529 = vmul.f32 %v2528, 0.6931472
    %v2530 = vlog2.pop %v2320
    %v2531 = vmul.f32 %v2530, 0.6931472
    %v2532 = vlog2.pop %v2321
    %v2533 = vmul.f32 %v2532, 0.6931472
    %v2534 = vlog2.pop %v2322
    %v2535 = vmul.f32 %v2534, 0.6931472
    %v2536 = vlog2.pop %v2323
    %v2537 = vmul.f32 %v2536, 0.6931472
    %v2538 = vlog2.pop %v2324
    %v2539 = vmul.f32 %v2538, 0.6931472
    %v2540 = vlog2.pop %v2325
    %v2541 = vmul.f32 %v2540, 0.6931472
    %v2542 = vlog2.pop %v2326
    %v2543 = vmul.f32 %v2542, 0.6931472
    %v2544 = vlog2.pop %v2327
    %v2545 = vmul.f32 %v2544, 0.6931472
    %v2546 = vlog2.pop %v2328
    %v2547 = vmul.f32 %v2546, 0.6931472
    %v2548 = vlog2.pop %v2329
    %v2549 = vmul.f32 %v2548, 0.6931472
    %v2550 = vlog2.pop %v2330
    %v2551 = vmul.f32 %v2550, 0.6931472
    %v2552 = vlog2.pop %v2331
    %v2553 = vmul.f32 %v2552, 0.6931472
    %v2554 = vlog2.pop %v2332
    %v2555 = vmul.f32 %v2554, 0.6931472
    %v2556 = vlog2.pop %v2333
    %v2557 = vmul.f32 %v2556, 0.6931472
    %v2558 = vlog2.pop %v2334
    %v2559 = vmul.f32 %v2558, 0.6931472
    %v2560 = vlog2.pop %v2335
    %v2561 = vmul.f32 %v2560, 0.6931472
    %v2562 = vlog2.pop %v2336
    %v2563 = vmul.f32 %v2562, 0.6931472
    %v2564 = vlog2.pop %v2337
    %v2565 = vmul.f32 %v2564, 0.6931472
    %v2566 = vlog2.pop %v2338
    %v2567 = vmul.f32 %v2566, 0.6931472
    %v2568 = vlog2.pop %v2339
    %v2569 = vmul.f32 %v2568, 0.6931472
    %v2570 = vlog2.pop %v2340
    %v2571 = vmul.f32 %v2570, 0.6931472
    %v2572 = vlog2.pop %v2341
    %v2573 = vmul.f32 %v2572, 0.6931472
    %v2574 = vlog2.pop %v2342
    %v2575 = vmul.f32 %v2574, 0.6931472
    %v2576 = vlog2.pop %v2343
    %v2577 = vmul.f32 %v2576, 0.6931472
    %v2578 = vlog2.pop %v2344
    %v2579 = vmul.f32 %v2578, 0.6931472
    %v2580 = vlog2.pop %v2345
    %v2581 = vmul.f32 %v2580, 0.6931472
    %v2582 = vlog2.pop %v2346
    %v2583 = vmul.f32 %v2582, 0.6931472
    %v2584 = vlog2.pop %v2347
    %v2585 = vmul.f32 %v2584, 0.6931472
    %v2586 = vlog2.pop %v2348
    %v2587 = vmul.f32 %v2586, 0.6931472
    %v2588 = vlog2.pop %v2349
    %v2589 = vmul.f32 %v2588, 0.6931472
    %v2590 = vlog2.pop %v2350
    %v2591 = vmul.f32 %v2590, 0.6931472
    %v2592 = vlog2.pop %v2351
    %v2593 = vmul.f32 %v2592, 0.6931472
    %v2594 = vlog2.pop %v2352
    %v2595 = vmul.f32 %v2594, 0.6931472
    %v2596 = vlog2.pop %v2353
    %v2597 = vmul.f32 %v2596, 0.6931472
    %v2598 = vlog2.pop %v2354
    %v2599 = vmul.f32 %v2598, 0.6931472
    %v2600 = vlog2.pop %v2355
    %v2601 = vmul.f32 %v2600, 0.6931472
    %v2602 = vlog2.pop %v2356
    %v2603 = vmul.f32 %v2602, 0.6931472
    %v2604 = vlog2.pop %v2357
    %v2605 = vmul.f32 %v2604, 0.6931472
    %v2606 = vlog2.pop %v2358
    %v2607 = vmul.f32 %v2606, 0.6931472
    %v2608 = vlog2.pop %v2359
    %v2609 = vmul.f32 %v2608, 0.6931472
    %v2610 = vlog2.pop %v2360
    %v2611 = vmul.f32 %v2610, 0.6931472
    %v2612 = vlog2.pop %v2361
    %v2613 = vmul.f32 %v2612, 0.6931472
    %v2614 = vlog2.pop %v2362
    %v2615 = vmul.f32 %v2614, 0.6931472
    %v2616 = vlog2.pop %v2363
    %v2617 = vmul.f32 %v2616, 0.6931472
    %v2618 = vlog2.pop %v2364
    %v2619 = vmul.f32 %v2618, 0.6931472
    %v2620 = vlog2.pop %v2365
    %v2621 = vmul.f32 %v2620, 0.6931472
    %v2623 = vperm.slane %v85, 0
    %v2624 = vperm.slane %v85, 1
    %v2625 = vperm.slane %v85, 2
    %v2626 = vperm.slane %v85, 3
    %v2627 = vlaneseq
    %v2628 = vshrl.u32 %v2627, 7
    %2630 = vset.pattern.permute.xlu0 %v2628
    %2631 = vperm.xlu0 %2630, %v2623
    %v2632 = vpop.permute.xlu0 %2631
    %v2633 = vlaneseq
    %v2634 = vshrl.u32 %v2633, 7
    %v2635 = vadd.s32 %v2634, 8
    %2636 = vset.pattern.permute.xlu0 %v2635
    %2637 = vperm.xlu0 %2636, %v2623
    %v2638 = vpop.permute.xlu0 %2637
    %v2639 = vlaneseq
    %v2640 = vshrl.u32 %v2639, 7
    %v2641 = vadd.s32 %v2640, 16
    %2642 = vset.pattern.permute.xlu0 %v2641
    %2643 = vperm.xlu0 %2642, %v2623
    %v2644 = vpop.permute.xlu0 %2643
    %v2645 = vlaneseq
    %v2646 = vshrl.u32 %v2645, 7
    %v2647 = vadd.s32 %v2646, 24
    %2648 = vset.pattern.permute.xlu0 %v2647
    %2649 = vperm.xlu0 %2648, %v2623
    %v2650 = vpop.permute.xlu0 %2649
    %v2651 = vlaneseq
    %v2652 = vshrl.u32 %v2651, 7
    %v2653 = vadd.s32 %v2652, 32
    %2654 = vset.pattern.permute.xlu0 %v2653
    %2655 = vperm.xlu0 %2654, %v2623
    %v2656 = vpop.permute.xlu0 %2655
    %v2657 = vlaneseq
    %v2658 = vshrl.u32 %v2657, 7
    %v2659 = vadd.s32 %v2658, 40
    %2660 = vset.pattern.permute.xlu0 %v2659
    %2661 = vperm.xlu0 %2660, %v2623
    %v2662 = vpop.permute.xlu0 %2661
    %v2663 = vlaneseq
    %v2664 = vshrl.u32 %v2663, 7
    %v2665 = vadd.s32 %v2664, 48
    %2666 = vset.pattern.permute.xlu0 %v2665
    %2667 = vperm.xlu0 %2666, %v2623
    %v2668 = vpop.permute.xlu0 %2667
    %v2669 = vlaneseq
    %v2670 = vshrl.u32 %v2669, 7
    %v2671 = vadd.s32 %v2670, 56
    %2672 = vset.pattern.permute.xlu0 %v2671
    %2673 = vperm.xlu0 %2672, %v2623
    %v2674 = vpop.permute.xlu0 %2673
    %v2675 = vlaneseq
    %v2676 = vshrl.u32 %v2675, 7
    %v2677 = vadd.s32 %v2676, 64
    %2678 = vset.pattern.permute.xlu0 %v2677
    %2679 = vperm.xlu0 %2678, %v2623
    %v2680 = vpop.permute.xlu0 %2679
    %v2681 = vlaneseq
    %v2682 = vshrl.u32 %v2681, 7
    %v2683 = vadd.s32 %v2682, 72
    %2684 = vset.pattern.permute.xlu0 %v2683
    %2685 = vperm.xlu0 %2684, %v2623
    %v2686 = vpop.permute.xlu0 %2685
    %v2687 = vlaneseq
    %v2688 = vshrl.u32 %v2687, 7
    %v2689 = vadd.s32 %v2688, 80
    %2690 = vset.pattern.permute.xlu0 %v2689
    %2691 = vperm.xlu0 %2690, %v2623
    %v2692 = vpop.permute.xlu0 %2691
    %v2693 = vlaneseq
    %v2694 = vshrl.u32 %v2693, 7
    %v2695 = vadd.s32 %v2694, 88
    %2696 = vset.pattern.permute.xlu0 %v2695
    %2697 = vperm.xlu0 %2696, %v2623
    %v2698 = vpop.permute.xlu0 %2697
    %v2699 = vlaneseq
    %v2700 = vshrl.u32 %v2699, 7
    %v2701 = vadd.s32 %v2700, 96
    %2702 = vset.pattern.permute.xlu0 %v2701
    %2703 = vperm.xlu0 %2702, %v2623
    %v2704 = vpop.permute.xlu0 %2703
    %v2705 = vlaneseq
    %v2706 = vshrl.u32 %v2705, 7
    %v2707 = vadd.s32 %v2706, 104
    %2708 = vset.pattern.permute.xlu0 %v2707
    %2709 = vperm.xlu0 %2708, %v2623
    %v2710 = vpop.permute.xlu0 %2709
    %v2711 = vlaneseq
    %v2712 = vshrl.u32 %v2711, 7
    %v2713 = vadd.s32 %v2712, 112
    %2714 = vset.pattern.permute.xlu0 %v2713
    %2715 = vperm.xlu0 %2714, %v2623
    %v2716 = vpop.permute.xlu0 %2715
    %v2717 = vlaneseq
    %v2718 = vshrl.u32 %v2717, 7
    %v2719 = vadd.s32 %v2718, 120
    %2720 = vset.pattern.permute.xlu0 %v2719
    %2721 = vperm.xlu0 %2720, %v2623
    %v2722 = vpop.permute.xlu0 %2721
    %v2723 = vlaneseq
    %v2724 = vshrl.u32 %v2723, 7
    %2726 = vset.pattern.permute.xlu0 %v2724
    %2727 = vperm.xlu0 %2726, %v2624
    %v2728 = vpop.permute.xlu0 %2727
    %v2729 = vlaneseq
    %v2730 = vshrl.u32 %v2729, 7
    %v2731 = vadd.s32 %v2730, 8
    %2732 = vset.pattern.permute.xlu0 %v2731
    %2733 = vperm.xlu0 %2732, %v2624
    %v2734 = vpop.permute.xlu0 %2733
    %v2735 = vlaneseq
    %v2736 = vshrl.u32 %v2735, 7
    %v2737 = vadd.s32 %v2736, 16
    %2738 = vset.pattern.permute.xlu0 %v2737
    %2739 = vperm.xlu0 %2738, %v2624
    %v2740 = vpop.permute.xlu0 %2739
    %v2741 = vlaneseq
    %v2742 = vshrl.u32 %v2741, 7
    %v2743 = vadd.s32 %v2742, 24
    %2744 = vset.pattern.permute.xlu0 %v2743
    %2745 = vperm.xlu0 %2744, %v2624
    %v2746 = vpop.permute.xlu0 %2745
    %v2747 = vlaneseq
    %v2748 = vshrl.u32 %v2747, 7
    %v2749 = vadd.s32 %v2748, 32
    %2750 = vset.pattern.permute.xlu0 %v2749
    %2751 = vperm.xlu0 %2750, %v2624
    %v2752 = vpop.permute.xlu0 %2751
    %v2753 = vlaneseq
    %v2754 = vshrl.u32 %v2753, 7
    %v2755 = vadd.s32 %v2754, 40
    %2756 = vset.pattern.permute.xlu0 %v2755
    %2757 = vperm.xlu0 %2756, %v2624
    %v2758 = vpop.permute.xlu0 %2757
    %v2759 = vlaneseq
    %v2760 = vshrl.u32 %v2759, 7
    %v2761 = vadd.s32 %v2760, 48
    %2762 = vset.pattern.permute.xlu0 %v2761
    %2763 = vperm.xlu0 %2762, %v2624
    %v2764 = vpop.permute.xlu0 %2763
    %v2765 = vlaneseq
    %v2766 = vshrl.u32 %v2765, 7
    %v2767 = vadd.s32 %v2766, 56
    %2768 = vset.pattern.permute.xlu0 %v2767
    %2769 = vperm.xlu0 %2768, %v2624
    %v2770 = vpop.permute.xlu0 %2769
    %v2771 = vlaneseq
    %v2772 = vshrl.u32 %v2771, 7
    %v2773 = vadd.s32 %v2772, 64
    %2774 = vset.pattern.permute.xlu0 %v2773
    %2775 = vperm.xlu0 %2774, %v2624
    %v2776 = vpop.permute.xlu0 %2775
    %v2777 = vlaneseq
    %v2778 = vshrl.u32 %v2777, 7
    %v2779 = vadd.s32 %v2778, 72
    %2780 = vset.pattern.permute.xlu0 %v2779
    %2781 = vperm.xlu0 %2780, %v2624
    %v2782 = vpop.permute.xlu0 %2781
    %v2783 = vlaneseq
    %v2784 = vshrl.u32 %v2783, 7
    %v2785 = vadd.s32 %v2784, 80
    %2786 = vset.pattern.permute.xlu0 %v2785
    %2787 = vperm.xlu0 %2786, %v2624
    %v2788 = vpop.permute.xlu0 %2787
    %v2789 = vlaneseq
    %v2790 = vshrl.u32 %v2789, 7
    %v2791 = vadd.s32 %v2790, 88
    %2792 = vset.pattern.permute.xlu0 %v2791
    %2793 = vperm.xlu0 %2792, %v2624
    %v2794 = vpop.permute.xlu0 %2793
    %v2795 = vlaneseq
    %v2796 = vshrl.u32 %v2795, 7
    %v2797 = vadd.s32 %v2796, 96
    %2798 = vset.pattern.permute.xlu0 %v2797
    %2799 = vperm.xlu0 %2798, %v2624
    %v2800 = vpop.permute.xlu0 %2799
    %v2801 = vlaneseq
    %v2802 = vshrl.u32 %v2801, 7
    %v2803 = vadd.s32 %v2802, 104
    %2804 = vset.pattern.permute.xlu0 %v2803
    %2805 = vperm.xlu0 %2804, %v2624
    %v2806 = vpop.permute.xlu0 %2805
    %v2807 = vlaneseq
    %v2808 = vshrl.u32 %v2807, 7
    %v2809 = vadd.s32 %v2808, 112
    %2810 = vset.pattern.permute.xlu0 %v2809
    %2811 = vperm.xlu0 %2810, %v2624
    %v2812 = vpop.permute.xlu0 %2811
    %v2813 = vlaneseq
    %v2814 = vshrl.u32 %v2813, 7
    %v2815 = vadd.s32 %v2814, 120
    %2816 = vset.pattern.permute.xlu0 %v2815
    %2817 = vperm.xlu0 %2816, %v2624
    %v2818 = vpop.permute.xlu0 %2817
    %v2819 = vlaneseq
    %v2820 = vshrl.u32 %v2819, 7
    %2822 = vset.pattern.permute.xlu0 %v2820
    %2823 = vperm.xlu0 %2822, %v2625
    %v2824 = vpop.permute.xlu0 %2823
    %v2825 = vlaneseq
    %v2826 = vshrl.u32 %v2825, 7
    %v2827 = vadd.s32 %v2826, 8
    %2828 = vset.pattern.permute.xlu0 %v2827
    %2829 = vperm.xlu0 %2828, %v2625
    %v2830 = vpop.permute.xlu0 %2829
    %v2831 = vlaneseq
    %v2832 = vshrl.u32 %v2831, 7
    %v2833 = vadd.s32 %v2832, 16
    %2834 = vset.pattern.permute.xlu0 %v2833
    %2835 = vperm.xlu0 %2834, %v2625
    %v2836 = vpop.permute.xlu0 %2835
    %v2837 = vlaneseq
    %v2838 = vshrl.u32 %v2837, 7
    %v2839 = vadd.s32 %v2838, 24
    %2840 = vset.pattern.permute.xlu0 %v2839
    %2841 = vperm.xlu0 %2840, %v2625
    %v2842 = vpop.permute.xlu0 %2841
    %v2843 = vlaneseq
    %v2844 = vshrl.u32 %v2843, 7
    %v2845 = vadd.s32 %v2844, 32
    %2846 = vset.pattern.permute.xlu0 %v2845
    %2847 = vperm.xlu0 %2846, %v2625
    %v2848 = vpop.permute.xlu0 %2847
    %v2849 = vlaneseq
    %v2850 = vshrl.u32 %v2849, 7
    %v2851 = vadd.s32 %v2850, 40
    %2852 = vset.pattern.permute.xlu0 %v2851
    %2853 = vperm.xlu0 %2852, %v2625
    %v2854 = vpop.permute.xlu0 %2853
    %v2855 = vlaneseq
    %v2856 = vshrl.u32 %v2855, 7
    %v2857 = vadd.s32 %v2856, 48
    %2858 = vset.pattern.permute.xlu0 %v2857
    %2859 = vperm.xlu0 %2858, %v2625
    %v2860 = vpop.permute.xlu0 %2859
    %v2861 = vlaneseq
    %v2862 = vshrl.u32 %v2861, 7
    %v2863 = vadd.s32 %v2862, 56
    %2864 = vset.pattern.permute.xlu0 %v2863
    %2865 = vperm.xlu0 %2864, %v2625
    %v2866 = vpop.permute.xlu0 %2865
    %v2867 = vlaneseq
    %v2868 = vshrl.u32 %v2867, 7
    %v2869 = vadd.s32 %v2868, 64
    %2870 = vset.pattern.permute.xlu0 %v2869
    %2871 = vperm.xlu0 %2870, %v2625
    %v2872 = vpop.permute.xlu0 %2871
    %v2873 = vlaneseq
    %v2874 = vshrl.u32 %v2873, 7
    %v2875 = vadd.s32 %v2874, 72
    %2876 = vset.pattern.permute.xlu0 %v2875
    %2877 = vperm.xlu0 %2876, %v2625
    %v2878 = vpop.permute.xlu0 %2877
    %v2879 = vlaneseq
    %v2880 = vshrl.u32 %v2879, 7
    %v2881 = vadd.s32 %v2880, 80
    %2882 = vset.pattern.permute.xlu0 %v2881
    %2883 = vperm.xlu0 %2882, %v2625
    %v2884 = vpop.permute.xlu0 %2883
    %v2885 = vlaneseq
    %v2886 = vshrl.u32 %v2885, 7
    %v2887 = vadd.s32 %v2886, 88
    %2888 = vset.pattern.permute.xlu0 %v2887
    %2889 = vperm.xlu0 %2888, %v2625
    %v2890 = vpop.permute.xlu0 %2889
    %v2891 = vlaneseq
    %v2892 = vshrl.u32 %v2891, 7
    %v2893 = vadd.s32 %v2892, 96
    %2894 = vset.pattern.permute.xlu0 %v2893
    %2895 = vperm.xlu0 %2894, %v2625
    %v2896 = vpop.permute.xlu0 %2895
    %v2897 = vlaneseq
    %v2898 = vshrl.u32 %v2897, 7
    %v2899 = vadd.s32 %v2898, 104
    %2900 = vset.pattern.permute.xlu0 %v2899
    %2901 = vperm.xlu0 %2900, %v2625
    %v2902 = vpop.permute.xlu0 %2901
    %v2903 = vlaneseq
    %v2904 = vshrl.u32 %v2903, 7
    %v2905 = vadd.s32 %v2904, 112
    %2906 = vset.pattern.permute.xlu0 %v2905
    %2907 = vperm.xlu0 %2906, %v2625
    %v2908 = vpop.permute.xlu0 %2907
    %v2909 = vlaneseq
    %v2910 = vshrl.u32 %v2909, 7
    %v2911 = vadd.s32 %v2910, 120
    %2912 = vset.pattern.permute.xlu0 %v2911
    %2913 = vperm.xlu0 %2912, %v2625
    %v2914 = vpop.permute.xlu0 %2913
    %v2915 = vlaneseq
    %v2916 = vshrl.u32 %v2915, 7
    %2918 = vset.pattern.permute.xlu0 %v2916
    %2919 = vperm.xlu0 %2918, %v2626
    %v2920 = vpop.permute.xlu0 %2919
    %v2921 = vlaneseq
    %v2922 = vshrl.u32 %v2921, 7
    %v2923 = vadd.s32 %v2922, 8
    %2924 = vset.pattern.permute.xlu0 %v2923
    %2925 = vperm.xlu0 %2924, %v2626
    %v2926 = vpop.permute.xlu0 %2925
    %v2927 = vlaneseq
    %v2928 = vshrl.u32 %v2927, 7
    %v2929 = vadd.s32 %v2928, 16
    %2930 = vset.pattern.permute.xlu0 %v2929
    %2931 = vperm.xlu0 %2930, %v2626
    %v2932 = vpop.permute.xlu0 %2931
    %v2933 = vlaneseq
    %v2934 = vshrl.u32 %v2933, 7
    %v2935 = vadd.s32 %v2934, 24
    %2936 = vset.pattern.permute.xlu0 %v2935
    %2937 = vperm.xlu0 %2936, %v2626
    %v2938 = vpop.permute.xlu0 %2937
    %v2939 = vlaneseq
    %v2940 = vshrl.u32 %v2939, 7
    %v2941 = vadd.s32 %v2940, 32
    %2942 = vset.pattern.permute.xlu0 %v2941
    %2943 = vperm.xlu0 %2942, %v2626
    %v2944 = vpop.permute.xlu0 %2943
    %v2945 = vlaneseq
    %v2946 = vshrl.u32 %v2945, 7
    %v2947 = vadd.s32 %v2946, 40
    %2948 = vset.pattern.permute.xlu0 %v2947
    %2949 = vperm.xlu0 %2948, %v2626
    %v2950 = vpop.permute.xlu0 %2949
    %v2951 = vlaneseq
    %v2952 = vshrl.u32 %v2951, 7
    %v2953 = vadd.s32 %v2952, 48
    %2954 = vset.pattern.permute.xlu0 %v2953
    %2955 = vperm.xlu0 %2954, %v2626
    %v2956 = vpop.permute.xlu0 %2955
    %v2957 = vlaneseq
    %v2958 = vshrl.u32 %v2957, 7
    %v2959 = vadd.s32 %v2958, 56
    %2960 = vset.pattern.permute.xlu0 %v2959
    %2961 = vperm.xlu0 %2960, %v2626
    %v2962 = vpop.permute.xlu0 %2961
    %v2963 = vlaneseq
    %v2964 = vshrl.u32 %v2963, 7
    %v2965 = vadd.s32 %v2964, 64
    %2966 = vset.pattern.permute.xlu0 %v2965
    %2967 = vperm.xlu0 %2966, %v2626
    %v2968 = vpop.permute.xlu0 %2967
    %v2969 = vlaneseq
    %v2970 = vshrl.u32 %v2969, 7
    %v2971 = vadd.s32 %v2970, 72
    %2972 = vset.pattern.permute.xlu0 %v2971
    %2973 = vperm.xlu0 %2972, %v2626
    %v2974 = vpop.permute.xlu0 %2973
    %v2975 = vlaneseq
    %v2976 = vshrl.u32 %v2975, 7
    %v2977 = vadd.s32 %v2976, 80
    %2978 = vset.pattern.permute.xlu0 %v2977
    %2979 = vperm.xlu0 %2978, %v2626
    %v2980 = vpop.permute.xlu0 %2979
    %v2981 = vlaneseq
    %v2982 = vshrl.u32 %v2981, 7
    %v2983 = vadd.s32 %v2982, 88
    %2984 = vset.pattern.permute.xlu0 %v2983
    %2985 = vperm.xlu0 %2984, %v2626
    %v2986 = vpop.permute.xlu0 %2985
    %v2987 = vlaneseq
    %v2988 = vshrl.u32 %v2987, 7
    %v2989 = vadd.s32 %v2988, 96
    %2990 = vset.pattern.permute.xlu0 %v2989
    %2991 = vperm.xlu0 %2990, %v2626
    %v2992 = vpop.permute.xlu0 %2991
    %v2993 = vlaneseq
    %v2994 = vshrl.u32 %v2993, 7
    %v2995 = vadd.s32 %v2994, 104
    %2996 = vset.pattern.permute.xlu0 %v2995
    %2997 = vperm.xlu0 %2996, %v2626
    %v2998 = vpop.permute.xlu0 %2997
    %v2999 = vlaneseq
    %v3000 = vshrl.u32 %v2999, 7
    %v3001 = vadd.s32 %v3000, 112
    %3002 = vset.pattern.permute.xlu0 %v3001
    %3003 = vperm.xlu0 %3002, %v2626
    %v3004 = vpop.permute.xlu0 %3003
    %v3005 = vlaneseq
    %v3006 = vshrl.u32 %v3005, 7
    %v3007 = vadd.s32 %v3006, 120
    %3008 = vset.pattern.permute.xlu0 %v3007
    %3009 = vperm.xlu0 %3008, %v2626
    %v3010 = vpop.permute.xlu0 %3009
    %v3075 = vrcp.pop %v2632
    %v3076 = vmul.f32 %v2632, %v3075
    %v3077 = vsub.f32 1.0, %v3076
    %v3078 = vmul.f32 %v3075, %v3077
    %v3079 = vadd.f32 %v3075, %v3078
    %vm3080 = vweird.f32 %v2632
    %vm3081 = vweird.f32 %v3075
    %vm3082 = vmor %vm3080, %vm3081
    %v3083 = vsel %vm3082, %v3075, %v3079
    %v3084 = vand.u32 2147483647, %v2632
    %vm3085 = vcmp.eq.f32.partialorder %v3084, 8.507059e+37
    %v3086 = vand.u32 %v2632, 2147483648
    %v3087 = vor.u32 1.1754944e-38, %v3086
    %v3088 = vsel %vm3085, %v3087, %v3083
    %v3089 = vmul.f32 %v2367, %v3088
    %v3090 = vrcp.pop %v2638
    %v3091 = vmul.f32 %v2638, %v3090
    %v3092 = vsub.f32 1.0, %v3091
    %v3093 = vmul.f32 %v3090, %v3092
    %v3094 = vadd.f32 %v3090, %v3093
    %vm3095 = vweird.f32 %v2638
    %vm3096 = vweird.f32 %v3090
    %vm3097 = vmor %vm3095, %vm3096
    %v3098 = vsel %vm3097, %v3090, %v3094
    %v3099 = vand.u32 2147483647, %v2638
    %vm3100 = vcmp.eq.f32.partialorder %v3099, 8.507059e+37
    %v3101 = vand.u32 %v2638, 2147483648
    %v3102 = vor.u32 1.1754944e-38, %v3101
    %v3103 = vsel %vm3100, %v3102, %v3098
    %v3104 = vmul.f32 %v2369, %v3103
    %v3105 = vrcp.pop %v2644
    %v3106 = vmul.f32 %v2644, %v3105
    %v3107 = vsub.f32 1.0, %v3106
    %v3108 = vmul.f32 %v3105, %v3107
    %v3109 = vadd.f32 %v3105, %v3108
    %vm3110 = vweird.f32 %v2644
    %vm3111 = vweird.f32 %v3105
    %vm3112 = vmor %vm3110, %vm3111
    %v3113 = vsel %vm3112, %v3105, %v3109
    %v3114 = vand.u32 2147483647, %v2644
    %vm3115 = vcmp.eq.f32.partialorder %v3114, 8.507059e+37
    %v3116 = vand.u32 %v2644, 2147483648
    %v3117 = vor.u32 1.1754944e-38, %v3116
    %v3118 = vsel %vm3115, %v3117, %v3113
    %v3119 = vmul.f32 %v2371, %v3118
    %v3120 = vrcp.pop %v2650
    %v3121 = vmul.f32 %v2650, %v3120
    %v3122 = vsub.f32 1.0, %v3121
    %v3123 = vmul.f32 %v3120, %v3122
    %v3124 = vadd.f32 %v3120, %v3123
    %vm3125 = vweird.f32 %v2650
    %vm3126 = vweird.f32 %v3120
    %vm3127 = vmor %vm3125, %vm3126
    %v3128 = vsel %vm3127, %v3120, %v3124
    %v3129 = vand.u32 2147483647, %v2650
    %vm3130 = vcmp.eq.f32.partialorder %v3129, 8.507059e+37
    %v3131 = vand.u32 %v2650, 2147483648
    %v3132 = vor.u32 1.1754944e-38, %v3131
    %v3133 = vsel %vm3130, %v3132, %v3128
    %v3134 = vmul.f32 %v2373, %v3133
    %v3135 = vrcp.pop %v2656
    %v3136 = vmul.f32 %v2656, %v3135
    %v3137 = vsub.f32 1.0, %v3136
    %v3138 = vmul.f32 %v3135, %v3137
    %v3139 = vadd.f32 %v3135, %v3138
    %vm3140 = vweird.f32 %v2656
    %vm3141 = vweird.f32 %v3135
    %vm3142 = vmor %vm3140, %vm3141
    %v3143 = vsel %vm3142, %v3135, %v3139
    %v3144 = vand.u32 2147483647, %v2656
    %vm3145 = vcmp.eq.f32.partialorder %v3144, 8.507059e+37
    %v3146 = vand.u32 %v2656, 2147483648
    %v3147 = vor.u32 1.1754944e-38, %v3146
    %v3148 = vsel %vm3145, %v3147, %v3143
    %v3149 = vmul.f32 %v2375, %v3148
    %v3150 = vrcp.pop %v2662
    %v3151 = vmul.f32 %v2662, %v3150
    %v3152 = vsub.f32 1.0, %v3151
    %v3153 = vmul.f32 %v3150, %v3152
    %v3154 = vadd.f32 %v3150, %v3153
    %vm3155 = vweird.f32 %v2662
    %vm3156 = vweird.f32 %v3150
    %vm3157 = vmor %vm3155, %vm3156
    %v3158 = vsel %vm3157, %v3150, %v3154
    %v3159 = vand.u32 2147483647, %v2662
    %vm3160 = vcmp.eq.f32.partialorder %v3159, 8.507059e+37
    %v3161 = vand.u32 %v2662, 2147483648
    %v3162 = vor.u32 1.1754944e-38, %v3161
    %v3163 = vsel %vm3160, %v3162, %v3158
    %v3164 = vmul.f32 %v2377, %v3163
    %v3165 = vrcp.pop %v2668
    %v3166 = vmul.f32 %v2668, %v3165
    %v3167 = vsub.f32 1.0, %v3166
    %v3168 = vmul.f32 %v3165, %v3167
    %v3169 = vadd.f32 %v3165, %v3168
    %vm3170 = vweird.f32 %v2668
    %vm3171 = vweird.f32 %v3165
    %vm3172 = vmor %vm3170, %vm3171
    %v3173 = vsel %vm3172, %v3165, %v3169
    %v3174 = vand.u32 2147483647, %v2668
    %vm3175 = vcmp.eq.f32.partialorder %v3174, 8.507059e+37
    %v3176 = vand.u32 %v2668, 2147483648
    %v3177 = vor.u32 1.1754944e-38, %v3176
    %v3178 = vsel %vm3175, %v3177, %v3173
    %v3179 = vmul.f32 %v2379, %v3178
    %v3180 = vrcp.pop %v2674
    %v3181 = vmul.f32 %v2674, %v3180
    %v3182 = vsub.f32 1.0, %v3181
    %v3183 = vmul.f32 %v3180, %v3182
    %v3184 = vadd.f32 %v3180, %v3183
    %vm3185 = vweird.f32 %v2674
    %vm3186 = vweird.f32 %v3180
    %vm3187 = vmor %vm3185, %vm3186
    %v3188 = vsel %vm3187, %v3180, %v3184
    %v3189 = vand.u32 2147483647, %v2674
    %vm3190 = vcmp.eq.f32.partialorder %v3189, 8.507059e+37
    %v3191 = vand.u32 %v2674, 2147483648
    %v3192 = vor.u32 1.1754944e-38, %v3191
    %v3193 = vsel %vm3190, %v3192, %v3188
    %v3194 = vmul.f32 %v2381, %v3193
    %v3195 = vrcp.pop %v2680
    %v3196 = vmul.f32 %v2680, %v3195
    %v3197 = vsub.f32 1.0, %v3196
    %v3198 = vmul.f32 %v3195, %v3197
    %v3199 = vadd.f32 %v3195, %v3198
    %vm3200 = vweird.f32 %v2680
    %vm3201 = vweird.f32 %v3195
    %vm3202 = vmor %vm3200, %vm3201
    %v3203 = vsel %vm3202, %v3195, %v3199
    %v3204 = vand.u32 2147483647, %v2680
    %vm3205 = vcmp.eq.f32.partialorder %v3204, 8.507059e+37
    %v3206 = vand.u32 %v2680, 2147483648
    %v3207 = vor.u32 1.1754944e-38, %v3206
    %v3208 = vsel %vm3205, %v3207, %v3203
    %v3209 = vmul.f32 %v2383, %v3208
    %v3210 = vrcp.pop %v2686
    %v3211 = vmul.f32 %v2686, %v3210
    %v3212 = vsub.f32 1.0, %v3211
    %v3213 = vmul.f32 %v3210, %v3212
    %v3214 = vadd.f32 %v3210, %v3213
    %vm3215 = vweird.f32 %v2686
    %vm3216 = vweird.f32 %v3210
    %vm3217 = vmor %vm3215, %vm3216
    %v3218 = vsel %vm3217, %v3210, %v3214
    %v3219 = vand.u32 2147483647, %v2686
    %vm3220 = vcmp.eq.f32.partialorder %v3219, 8.507059e+37
    %v3221 = vand.u32 %v2686, 2147483648
    %v3222 = vor.u32 1.1754944e-38, %v3221
    %v3223 = vsel %vm3220, %v3222, %v3218
    %v3224 = vmul.f32 %v2385, %v3223
    %v3225 = vrcp.pop %v2692
    %v3226 = vmul.f32 %v2692, %v3225
    %v3227 = vsub.f32 1.0, %v3226
    %v3228 = vmul.f32 %v3225, %v3227
    %v3229 = vadd.f32 %v3225, %v3228
    %vm3230 = vweird.f32 %v2692
    %vm3231 = vweird.f32 %v3225
    %vm3232 = vmor %vm3230, %vm3231
    %v3233 = vsel %vm3232, %v3225, %v3229
    %v3234 = vand.u32 2147483647, %v2692
    %vm3235 = vcmp.eq.f32.partialorder %v3234, 8.507059e+37
    %v3236 = vand.u32 %v2692, 2147483648
    %v3237 = vor.u32 1.1754944e-38, %v3236
    %v3238 = vsel %vm3235, %v3237, %v3233
    %v3239 = vmul.f32 %v2387, %v3238
    %v3240 = vrcp.pop %v2698
    %v3241 = vmul.f32 %v2698, %v3240
    %v3242 = vsub.f32 1.0, %v3241
    %v3243 = vmul.f32 %v3240, %v3242
    %v3244 = vadd.f32 %v3240, %v3243
    %vm3245 = vweird.f32 %v2698
    %vm3246 = vweird.f32 %v3240
    %vm3247 = vmor %vm3245, %vm3246
    %v3248 = vsel %vm3247, %v3240, %v3244
    %v3249 = vand.u32 2147483647, %v2698
    %vm3250 = vcmp.eq.f32.partialorder %v3249, 8.507059e+37
    %v3251 = vand.u32 %v2698, 2147483648
    %v3252 = vor.u32 1.1754944e-38, %v3251
    %v3253 = vsel %vm3250, %v3252, %v3248
    %v3254 = vmul.f32 %v2389, %v3253
    %v3255 = vrcp.pop %v2704
    %v3256 = vmul.f32 %v2704, %v3255
    %v3257 = vsub.f32 1.0, %v3256
    %v3258 = vmul.f32 %v3255, %v3257
    %v3259 = vadd.f32 %v3255, %v3258
    %vm3260 = vweird.f32 %v2704
    %vm3261 = vweird.f32 %v3255
    %vm3262 = vmor %vm3260, %vm3261
    %v3263 = vsel %vm3262, %v3255, %v3259
    %v3264 = vand.u32 2147483647, %v2704
    %vm3265 = vcmp.eq.f32.partialorder %v3264, 8.507059e+37
    %v3266 = vand.u32 %v2704, 2147483648
    %v3267 = vor.u32 1.1754944e-38, %v3266
    %v3268 = vsel %vm3265, %v3267, %v3263
    %v3269 = vmul.f32 %v2391, %v3268
    %v3270 = vrcp.pop %v2710
    %v3271 = vmul.f32 %v2710, %v3270
    %v3272 = vsub.f32 1.0, %v3271
    %v3273 = vmul.f32 %v3270, %v3272
    %v3274 = vadd.f32 %v3270, %v3273
    %vm3275 = vweird.f32 %v2710
    %vm3276 = vweird.f32 %v3270
    %vm3277 = vmor %vm3275, %vm3276
    %v3278 = vsel %vm3277, %v3270, %v3274
    %v3279 = vand.u32 2147483647, %v2710
    %vm3280 = vcmp.eq.f32.partialorder %v3279, 8.507059e+37
    %v3281 = vand.u32 %v2710, 2147483648
    %v3282 = vor.u32 1.1754944e-38, %v3281
    %v3283 = vsel %vm3280, %v3282, %v3278
    %v3284 = vmul.f32 %v2393, %v3283
    %v3285 = vrcp.pop %v2716
    %v3286 = vmul.f32 %v2716, %v3285
    %v3287 = vsub.f32 1.0, %v3286
    %v3288 = vmul.f32 %v3285, %v3287
    %v3289 = vadd.f32 %v3285, %v3288
    %vm3290 = vweird.f32 %v2716
    %vm3291 = vweird.f32 %v3285
    %vm3292 = vmor %vm3290, %vm3291
    %v3293 = vsel %vm3292, %v3285, %v3289
    %v3294 = vand.u32 2147483647, %v2716
    %vm3295 = vcmp.eq.f32.partialorder %v3294, 8.507059e+37
    %v3296 = vand.u32 %v2716, 2147483648
    %v3297 = vor.u32 1.1754944e-38, %v3296
    %v3298 = vsel %vm3295, %v3297, %v3293
    %v3299 = vmul.f32 %v2395, %v3298
    %v3300 = vrcp.pop %v2722
    %v3301 = vmul.f32 %v2722, %v3300
    %v3302 = vsub.f32 1.0, %v3301
    %v3303 = vmul.f32 %v3300, %v3302
    %v3304 = vadd.f32 %v3300, %v3303
    %vm3305 = vweird.f32 %v2722
    %vm3306 = vweird.f32 %v3300
    %vm3307 = vmor %vm3305, %vm3306
    %v3308 = vsel %vm3307, %v3300, %v3304
    %v3309 = vand.u32 2147483647, %v2722
    %vm3310 = vcmp.eq.f32.partialorder %v3309, 8.507059e+37
    %v3311 = vand.u32 %v2722, 2147483648
    %v3312 = vor.u32 1.1754944e-38, %v3311
    %v3313 = vsel %vm3310, %v3312, %v3308
    %v3314 = vmul.f32 %v2397, %v3313
    %v3315 = vrcp.pop %v2728
    %v3316 = vmul.f32 %v2728, %v3315
    %v3317 = vsub.f32 1.0, %v3316
    %v3318 = vmul.f32 %v3315, %v3317
    %v3319 = vadd.f32 %v3315, %v3318
    %vm3320 = vweird.f32 %v2728
    %vm3321 = vweird.f32 %v3315
    %vm3322 = vmor %vm3320, %vm3321
    %v3323 = vsel %vm3322, %v3315, %v3319
    %v3324 = vand.u32 2147483647, %v2728
    %vm3325 = vcmp.eq.f32.partialorder %v3324, 8.507059e+37
    %v3326 = vand.u32 %v2728, 2147483648
    %v3327 = vor.u32 1.1754944e-38, %v3326
    %v3328 = vsel %vm3325, %v3327, %v3323
    %v3329 = vmul.f32 %v2399, %v3328
    %v3330 = vrcp.pop %v2734
    %v3331 = vmul.f32 %v2734, %v3330
    %v3332 = vsub.f32 1.0, %v3331
    %v3333 = vmul.f32 %v3330, %v3332
    %v3334 = vadd.f32 %v3330, %v3333
    %vm3335 = vweird.f32 %v2734
    %vm3336 = vweird.f32 %v3330
    %vm3337 = vmor %vm3335, %vm3336
    %v3338 = vsel %vm3337, %v3330, %v3334
    %v3339 = vand.u32 2147483647, %v2734
    %vm3340 = vcmp.eq.f32.partialorder %v3339, 8.507059e+37
    %v3341 = vand.u32 %v2734, 2147483648
    %v3342 = vor.u32 1.1754944e-38, %v3341
    %v3343 = vsel %vm3340, %v3342, %v3338
    %v3344 = vmul.f32 %v2401, %v3343
    %v3345 = vrcp.pop %v2740
    %v3346 = vmul.f32 %v2740, %v3345
    %v3347 = vsub.f32 1.0, %v3346
    %v3348 = vmul.f32 %v3345, %v3347
    %v3349 = vadd.f32 %v3345, %v3348
    %vm3350 = vweird.f32 %v2740
    %vm3351 = vweird.f32 %v3345
    %vm3352 = vmor %vm3350, %vm3351
    %v3353 = vsel %vm3352, %v3345, %v3349
    %v3354 = vand.u32 2147483647, %v2740
    %vm3355 = vcmp.eq.f32.partialorder %v3354, 8.507059e+37
    %v3356 = vand.u32 %v2740, 2147483648
    %v3357 = vor.u32 1.1754944e-38, %v3356
    %v3358 = vsel %vm3355, %v3357, %v3353
    %v3359 = vmul.f32 %v2403, %v3358
    %v3360 = vrcp.pop %v2746
    %v3361 = vmul.f32 %v2746, %v3360
    %v3362 = vsub.f32 1.0, %v3361
    %v3363 = vmul.f32 %v3360, %v3362
    %v3364 = vadd.f32 %v3360, %v3363
    %vm3365 = vweird.f32 %v2746
    %vm3366 = vweird.f32 %v3360
    %vm3367 = vmor %vm3365, %vm3366
    %v3368 = vsel %vm3367, %v3360, %v3364
    %v3369 = vand.u32 2147483647, %v2746
    %vm3370 = vcmp.eq.f32.partialorder %v3369, 8.507059e+37
    %v3371 = vand.u32 %v2746, 2147483648
    %v3372 = vor.u32 1.1754944e-38, %v3371
    %v3373 = vsel %vm3370, %v3372, %v3368
    %v3374 = vmul.f32 %v2405, %v3373
    %v3375 = vrcp.pop %v2752
    %v3376 = vmul.f32 %v2752, %v3375
    %v3377 = vsub.f32 1.0, %v3376
    %v3378 = vmul.f32 %v3375, %v3377
    %v3379 = vadd.f32 %v3375, %v3378
    %vm3380 = vweird.f32 %v2752
    %vm3381 = vweird.f32 %v3375
    %vm3382 = vmor %vm3380, %vm3381
    %v3383 = vsel %vm3382, %v3375, %v3379
    %v3384 = vand.u32 2147483647, %v2752
    %vm3385 = vcmp.eq.f32.partialorder %v3384, 8.507059e+37
    %v3386 = vand.u32 %v2752, 2147483648
    %v3387 = vor.u32 1.1754944e-38, %v3386
    %v3388 = vsel %vm3385, %v3387, %v3383
    %v3389 = vmul.f32 %v2407, %v3388
    %v3390 = vrcp.pop %v2758
    %v3391 = vmul.f32 %v2758, %v3390
    %v3392 = vsub.f32 1.0, %v3391
    %v3393 = vmul.f32 %v3390, %v3392
    %v3394 = vadd.f32 %v3390, %v3393
    %vm3395 = vweird.f32 %v2758
    %vm3396 = vweird.f32 %v3390
    %vm3397 = vmor %vm3395, %vm3396
    %v3398 = vsel %vm3397, %v3390, %v3394
    %v3399 = vand.u32 2147483647, %v2758
    %vm3400 = vcmp.eq.f32.partialorder %v3399, 8.507059e+37
    %v3401 = vand.u32 %v2758, 2147483648
    %v3402 = vor.u32 1.1754944e-38, %v3401
    %v3403 = vsel %vm3400, %v3402, %v3398
    %v3404 = vmul.f32 %v2409, %v3403
    %v3405 = vrcp.pop %v2764
    %v3406 = vmul.f32 %v2764, %v3405
    %v3407 = vsub.f32 1.0, %v3406
    %v3408 = vmul.f32 %v3405, %v3407
    %v3409 = vadd.f32 %v3405, %v3408
    %vm3410 = vweird.f32 %v2764
    %vm3411 = vweird.f32 %v3405
    %vm3412 = vmor %vm3410, %vm3411
    %v3413 = vsel %vm3412, %v3405, %v3409
    %v3414 = vand.u32 2147483647, %v2764
    %vm3415 = vcmp.eq.f32.partialorder %v3414, 8.507059e+37
    %v3416 = vand.u32 %v2764, 2147483648
    %v3417 = vor.u32 1.1754944e-38, %v3416
    %v3418 = vsel %vm3415, %v3417, %v3413
    %v3419 = vmul.f32 %v2411, %v3418
    %v3420 = vrcp.pop %v2770
    %v3421 = vmul.f32 %v2770, %v3420
    %v3422 = vsub.f32 1.0, %v3421
    %v3423 = vmul.f32 %v3420, %v3422
    %v3424 = vadd.f32 %v3420, %v3423
    %vm3425 = vweird.f32 %v2770
    %vm3426 = vweird.f32 %v3420
    %vm3427 = vmor %vm3425, %vm3426
    %v3428 = vsel %vm3427, %v3420, %v3424
    %v3429 = vand.u32 2147483647, %v2770
    %vm3430 = vcmp.eq.f32.partialorder %v3429, 8.507059e+37
    %v3431 = vand.u32 %v2770, 2147483648
    %v3432 = vor.u32 1.1754944e-38, %v3431
    %v3433 = vsel %vm3430, %v3432, %v3428
    %v3434 = vmul.f32 %v2413, %v3433
    %v3435 = vrcp.pop %v2776
    %v3436 = vmul.f32 %v2776, %v3435
    %v3437 = vsub.f32 1.0, %v3436
    %v3438 = vmul.f32 %v3435, %v3437
    %v3439 = vadd.f32 %v3435, %v3438
    %vm3440 = vweird.f32 %v2776
    %vm3441 = vweird.f32 %v3435
    %vm3442 = vmor %vm3440, %vm3441
    %v3443 = vsel %vm3442, %v3435, %v3439
    %v3444 = vand.u32 2147483647, %v2776
    %vm3445 = vcmp.eq.f32.partialorder %v3444, 8.507059e+37
    %v3446 = vand.u32 %v2776, 2147483648
    %v3447 = vor.u32 1.1754944e-38, %v3446
    %v3448 = vsel %vm3445, %v3447, %v3443
    %v3449 = vmul.f32 %v2415, %v3448
    %v3450 = vrcp.pop %v2782
    %v3451 = vmul.f32 %v2782, %v3450
    %v3452 = vsub.f32 1.0, %v3451
    %v3453 = vmul.f32 %v3450, %v3452
    %v3454 = vadd.f32 %v3450, %v3453
    %vm3455 = vweird.f32 %v2782
    %vm3456 = vweird.f32 %v3450
    %vm3457 = vmor %vm3455, %vm3456
    %v3458 = vsel %vm3457, %v3450, %v3454
    %v3459 = vand.u32 2147483647, %v2782
    %vm3460 = vcmp.eq.f32.partialorder %v3459, 8.507059e+37
    %v3461 = vand.u32 %v2782, 2147483648
    %v3462 = vor.u32 1.1754944e-38, %v3461
    %v3463 = vsel %vm3460, %v3462, %v3458
    %v3464 = vmul.f32 %v2417, %v3463
    %v3465 = vrcp.pop %v2788
    %v3466 = vmul.f32 %v2788, %v3465
    %v3467 = vsub.f32 1.0, %v3466
    %v3468 = vmul.f32 %v3465, %v3467
    %v3469 = vadd.f32 %v3465, %v3468
    %vm3470 = vweird.f32 %v2788
    %vm3471 = vweird.f32 %v3465
    %vm3472 = vmor %vm3470, %vm3471
    %v3473 = vsel %vm3472, %v3465, %v3469
    %v3474 = vand.u32 2147483647, %v2788
    %vm3475 = vcmp.eq.f32.partialorder %v3474, 8.507059e+37
    %v3476 = vand.u32 %v2788, 2147483648
    %v3477 = vor.u32 1.1754944e-38, %v3476
    %v3478 = vsel %vm3475, %v3477, %v3473
    %v3479 = vmul.f32 %v2419, %v3478
    %v3480 = vrcp.pop %v2794
    %v3481 = vmul.f32 %v2794, %v3480
    %v3482 = vsub.f32 1.0, %v3481
    %v3483 = vmul.f32 %v3480, %v3482
    %v3484 = vadd.f32 %v3480, %v3483
    %vm3485 = vweird.f32 %v2794
    %vm3486 = vweird.f32 %v3480
    %vm3487 = vmor %vm3485, %vm3486
    %v3488 = vsel %vm3487, %v3480, %v3484
    %v3489 = vand.u32 2147483647, %v2794
    %vm3490 = vcmp.eq.f32.partialorder %v3489, 8.507059e+37
    %v3491 = vand.u32 %v2794, 2147483648
    %v3492 = vor.u32 1.1754944e-38, %v3491
    %v3493 = vsel %vm3490, %v3492, %v3488
    %v3494 = vmul.f32 %v2421, %v3493
    %v3495 = vrcp.pop %v2800
    %v3496 = vmul.f32 %v2800, %v3495
    %v3497 = vsub.f32 1.0, %v3496
    %v3498 = vmul.f32 %v3495, %v3497
    %v3499 = vadd.f32 %v3495, %v3498
    %vm3500 = vweird.f32 %v2800
    %vm3501 = vweird.f32 %v3495
    %vm3502 = vmor %vm3500, %vm3501
    %v3503 = vsel %vm3502, %v3495, %v3499
    %v3504 = vand.u32 2147483647, %v2800
    %vm3505 = vcmp.eq.f32.partialorder %v3504, 8.507059e+37
    %v3506 = vand.u32 %v2800, 2147483648
    %v3507 = vor.u32 1.1754944e-38, %v3506
    %v3508 = vsel %vm3505, %v3507, %v3503
    %v3509 = vmul.f32 %v2423, %v3508
    %v3510 = vrcp.pop %v2806
    %v3511 = vmul.f32 %v2806, %v3510
    %v3512 = vsub.f32 1.0, %v3511
    %v3513 = vmul.f32 %v3510, %v3512
    %v3514 = vadd.f32 %v3510, %v3513
    %vm3515 = vweird.f32 %v2806
    %vm3516 = vweird.f32 %v3510
    %vm3517 = vmor %vm3515, %vm3516
    %v3518 = vsel %vm3517, %v3510, %v3514
    %v3519 = vand.u32 2147483647, %v2806
    %vm3520 = vcmp.eq.f32.partialorder %v3519, 8.507059e+37
    %v3521 = vand.u32 %v2806, 2147483648
    %v3522 = vor.u32 1.1754944e-38, %v3521
    %v3523 = vsel %vm3520, %v3522, %v3518
    %v3524 = vmul.f32 %v2425, %v3523
    %v3525 = vrcp.pop %v2812
    %v3526 = vmul.f32 %v2812, %v3525
    %v3527 = vsub.f32 1.0, %v3526
    %v3528 = vmul.f32 %v3525, %v3527
    %v3529 = vadd.f32 %v3525, %v3528
    %vm3530 = vweird.f32 %v2812
    %vm3531 = vweird.f32 %v3525
    %vm3532 = vmor %vm3530, %vm3531
    %v3533 = vsel %vm3532, %v3525, %v3529
    %v3534 = vand.u32 2147483647, %v2812
    %vm3535 = vcmp.eq.f32.partialorder %v3534, 8.507059e+37
    %v3536 = vand.u32 %v2812, 2147483648
    %v3537 = vor.u32 1.1754944e-38, %v3536
    %v3538 = vsel %vm3535, %v3537, %v3533
    %v3539 = vmul.f32 %v2427, %v3538
    %v3540 = vrcp.pop %v2818
    %v3541 = vmul.f32 %v2818, %v3540
    %v3542 = vsub.f32 1.0, %v3541
    %v3543 = vmul.f32 %v3540, %v3542
    %v3544 = vadd.f32 %v3540, %v3543
    %vm3545 = vweird.f32 %v2818
    %vm3546 = vweird.f32 %v3540
    %vm3547 = vmor %vm3545, %vm3546
    %v3548 = vsel %vm3547, %v3540, %v3544
    %v3549 = vand.u32 2147483647, %v2818
    %vm3550 = vcmp.eq.f32.partialorder %v3549, 8.507059e+37
    %v3551 = vand.u32 %v2818, 2147483648
    %v3552 = vor.u32 1.1754944e-38, %v3551
    %v3553 = vsel %vm3550, %v3552, %v3548
    %v3554 = vmul.f32 %v2429, %v3553
    %v3555 = vrcp.pop %v2824
    %v3556 = vmul.f32 %v2824, %v3555
    %v3557 = vsub.f32 1.0, %v3556
    %v3558 = vmul.f32 %v3555, %v3557
    %v3559 = vadd.f32 %v3555, %v3558
    %vm3560 = vweird.f32 %v2824
    %vm3561 = vweird.f32 %v3555
    %vm3562 = vmor %vm3560, %vm3561
    %v3563 = vsel %vm3562, %v3555, %v3559
    %v3564 = vand.u32 2147483647, %v2824
    %vm3565 = vcmp.eq.f32.partialorder %v3564, 8.507059e+37
    %v3566 = vand.u32 %v2824, 2147483648
    %v3567 = vor.u32 1.1754944e-38, %v3566
    %v3568 = vsel %vm3565, %v3567, %v3563
    %v3569 = vmul.f32 %v2431, %v3568
    %v3570 = vrcp.pop %v2830
    %v3571 = vmul.f32 %v2830, %v3570
    %v3572 = vsub.f32 1.0, %v3571
    %v3573 = vmul.f32 %v3570, %v3572
    %v3574 = vadd.f32 %v3570, %v3573
    %vm3575 = vweird.f32 %v2830
    %vm3576 = vweird.f32 %v3570
    %vm3577 = vmor %vm3575, %vm3576
    %v3578 = vsel %vm3577, %v3570, %v3574
    %v3579 = vand.u32 2147483647, %v2830
    %vm3580 = vcmp.eq.f32.partialorder %v3579, 8.507059e+37
    %v3581 = vand.u32 %v2830, 2147483648
    %v3582 = vor.u32 1.1754944e-38, %v3581
    %v3583 = vsel %vm3580, %v3582, %v3578
    %v3584 = vmul.f32 %v2433, %v3583
    %v3585 = vrcp.pop %v2836
    %v3586 = vmul.f32 %v2836, %v3585
    %v3587 = vsub.f32 1.0, %v3586
    %v3588 = vmul.f32 %v3585, %v3587
    %v3589 = vadd.f32 %v3585, %v3588
    %vm3590 = vweird.f32 %v2836
    %vm3591 = vweird.f32 %v3585
    %vm3592 = vmor %vm3590, %vm3591
    %v3593 = vsel %vm3592, %v3585, %v3589
    %v3594 = vand.u32 2147483647, %v2836
    %vm3595 = vcmp.eq.f32.partialorder %v3594, 8.507059e+37
    %v3596 = vand.u32 %v2836, 2147483648
    %v3597 = vor.u32 1.1754944e-38, %v3596
    %v3598 = vsel %vm3595, %v3597, %v3593
    %v3599 = vmul.f32 %v2435, %v3598
    %v3600 = vrcp.pop %v2842
    %v3601 = vmul.f32 %v2842, %v3600
    %v3602 = vsub.f32 1.0, %v3601
    %v3603 = vmul.f32 %v3600, %v3602
    %v3604 = vadd.f32 %v3600, %v3603
    %vm3605 = vweird.f32 %v2842
    %vm3606 = vweird.f32 %v3600
    %vm3607 = vmor %vm3605, %vm3606
    %v3608 = vsel %vm3607, %v3600, %v3604
    %v3609 = vand.u32 2147483647, %v2842
    %vm3610 = vcmp.eq.f32.partialorder %v3609, 8.507059e+37
    %v3611 = vand.u32 %v2842, 2147483648
    %v3612 = vor.u32 1.1754944e-38, %v3611
    %v3613 = vsel %vm3610, %v3612, %v3608
    %v3614 = vmul.f32 %v2437, %v3613
    %v3615 = vrcp.pop %v2848
    %v3616 = vmul.f32 %v2848, %v3615
    %v3617 = vsub.f32 1.0, %v3616
    %v3618 = vmul.f32 %v3615, %v3617
    %v3619 = vadd.f32 %v3615, %v3618
    %vm3620 = vweird.f32 %v2848
    %vm3621 = vweird.f32 %v3615
    %vm3622 = vmor %vm3620, %vm3621
    %v3623 = vsel %vm3622, %v3615, %v3619
    %v3624 = vand.u32 2147483647, %v2848
    %vm3625 = vcmp.eq.f32.partialorder %v3624, 8.507059e+37
    %v3626 = vand.u32 %v2848, 2147483648
    %v3627 = vor.u32 1.1754944e-38, %v3626
    %v3628 = vsel %vm3625, %v3627, %v3623
    %v3629 = vmul.f32 %v2439, %v3628
    %v3630 = vrcp.pop %v2854
    %v3631 = vmul.f32 %v2854, %v3630
    %v3632 = vsub.f32 1.0, %v3631
    %v3633 = vmul.f32 %v3630, %v3632
    %v3634 = vadd.f32 %v3630, %v3633
    %vm3635 = vweird.f32 %v2854
    %vm3636 = vweird.f32 %v3630
    %vm3637 = vmor %vm3635, %vm3636
    %v3638 = vsel %vm3637, %v3630, %v3634
    %v3639 = vand.u32 2147483647, %v2854
    %vm3640 = vcmp.eq.f32.partialorder %v3639, 8.507059e+37
    %v3641 = vand.u32 %v2854, 2147483648
    %v3642 = vor.u32 1.1754944e-38, %v3641
    %v3643 = vsel %vm3640, %v3642, %v3638
    %v3644 = vmul.f32 %v2441, %v3643
    %v3645 = vrcp.pop %v2860
    %v3646 = vmul.f32 %v2860, %v3645
    %v3647 = vsub.f32 1.0, %v3646
    %v3648 = vmul.f32 %v3645, %v3647
    %v3649 = vadd.f32 %v3645, %v3648
    %vm3650 = vweird.f32 %v2860
    %vm3651 = vweird.f32 %v3645
    %vm3652 = vmor %vm3650, %vm3651
    %v3653 = vsel %vm3652, %v3645, %v3649
    %v3654 = vand.u32 2147483647, %v2860
    %vm3655 = vcmp.eq.f32.partialorder %v3654, 8.507059e+37
    %v3656 = vand.u32 %v2860, 2147483648
    %v3657 = vor.u32 1.1754944e-38, %v3656
    %v3658 = vsel %vm3655, %v3657, %v3653
    %v3659 = vmul.f32 %v2443, %v3658
    %v3660 = vrcp.pop %v2866
    %v3661 = vmul.f32 %v2866, %v3660
    %v3662 = vsub.f32 1.0, %v3661
    %v3663 = vmul.f32 %v3660, %v3662
    %v3664 = vadd.f32 %v3660, %v3663
    %vm3665 = vweird.f32 %v2866
    %vm3666 = vweird.f32 %v3660
    %vm3667 = vmor %vm3665, %vm3666
    %v3668 = vsel %vm3667, %v3660, %v3664
    %v3669 = vand.u32 2147483647, %v2866
    %vm3670 = vcmp.eq.f32.partialorder %v3669, 8.507059e+37
    %v3671 = vand.u32 %v2866, 2147483648
    %v3672 = vor.u32 1.1754944e-38, %v3671
    %v3673 = vsel %vm3670, %v3672, %v3668
    %v3674 = vmul.f32 %v2445, %v3673
    %v3675 = vrcp.pop %v2872
    %v3676 = vmul.f32 %v2872, %v3675
    %v3677 = vsub.f32 1.0, %v3676
    %v3678 = vmul.f32 %v3675, %v3677
    %v3679 = vadd.f32 %v3675, %v3678
    %vm3680 = vweird.f32 %v2872
    %vm3681 = vweird.f32 %v3675
    %vm3682 = vmor %vm3680, %vm3681
    %v3683 = vsel %vm3682, %v3675, %v3679
    %v3684 = vand.u32 2147483647, %v2872
    %vm3685 = vcmp.eq.f32.partialorder %v3684, 8.507059e+37
    %v3686 = vand.u32 %v2872, 2147483648
    %v3687 = vor.u32 1.1754944e-38, %v3686
    %v3688 = vsel %vm3685, %v3687, %v3683
    %v3689 = vmul.f32 %v2447, %v3688
    %v3690 = vrcp.pop %v2878
    %v3691 = vmul.f32 %v2878, %v3690
    %v3692 = vsub.f32 1.0, %v3691
    %v3693 = vmul.f32 %v3690, %v3692
    %v3694 = vadd.f32 %v3690, %v3693
    %vm3695 = vweird.f32 %v2878
    %vm3696 = vweird.f32 %v3690
    %vm3697 = vmor %vm3695, %vm3696
    %v3698 = vsel %vm3697, %v3690, %v3694
    %v3699 = vand.u32 2147483647, %v2878
    %vm3700 = vcmp.eq.f32.partialorder %v3699, 8.507059e+37
    %v3701 = vand.u32 %v2878, 2147483648
    %v3702 = vor.u32 1.1754944e-38, %v3701
    %v3703 = vsel %vm3700, %v3702, %v3698
    %v3704 = vmul.f32 %v2449, %v3703
    %v3705 = vrcp.pop %v2884
    %v3706 = vmul.f32 %v2884, %v3705
    %v3707 = vsub.f32 1.0, %v3706
    %v3708 = vmul.f32 %v3705, %v3707
    %v3709 = vadd.f32 %v3705, %v3708
    %vm3710 = vweird.f32 %v2884
    %vm3711 = vweird.f32 %v3705
    %vm3712 = vmor %vm3710, %vm3711
    %v3713 = vsel %vm3712, %v3705, %v3709
    %v3714 = vand.u32 2147483647, %v2884
    %vm3715 = vcmp.eq.f32.partialorder %v3714, 8.507059e+37
    %v3716 = vand.u32 %v2884, 2147483648
    %v3717 = vor.u32 1.1754944e-38, %v3716
    %v3718 = vsel %vm3715, %v3717, %v3713
    %v3719 = vmul.f32 %v2451, %v3718
    %v3720 = vrcp.pop %v2890
    %v3721 = vmul.f32 %v2890, %v3720
    %v3722 = vsub.f32 1.0, %v3721
    %v3723 = vmul.f32 %v3720, %v3722
    %v3724 = vadd.f32 %v3720, %v3723
    %vm3725 = vweird.f32 %v2890
    %vm3726 = vweird.f32 %v3720
    %vm3727 = vmor %vm3725, %vm3726
    %v3728 = vsel %vm3727, %v3720, %v3724
    %v3729 = vand.u32 2147483647, %v2890
    %vm3730 = vcmp.eq.f32.partialorder %v3729, 8.507059e+37
    %v3731 = vand.u32 %v2890, 2147483648
    %v3732 = vor.u32 1.1754944e-38, %v3731
    %v3733 = vsel %vm3730, %v3732, %v3728
    %v3734 = vmul.f32 %v2453, %v3733
    %v3735 = vrcp.pop %v2896
    %v3736 = vmul.f32 %v2896, %v3735
    %v3737 = vsub.f32 1.0, %v3736
    %v3738 = vmul.f32 %v3735, %v3737
    %v3739 = vadd.f32 %v3735, %v3738
    %vm3740 = vweird.f32 %v2896
    %vm3741 = vweird.f32 %v3735
    %vm3742 = vmor %vm3740, %vm3741
    %v3743 = vsel %vm3742, %v3735, %v3739
    %v3744 = vand.u32 2147483647, %v2896
    %vm3745 = vcmp.eq.f32.partialorder %v3744, 8.507059e+37
    %v3746 = vand.u32 %v2896, 2147483648
    %v3747 = vor.u32 1.1754944e-38, %v3746
    %v3748 = vsel %vm3745, %v3747, %v3743
    %v3749 = vmul.f32 %v2455, %v3748
    %v3750 = vrcp.pop %v2902
    %v3751 = vmul.f32 %v2902, %v3750
    %v3752 = vsub.f32 1.0, %v3751
    %v3753 = vmul.f32 %v3750, %v3752
    %v3754 = vadd.f32 %v3750, %v3753
    %vm3755 = vweird.f32 %v2902
    %vm3756 = vweird.f32 %v3750
    %vm3757 = vmor %vm3755, %vm3756
    %v3758 = vsel %vm3757, %v3750, %v3754
    %v3759 = vand.u32 2147483647, %v2902
    %vm3760 = vcmp.eq.f32.partialorder %v3759, 8.507059e+37
    %v3761 = vand.u32 %v2902, 2147483648
    %v3762 = vor.u32 1.1754944e-38, %v3761
    %v3763 = vsel %vm3760, %v3762, %v3758
    %v3764 = vmul.f32 %v2457, %v3763
    %v3765 = vrcp.pop %v2908
    %v3766 = vmul.f32 %v2908, %v3765
    %v3767 = vsub.f32 1.0, %v3766
    %v3768 = vmul.f32 %v3765, %v3767
    %v3769 = vadd.f32 %v3765, %v3768
    %vm3770 = vweird.f32 %v2908
    %vm3771 = vweird.f32 %v3765
    %vm3772 = vmor %vm3770, %vm3771
    %v3773 = vsel %vm3772, %v3765, %v3769
    %v3774 = vand.u32 2147483647, %v2908
    %vm3775 = vcmp.eq.f32.partialorder %v3774, 8.507059e+37
    %v3776 = vand.u32 %v2908, 2147483648
    %v3777 = vor.u32 1.1754944e-38, %v3776
    %v3778 = vsel %vm3775, %v3777, %v3773
    %v3779 = vmul.f32 %v2459, %v3778
    %v3780 = vrcp.pop %v2914
    %v3781 = vmul.f32 %v2914, %v3780
    %v3782 = vsub.f32 1.0, %v3781
    %v3783 = vmul.f32 %v3780, %v3782
    %v3784 = vadd.f32 %v3780, %v3783
    %vm3785 = vweird.f32 %v2914
    %vm3786 = vweird.f32 %v3780
    %vm3787 = vmor %vm3785, %vm3786
    %v3788 = vsel %vm3787, %v3780, %v3784
    %v3789 = vand.u32 2147483647, %v2914
    %vm3790 = vcmp.eq.f32.partialorder %v3789, 8.507059e+37
    %v3791 = vand.u32 %v2914, 2147483648
    %v3792 = vor.u32 1.1754944e-38, %v3791
    %v3793 = vsel %vm3790, %v3792, %v3788
    %v3794 = vmul.f32 %v2461, %v3793
    %v3795 = vrcp.pop %v2920
    %v3796 = vmul.f32 %v2920, %v3795
    %v3797 = vsub.f32 1.0, %v3796
    %v3798 = vmul.f32 %v3795, %v3797
    %v3799 = vadd.f32 %v3795, %v3798
    %vm3800 = vweird.f32 %v2920
    %vm3801 = vweird.f32 %v3795
    %vm3802 = vmor %vm3800, %vm3801
    %v3803 = vsel %vm3802, %v3795, %v3799
    %v3804 = vand.u32 2147483647, %v2920
    %vm3805 = vcmp.eq.f32.partialorder %v3804, 8.507059e+37
    %v3806 = vand.u32 %v2920, 2147483648
    %v3807 = vor.u32 1.1754944e-38, %v3806
    %v3808 = vsel %vm3805, %v3807, %v3803
    %v3809 = vmul.f32 %v2463, %v3808
    %v3810 = vrcp.pop %v2926
    %v3811 = vmul.f32 %v2926, %v3810
    %v3812 = vsub.f32 1.0, %v3811
    %v3813 = vmul.f32 %v3810, %v3812
    %v3814 = vadd.f32 %v3810, %v3813
    %vm3815 = vweird.f32 %v2926
    %vm3816 = vweird.f32 %v3810
    %vm3817 = vmor %vm3815, %vm3816
    %v3818 = vsel %vm3817, %v3810, %v3814
    %v3819 = vand.u32 2147483647, %v2926
    %vm3820 = vcmp.eq.f32.partialorder %v3819, 8.507059e+37
    %v3821 = vand.u32 %v2926, 2147483648
    %v3822 = vor.u32 1.1754944e-38, %v3821
    %v3823 = vsel %vm3820, %v3822, %v3818
    %v3824 = vmul.f32 %v2465, %v3823
    %v3825 = vrcp.pop %v2932
    %v3826 = vmul.f32 %v2932, %v3825
    %v3827 = vsub.f32 1.0, %v3826
    %v3828 = vmul.f32 %v3825, %v3827
    %v3829 = vadd.f32 %v3825, %v3828
    %vm3830 = vweird.f32 %v2932
    %vm3831 = vweird.f32 %v3825
    %vm3832 = vmor %vm3830, %vm3831
    %v3833 = vsel %vm3832, %v3825, %v3829
    %v3834 = vand.u32 2147483647, %v2932
    %vm3835 = vcmp.eq.f32.partialorder %v3834, 8.507059e+37
    %v3836 = vand.u32 %v2932, 2147483648
    %v3837 = vor.u32 1.1754944e-38, %v3836
    %v3838 = vsel %vm3835, %v3837, %v3833
    %v3839 = vmul.f32 %v2467, %v3838
    %v3840 = vrcp.pop %v2938
    %v3841 = vmul.f32 %v2938, %v3840
    %v3842 = vsub.f32 1.0, %v3841
    %v3843 = vmul.f32 %v3840, %v3842
    %v3844 = vadd.f32 %v3840, %v3843
    %vm3845 = vweird.f32 %v2938
    %vm3846 = vweird.f32 %v3840
    %vm3847 = vmor %vm3845, %vm3846
    %v3848 = vsel %vm3847, %v3840, %v3844
    %v3849 = vand.u32 2147483647, %v2938
    %vm3850 = vcmp.eq.f32.partialorder %v3849, 8.507059e+37
    %v3851 = vand.u32 %v2938, 2147483648
    %v3852 = vor.u32 1.1754944e-38, %v3851
    %v3853 = vsel %vm3850, %v3852, %v3848
    %v3854 = vmul.f32 %v2469, %v3853
    %v3855 = vrcp.pop %v2944
    %v3856 = vmul.f32 %v2944, %v3855
    %v3857 = vsub.f32 1.0, %v3856
    %v3858 = vmul.f32 %v3855, %v3857
    %v3859 = vadd.f32 %v3855, %v3858
    %vm3860 = vweird.f32 %v2944
    %vm3861 = vweird.f32 %v3855
    %vm3862 = vmor %vm3860, %vm3861
    %v3863 = vsel %vm3862, %v3855, %v3859
    %v3864 = vand.u32 2147483647, %v2944
    %vm3865 = vcmp.eq.f32.partialorder %v3864, 8.507059e+37
    %v3866 = vand.u32 %v2944, 2147483648
    %v3867 = vor.u32 1.1754944e-38, %v3866
    %v3868 = vsel %vm3865, %v3867, %v3863
    %v3869 = vmul.f32 %v2471, %v3868
    %v3870 = vrcp.pop %v2950
    %v3871 = vmul.f32 %v2950, %v3870
    %v3872 = vsub.f32 1.0, %v3871
    %v3873 = vmul.f32 %v3870, %v3872
    %v3874 = vadd.f32 %v3870, %v3873
    %vm3875 = vweird.f32 %v2950
    %vm3876 = vweird.f32 %v3870
    %vm3877 = vmor %vm3875, %vm3876
    %v3878 = vsel %vm3877, %v3870, %v3874
    %v3879 = vand.u32 2147483647, %v2950
    %vm3880 = vcmp.eq.f32.partialorder %v3879, 8.507059e+37
    %v3881 = vand.u32 %v2950, 2147483648
    %v3882 = vor.u32 1.1754944e-38, %v3881
    %v3883 = vsel %vm3880, %v3882, %v3878
    %v3884 = vmul.f32 %v2473, %v3883
    %v3885 = vrcp.pop %v2956
    %v3886 = vmul.f32 %v2956, %v3885
    %v3887 = vsub.f32 1.0, %v3886
    %v3888 = vmul.f32 %v3885, %v3887
    %v3889 = vadd.f32 %v3885, %v3888
    %vm3890 = vweird.f32 %v2956
    %vm3891 = vweird.f32 %v3885
    %vm3892 = vmor %vm3890, %vm3891
    %v3893 = vsel %vm3892, %v3885, %v3889
    %v3894 = vand.u32 2147483647, %v2956
    %vm3895 = vcmp.eq.f32.partialorder %v3894, 8.507059e+37
    %v3896 = vand.u32 %v2956, 2147483648
    %v3897 = vor.u32 1.1754944e-38, %v3896
    %v3898 = vsel %vm3895, %v3897, %v3893
    %v3899 = vmul.f32 %v2475, %v3898
    %v3900 = vrcp.pop %v2962
    %v3901 = vmul.f32 %v2962, %v3900
    %v3902 = vsub.f32 1.0, %v3901
    %v3903 = vmul.f32 %v3900, %v3902
    %v3904 = vadd.f32 %v3900, %v3903
    %vm3905 = vweird.f32 %v2962
    %vm3906 = vweird.f32 %v3900
    %vm3907 = vmor %vm3905, %vm3906
    %v3908 = vsel %vm3907, %v3900, %v3904
    %v3909 = vand.u32 2147483647, %v2962
    %vm3910 = vcmp.eq.f32.partialorder %v3909, 8.507059e+37
    %v3911 = vand.u32 %v2962, 2147483648
    %v3912 = vor.u32 1.1754944e-38, %v3911
    %v3913 = vsel %vm3910, %v3912, %v3908
    %v3914 = vmul.f32 %v2477, %v3913
    %v3915 = vrcp.pop %v2968
    %v3916 = vmul.f32 %v2968, %v3915
    %v3917 = vsub.f32 1.0, %v3916
    %v3918 = vmul.f32 %v3915, %v3917
    %v3919 = vadd.f32 %v3915, %v3918
    %vm3920 = vweird.f32 %v2968
    %vm3921 = vweird.f32 %v3915
    %vm3922 = vmor %vm3920, %vm3921
    %v3923 = vsel %vm3922, %v3915, %v3919
    %v3924 = vand.u32 2147483647, %v2968
    %vm3925 = vcmp.eq.f32.partialorder %v3924, 8.507059e+37
    %v3926 = vand.u32 %v2968, 2147483648
    %v3927 = vor.u32 1.1754944e-38, %v3926
    %v3928 = vsel %vm3925, %v3927, %v3923
    %v3929 = vmul.f32 %v2479, %v3928
    %v3930 = vrcp.pop %v2974
    %v3931 = vmul.f32 %v2974, %v3930
    %v3932 = vsub.f32 1.0, %v3931
    %v3933 = vmul.f32 %v3930, %v3932
    %v3934 = vadd.f32 %v3930, %v3933
    %vm3935 = vweird.f32 %v2974
    %vm3936 = vweird.f32 %v3930
    %vm3937 = vmor %vm3935, %vm3936
    %v3938 = vsel %vm3937, %v3930, %v3934
    %v3939 = vand.u32 2147483647, %v2974
    %vm3940 = vcmp.eq.f32.partialorder %v3939, 8.507059e+37
    %v3941 = vand.u32 %v2974, 2147483648
    %v3942 = vor.u32 1.1754944e-38, %v3941
    %v3943 = vsel %vm3940, %v3942, %v3938
    %v3944 = vmul.f32 %v2481, %v3943
    %v3945 = vrcp.pop %v2980
    %v3946 = vmul.f32 %v2980, %v3945
    %v3947 = vsub.f32 1.0, %v3946
    %v3948 = vmul.f32 %v3945, %v3947
    %v3949 = vadd.f32 %v3945, %v3948
    %vm3950 = vweird.f32 %v2980
    %vm3951 = vweird.f32 %v3945
    %vm3952 = vmor %vm3950, %vm3951
    %v3953 = vsel %vm3952, %v3945, %v3949
    %v3954 = vand.u32 2147483647, %v2980
    %vm3955 = vcmp.eq.f32.partialorder %v3954, 8.507059e+37
    %v3956 = vand.u32 %v2980, 2147483648
    %v3957 = vor.u32 1.1754944e-38, %v3956
    %v3958 = vsel %vm3955, %v3957, %v3953
    %v3959 = vmul.f32 %v2483, %v3958
    %v3960 = vrcp.pop %v2986
    %v3961 = vmul.f32 %v2986, %v3960
    %v3962 = vsub.f32 1.0, %v3961
    %v3963 = vmul.f32 %v3960, %v3962
    %v3964 = vadd.f32 %v3960, %v3963
    %vm3965 = vweird.f32 %v2986
    %vm3966 = vweird.f32 %v3960
    %vm3967 = vmor %vm3965, %vm3966
    %v3968 = vsel %vm3967, %v3960, %v3964
    %v3969 = vand.u32 2147483647, %v2986
    %vm3970 = vcmp.eq.f32.partialorder %v3969, 8.507059e+37
    %v3971 = vand.u32 %v2986, 2147483648
    %v3972 = vor.u32 1.1754944e-38, %v3971
    %v3973 = vsel %vm3970, %v3972, %v3968
    %v3974 = vmul.f32 %v2485, %v3973
    %v3975 = vrcp.pop %v2992
    %v3976 = vmul.f32 %v2992, %v3975
    %v3977 = vsub.f32 1.0, %v3976
    %v3978 = vmul.f32 %v3975, %v3977
    %v3979 = vadd.f32 %v3975, %v3978
    %vm3980 = vweird.f32 %v2992
    %vm3981 = vweird.f32 %v3975
    %vm3982 = vmor %vm3980, %vm3981
    %v3983 = vsel %vm3982, %v3975, %v3979
    %v3984 = vand.u32 2147483647, %v2992
    %vm3985 = vcmp.eq.f32.partialorder %v3984, 8.507059e+37
    %v3986 = vand.u32 %v2992, 2147483648
    %v3987 = vor.u32 1.1754944e-38, %v3986
    %v3988 = vsel %vm3985, %v3987, %v3983
    %v3989 = vmul.f32 %v2487, %v3988
    %v3990 = vrcp.pop %v2998
    %v3991 = vmul.f32 %v2998, %v3990
    %v3992 = vsub.f32 1.0, %v3991
    %v3993 = vmul.f32 %v3990, %v3992
    %v3994 = vadd.f32 %v3990, %v3993
    %vm3995 = vweird.f32 %v2998
    %vm3996 = vweird.f32 %v3990
    %vm3997 = vmor %vm3995, %vm3996
    %v3998 = vsel %vm3997, %v3990, %v3994
    %v3999 = vand.u32 2147483647, %v2998
    %vm4000 = vcmp.eq.f32.partialorder %v3999, 8.507059e+37
    %v4001 = vand.u32 %v2998, 2147483648
    %v4002 = vor.u32 1.1754944e-38, %v4001
    %v4003 = vsel %vm4000, %v4002, %v3998
    %v4004 = vmul.f32 %v2489, %v4003
    %v4005 = vrcp.pop %v3004
    %v4006 = vmul.f32 %v3004, %v4005
    %v4007 = vsub.f32 1.0, %v4006
    %v4008 = vmul.f32 %v4005, %v4007
    %v4009 = vadd.f32 %v4005, %v4008
    %vm4010 = vweird.f32 %v3004
    %vm4011 = vweird.f32 %v4005
    %vm4012 = vmor %vm4010, %vm4011
    %v4013 = vsel %vm4012, %v4005, %v4009
    %v4014 = vand.u32 2147483647, %v3004
    %vm4015 = vcmp.eq.f32.partialorder %v4014, 8.507059e+37
    %v4016 = vand.u32 %v3004, 2147483648
    %v4017 = vor.u32 1.1754944e-38, %v4016
    %v4018 = vsel %vm4015, %v4017, %v4013
    %v4019 = vmul.f32 %v2491, %v4018
    %v4020 = vrcp.pop %v3010
    %v4021 = vmul.f32 %v3010, %v4020
    %v4022 = vsub.f32 1.0, %v4021
    %v4023 = vmul.f32 %v4020, %v4022
    %v4024 = vadd.f32 %v4020, %v4023
    %vm4025 = vweird.f32 %v3010
    %vm4026 = vweird.f32 %v4020
    %vm4027 = vmor %vm4025, %vm4026
    %v4028 = vsel %vm4027, %v4020, %v4024
    %v4029 = vand.u32 2147483647, %v3010
    %vm4030 = vcmp.eq.f32.partialorder %v4029, 8.507059e+37
    %v4031 = vand.u32 %v3010, 2147483648
    %v4032 = vor.u32 1.1754944e-38, %v4031
    %v4033 = vsel %vm4030, %v4032, %v4028
    %v4034 = vmul.f32 %v2493, %v4033
    %v4035 = vmul.f32 %v2495, %v3088
    %v4036 = vmul.f32 %v2497, %v3103
    %v4037 = vmul.f32 %v2499, %v3118
    %v4038 = vmul.f32 %v2501, %v3133
    %v4039 = vmul.f32 %v2503, %v3148
    %v4040 = vmul.f32 %v2505, %v3163
    %v4041 = vmul.f32 %v2507, %v3178
    %v4042 = vmul.f32 %v2509, %v3193
    %v4043 = vmul.f32 %v2511, %v3208
    %v4044 = vmul.f32 %v2513, %v3223
    %v4045 = vmul.f32 %v2515, %v3238
    %v4046 = vmul.f32 %v2517, %v3253
    %v4047 = vmul.f32 %v2519, %v3268
    %v4048 = vmul.f32 %v2521, %v3283
    %v4049 = vmul.f32 %v2523, %v3298
    %v4050 = vmul.f32 %v2525, %v3313
    %v4051 = vmul.f32 %v2527, %v3328
    %v4052 = vmul.f32 %v2529, %v3343
    %v4053 = vmul.f32 %v2531, %v3358
    %v4054 = vmul.f32 %v2533, %v3373
    %v4055 = vmul.f32 %v2535, %v3388
    %v4056 = vmul.f32 %v2537, %v3403
    %v4057 = vmul.f32 %v2539, %v3418
    %v4058 = vmul.f32 %v2541, %v3433
    %v4059 = vmul.f32 %v2543, %v3448
    %v4060 = vmul.f32 %v2545, %v3463
    %v4061 = vmul.f32 %v2547, %v3478
    %v4062 = vmul.f32 %v2549, %v3493
    %v4063 = vmul.f32 %v2551, %v3508
    %v4064 = vmul.f32 %v2553, %v3523
    %v4065 = vmul.f32 %v2555, %v3538
    %v4066 = vmul.f32 %v2557, %v3553
    %v4067 = vmul.f32 %v2559, %v3568
    %v4068 = vmul.f32 %v2561, %v3583
    %v4069 = vmul.f32 %v2563, %v3598
    %v4070 = vmul.f32 %v2565, %v3613
    %v4071 = vmul.f32 %v2567, %v3628
    %v4072 = vmul.f32 %v2569, %v3643
    %v4073 = vmul.f32 %v2571, %v3658
    %v4074 = vmul.f32 %v2573, %v3673
    %v4075 = vmul.f32 %v2575, %v3688
    %v4076 = vmul.f32 %v2577, %v3703
    %v4077 = vmul.f32 %v2579, %v3718
    %v4078 = vmul.f32 %v2581, %v3733
    %v4079 = vmul.f32 %v2583, %v3748
    %v4080 = vmul.f32 %v2585, %v3763
    %v4081 = vmul.f32 %v2587, %v3778
    %v4082 = vmul.f32 %v2589, %v3793
    %v4083 = vmul.f32 %v2591, %v3808
    %v4084 = vmul.f32 %v2593, %v3823
    %v4085 = vmul.f32 %v2595, %v3838
    %v4086 = vmul.f32 %v2597, %v3853
    %v4087 = vmul.f32 %v2599, %v3868
    %v4088 = vmul.f32 %v2601, %v3883
    %v4089 = vmul.f32 %v2603, %v3898
    %v4090 = vmul.f32 %v2605, %v3913
    %v4091 = vmul.f32 %v2607, %v3928
    %v4092 = vmul.f32 %v2609, %v3943
    %v4093 = vmul.f32 %v2611, %v3958
    %v4094 = vmul.f32 %v2613, %v3973
    %v4095 = vmul.f32 %v2615, %v3988
    %v4096 = vmul.f32 %v2617, %v4003
    %v4097 = vmul.f32 %v2619, %v4018
    %v4098 = vmul.f32 %v2621, %v4033
    %v4099 = vmul.f32 %v3089, 1.442695
    %v4100 = vpow.pop %v4099
    %v4101 = vmul.f32 %v3104, 1.442695
    %v4102 = vpow.pop %v4101
    %v4103 = vmul.f32 %v3119, 1.442695
    %v4104 = vpow.pop %v4103
    %v4105 = vmul.f32 %v3134, 1.442695
    %v4106 = vpow.pop %v4105
    %v4107 = vmul.f32 %v3149, 1.442695
    %v4108 = vpow.pop %v4107
    %v4109 = vmul.f32 %v3164, 1.442695
    %v4110 = vpow.pop %v4109
    %v4111 = vmul.f32 %v3179, 1.442695
    %v4112 = vpow.pop %v4111
    %v4113 = vmul.f32 %v3194, 1.442695
    %v4114 = vpow.pop %v4113
    %v4115 = vmul.f32 %v3209, 1.442695
    %v4116 = vpow.pop %v4115
    %v4117 = vmul.f32 %v3224, 1.442695
    %v4118 = vpow.pop %v4117
    %v4119 = vmul.f32 %v3239, 1.442695
    %v4120 = vpow.pop %v4119
    %v4121 = vmul.f32 %v3254, 1.442695
    %v4122 = vpow.pop %v4121
    %v4123 = vmul.f32 %v3269, 1.442695
    %v4124 = vpow.pop %v4123
    %v4125 = vmul.f32 %v3284, 1.442695
    %v4126 = vpow.pop %v4125
    %v4127 = vmul.f32 %v3299, 1.442695
    %v4128 = vpow.pop %v4127
    %v4129 = vmul.f32 %v3314, 1.442695
    %v4130 = vpow.pop %v4129
    %v4131 = vmul.f32 %v3329, 1.442695
    %v4132 = vpow.pop %v4131
    %v4133 = vmul.f32 %v3344, 1.442695
    %v4134 = vpow.pop %v4133
    %v4135 = vmul.f32 %v3359, 1.442695
    %v4136 = vpow.pop %v4135
    %v4137 = vmul.f32 %v3374, 1.442695
    %v4138 = vpow.pop %v4137
    %v4139 = vmul.f32 %v3389, 1.442695
    %v4140 = vpow.pop %v4139
    %v4141 = vmul.f32 %v3404, 1.442695
    %v4142 = vpow.pop %v4141
    %v4143 = vmul.f32 %v3419, 1.442695
    %v4144 = vpow.pop %v4143
    %v4145 = vmul.f32 %v3434, 1.442695
    %v4146 = vpow.pop %v4145
    %v4147 = vmul.f32 %v3449, 1.442695
    %v4148 = vpow.pop %v4147
    %v4149 = vmul.f32 %v3464, 1.442695
    %v4150 = vpow.pop %v4149
    %v4151 = vmul.f32 %v3479, 1.442695
    %v4152 = vpow.pop %v4151
    %v4153 = vmul.f32 %v3494, 1.442695
    %v4154 = vpow.pop %v4153
    %v4155 = vmul.f32 %v3509, 1.442695
    %v4156 = vpow.pop %v4155
    %v4157 = vmul.f32 %v3524, 1.442695
    %v4158 = vpow.pop %v4157
    %v4159 = vmul.f32 %v3539, 1.442695
    %v4160 = vpow.pop %v4159
    %v4161 = vmul.f32 %v3554, 1.442695
    %v4162 = vpow.pop %v4161
    %v4163 = vmul.f32 %v3569, 1.442695
    %v4164 = vpow.pop %v4163
    %v4165 = vmul.f32 %v3584, 1.442695
    %v4166 = vpow.pop %v4165
    %v4167 = vmul.f32 %v3599, 1.442695
    %v4168 = vpow.pop %v4167
    %v4169 = vmul.f32 %v3614, 1.442695
    %v4170 = vpow.pop %v4169
    %v4171 = vmul.f32 %v3629, 1.442695
    %v4172 = vpow.pop %v4171
    %v4173 = vmul.f32 %v3644, 1.442695
    %v4174 = vpow.pop %v4173
    %v4175 = vmul.f32 %v3659, 1.442695
    %v4176 = vpow.pop %v4175
    %v4177 = vmul.f32 %v3674, 1.442695
    %v4178 = vpow.pop %v4177
    %v4179 = vmul.f32 %v3689, 1.442695
    %v4180 = vpow.pop %v4179
    %v4181 = vmul.f32 %v3704, 1.442695
    %v4182 = vpow.pop %v4181
    %v4183 = vmul.f32 %v3719, 1.442695
    %v4184 = vpow.pop %v4183
    %v4185 = vmul.f32 %v3734, 1.442695
    %v4186 = vpow.pop %v4185
    %v4187 = vmul.f32 %v3749, 1.442695
    %v4188 = vpow.pop %v4187
    %v4189 = vmul.f32 %v3764, 1.442695
    %v4190 = vpow.pop %v4189
    %v4191 = vmul.f32 %v3779, 1.442695
    %v4192 = vpow.pop %v4191
    %v4193 = vmul.f32 %v3794, 1.442695
    %v4194 = vpow.pop %v4193
    %v4195 = vmul.f32 %v3809, 1.442695
    %v4196 = vpow.pop %v4195
    %v4197 = vmul.f32 %v3824, 1.442695
    %v4198 = vpow.pop %v4197
    %v4199 = vmul.f32 %v3839, 1.442695
    %v4200 = vpow.pop %v4199
    %v4201 = vmul.f32 %v3854, 1.442695
    %v4202 = vpow.pop %v4201
    %v4203 = vmul.f32 %v3869, 1.442695
    %v4204 = vpow.pop %v4203
    %v4205 = vmul.f32 %v3884, 1.442695
    %v4206 = vpow.pop %v4205
    %v4207 = vmul.f32 %v3899, 1.442695
    %v4208 = vpow.pop %v4207
    %v4209 = vmul.f32 %v3914, 1.442695
    %v4210 = vpow.pop %v4209
    %v4211 = vmul.f32 %v3929, 1.442695
    %v4212 = vpow.pop %v4211
    %v4213 = vmul.f32 %v3944, 1.442695
    %v4214 = vpow.pop %v4213
    %v4215 = vmul.f32 %v3959, 1.442695
    %v4216 = vpow.pop %v4215
    %v4217 = vmul.f32 %v3974, 1.442695
    %v4218 = vpow.pop %v4217
    %v4219 = vmul.f32 %v3989, 1.442695
    %v4220 = vpow.pop %v4219
    %v4221 = vmul.f32 %v4004, 1.442695
    %v4222 = vpow.pop %v4221
    %v4223 = vmul.f32 %v4019, 1.442695
    %v4224 = vpow.pop %v4223
    %v4225 = vmul.f32 %v4034, 1.442695
    %v4226 = vpow.pop %v4225
    %v4227 = vmul.f32 %v4035, 1.442695
    %v4228 = vpow.pop %v4227
    %v4229 = vmul.f32 %v4036, 1.442695
    %v4230 = vpow.pop %v4229
    %v4231 = vmul.f32 %v4037, 1.442695
    %v4232 = vpow.pop %v4231
    %v4233 = vmul.f32 %v4038, 1.442695
    %v4234 = vpow.pop %v4233
    %v4235 = vmul.f32 %v4039, 1.442695
    %v4236 = vpow.pop %v4235
    %v4237 = vmul.f32 %v4040, 1.442695
    %v4238 = vpow.pop %v4237
    %v4239 = vmul.f32 %v4041, 1.442695
    %v4240 = vpow.pop %v4239
    %v4241 = vmul.f32 %v4042, 1.442695
    %v4242 = vpow.pop %v4241
    %v4243 = vmul.f32 %v4043, 1.442695
    %v4244 = vpow.pop %v4243
    %v4245 = vmul.f32 %v4044, 1.442695
    %v4246 = vpow.pop %v4245
    %v4247 = vmul.f32 %v4045, 1.442695
    %v4248 = vpow.pop %v4247
    %v4249 = vmul.f32 %v4046, 1.442695
    %v4250 = vpow.pop %v4249
    %v4251 = vmul.f32 %v4047, 1.442695
    %v4252 = vpow.pop %v4251
    %v4253 = vmul.f32 %v4048, 1.442695
    %v4254 = vpow.pop %v4253
    %v4255 = vmul.f32 %v4049, 1.442695
    %v4256 = vpow.pop %v4255
    %v4257 = vmul.f32 %v4050, 1.442695
    %v4258 = vpow.pop %v4257
    %v4259 = vmul.f32 %v4051, 1.442695
    %v4260 = vpow.pop %v4259
    %v4261 = vmul.f32 %v4052, 1.442695
    %v4262 = vpow.pop %v4261
    %v4263 = vmul.f32 %v4053, 1.442695
    %v4264 = vpow.pop %v4263
    %v4265 = vmul.f32 %v4054, 1.442695
    %v4266 = vpow.pop %v4265
    %v4267 = vmul.f32 %v4055, 1.442695
    %v4268 = vpow.pop %v4267
    %v4269 = vmul.f32 %v4056, 1.442695
    %v4270 = vpow.pop %v4269
    %v4271 = vmul.f32 %v4057, 1.442695
    %v4272 = vpow.pop %v4271
    %v4273 = vmul.f32 %v4058, 1.442695
    %v4274 = vpow.pop %v4273
    %v4275 = vmul.f32 %v4059, 1.442695
    %v4276 = vpow.pop %v4275
    %v4277 = vmul.f32 %v4060, 1.442695
    %v4278 = vpow.pop %v4277
    %v4279 = vmul.f32 %v4061, 1.442695
    %v4280 = vpow.pop %v4279
    %v4281 = vmul.f32 %v4062, 1.442695
    %v4282 = vpow.pop %v4281
    %v4283 = vmul.f32 %v4063, 1.442695
    %v4284 = vpow.pop %v4283
    %v4285 = vmul.f32 %v4064, 1.442695
    %v4286 = vpow.pop %v4285
    %v4287 = vmul.f32 %v4065, 1.442695
    %v4288 = vpow.pop %v4287
    %v4289 = vmul.f32 %v4066, 1.442695
    %v4290 = vpow.pop %v4289
    %v4291 = vmul.f32 %v4067, 1.442695
    %v4292 = vpow.pop %v4291
    %v4293 = vmul.f32 %v4068, 1.442695
    %v4294 = vpow.pop %v4293
    %v4295 = vmul.f32 %v4069, 1.442695
    %v4296 = vpow.pop %v4295
    %v4297 = vmul.f32 %v4070, 1.442695
    %v4298 = vpow.pop %v4297
    %v4299 = vmul.f32 %v4071, 1.442695
    %v4300 = vpow.pop %v4299
    %v4301 = vmul.f32 %v4072, 1.442695
    %v4302 = vpow.pop %v4301
    %v4303 = vmul.f32 %v4073, 1.442695
    %v4304 = vpow.pop %v4303
    %v4305 = vmul.f32 %v4074, 1.442695
    %v4306 = vpow.pop %v4305
    %v4307 = vmul.f32 %v4075, 1.442695
    %v4308 = vpow.pop %v4307
    %v4309 = vmul.f32 %v4076, 1.442695
    %v4310 = vpow.pop %v4309
    %v4311 = vmul.f32 %v4077, 1.442695
    %v4312 = vpow.pop %v4311
    %v4313 = vmul.f32 %v4078, 1.442695
    %v4314 = vpow.pop %v4313
    %v4315 = vmul.f32 %v4079, 1.442695
    %v4316 = vpow.pop %v4315
    %v4317 = vmul.f32 %v4080, 1.442695
    %v4318 = vpow.pop %v4317
    %v4319 = vmul.f32 %v4081, 1.442695
    %v4320 = vpow.pop %v4319
    %v4321 = vmul.f32 %v4082, 1.442695
    %v4322 = vpow.pop %v4321
    %v4323 = vmul.f32 %v4083, 1.442695
    %v4324 = vpow.pop %v4323
    %v4325 = vmul.f32 %v4084, 1.442695
    %v4326 = vpow.pop %v4325
    %v4327 = vmul.f32 %v4085, 1.442695
    %v4328 = vpow.pop %v4327
    %v4329 = vmul.f32 %v4086, 1.442695
    %v4330 = vpow.pop %v4329
    %v4331 = vmul.f32 %v4087, 1.442695
    %v4332 = vpow.pop %v4331
    %v4333 = vmul.f32 %v4088, 1.442695
    %v4334 = vpow.pop %v4333
    %v4335 = vmul.f32 %v4089, 1.442695
    %v4336 = vpow.pop %v4335
    %v4337 = vmul.f32 %v4090, 1.442695
    %v4338 = vpow.pop %v4337
    %v4339 = vmul.f32 %v4091, 1.442695
    %v4340 = vpow.pop %v4339
    %v4341 = vmul.f32 %v4092, 1.442695
    %v4342 = vpow.pop %v4341
    %v4343 = vmul.f32 %v4093, 1.442695
    %v4344 = vpow.pop %v4343
    %v4345 = vmul.f32 %v4094, 1.442695
    %v4346 = vpow.pop %v4345
    %v4347 = vmul.f32 %v4095, 1.442695
    %v4348 = vpow.pop %v4347
    %v4349 = vmul.f32 %v4096, 1.442695
    %v4350 = vpow.pop %v4349
    %v4351 = vmul.f32 %v4097, 1.442695
    %v4352 = vpow.pop %v4351
    %v4353 = vmul.f32 %v4098, 1.442695
    %v4354 = vpow.pop %v4353
    %v4355 = vld [vmem:[%s3] sm:$0xff]
    %v4356 = vld [vmem:[%s3 + $0x8] sm:$0xff]
    %v4357 = vld [vmem:[%s3 + $0x10] sm:$0xff]
    %v4358 = vld [vmem:[%s3 + $0x18] sm:$0xff]
    %v4359 = vld [vmem:[%s3 + $0x20] sm:$0xff]
    %v4360 = vld [vmem:[%s3 + $0x28] sm:$0xff]
    %v4361 = vld [vmem:[%s3 + $0x30] sm:$0xff]
    %v4362 = vld [vmem:[%s3 + $0x38] sm:$0xff]
    %v4363 = vld [vmem:[%s3 + $0x40] sm:$0xff]
    %v4364 = vld [vmem:[%s3 + $0x48] sm:$0xff]
    %v4365 = vld [vmem:[%s3 + $0x50] sm:$0xff]
    %v4366 = vld [vmem:[%s3 + $0x58] sm:$0xff]
    %v4367 = vld [vmem:[%s3 + $0x60] sm:$0xff]
    %v4368 = vld [vmem:[%s3 + $0x68] sm:$0xff]
    %v4369 = vld [vmem:[%s3 + $0x70] sm:$0xff]
    %v4370 = vld [vmem:[%s3 + $0x78] sm:$0xff]
    %v4371 = vld [vmem:[%s3 + $0x80] sm:$0xff]
    %v4372 = vld [vmem:[%s3 + $0x88] sm:$0xff]
    %v4373 = vld [vmem:[%s3 + $0x90] sm:$0xff]
    %v4374 = vld [vmem:[%s3 + $0x98] sm:$0xff]
    %v4375 = vld [vmem:[%s3 + $0xa0] sm:$0xff]
    %v4376 = vld [vmem:[%s3 + $0xa8] sm:$0xff]
    %v4377 = vld [vmem:[%s3 + $0xb0] sm:$0xff]
    %v4378 = vld [vmem:[%s3 + $0xb8] sm:$0xff]
    %v4379 = vld [vmem:[%s3 + $0xc0] sm:$0xff]
    %v4380 = vld [vmem:[%s3 + $0xc8] sm:$0xff]
    %v4381 = vld [vmem:[%s3 + $0xd0] sm:$0xff]
    %v4382 = vld [vmem:[%s3 + $0xd8] sm:$0xff]
    %v4383 = vld [vmem:[%s3 + $0xe0] sm:$0xff]
    %v4384 = vld [vmem:[%s3 + $0xe8] sm:$0xff]
    %v4385 = vld [vmem:[%s3 + $0xf0] sm:$0xff]
    %v4386 = vld [vmem:[%s3 + $0xf8] sm:$0xff]
    %v4387 = vld [vmem:[%s3 + $0x100] sm:$0xff]
    %v4388 = vld [vmem:[%s3 + $0x108] sm:$0xff]
    %v4389 = vld [vmem:[%s3 + $0x110] sm:$0xff]
    %v4390 = vld [vmem:[%s3 + $0x118] sm:$0xff]
    %v4391 = vld [vmem:[%s3 + $0x120] sm:$0xff]
    %v4392 = vld [vmem:[%s3 + $0x128] sm:$0xff]
    %v4393 = vld [vmem:[%s3 + $0x130] sm:$0xff]
    %v4394 = vld [vmem:[%s3 + $0x138] sm:$0xff]
    %v4395 = vld [vmem:[%s3 + $0x140] sm:$0xff]
    %v4396 = vld [vmem:[%s3 + $0x148] sm:$0xff]
    %v4397 = vld [vmem:[%s3 + $0x150] sm:$0xff]
    %v4398 = vld [vmem:[%s3 + $0x158] sm:$0xff]
    %v4399 = vld [vmem:[%s3 + $0x160] sm:$0xff]
    %v4400 = vld [vmem:[%s3 + $0x168] sm:$0xff]
    %v4401 = vld [vmem:[%s3 + $0x170] sm:$0xff]
    %v4402 = vld [vmem:[%s3 + $0x178] sm:$0xff]
    %v4403 = vld [vmem:[%s3 + $0x180] sm:$0xff]
    %v4404 = vld [vmem:[%s3 + $0x188] sm:$0xff]
    %v4405 = vld [vmem:[%s3 + $0x190] sm:$0xff]
    %v4406 = vld [vmem:[%s3 + $0x198] sm:$0xff]
    %v4407 = vld [vmem:[%s3 + $0x1a0] sm:$0xff]
    %v4408 = vld [vmem:[%s3 + $0x1a8] sm:$0xff]
    %v4409 = vld [vmem:[%s3 + $0x1b0] sm:$0xff]
    %v4410 = vld [vmem:[%s3 + $0x1b8] sm:$0xff]
    %v4411 = vld [vmem:[%s3 + $0x1c0] sm:$0xff]
    %v4412 = vld [vmem:[%s3 + $0x1c8] sm:$0xff]
    %v4413 = vld [vmem:[%s3 + $0x1d0] sm:$0xff]
    %v4414 = vld [vmem:[%s3 + $0x1d8] sm:$0xff]
    %v4415 = vld [vmem:[%s3 + $0x1e0] sm:$0xff]
    %v4416 = vld [vmem:[%s3 + $0x1e8] sm:$0xff]
    %v4417 = vld [vmem:[%s3 + $0x1f0] sm:$0xff]
    %v4418 = vld [vmem:[%s3 + $0x1f8] sm:$0xff]
    %v4419 = vld [vmem:[%s4] sm:$0x1]
    %v4421 = vperm.slane %v4419, 0
    %4551 = vset.pattern.permute.xlu0 0
    %4552 = vperm.xlu0 %4551, %v4100
    %v4553 = vpop.permute.xlu0 %4552
    %4554 = vset.pattern.permute.xlu0 0
    %4555 = vperm.xlu0 %4554, %v4102
    %v4556 = vpop.permute.xlu0 %4555
    %4557 = vset.pattern.permute.xlu0 0
    %4558 = vperm.xlu0 %4557, %v4104
    %v4559 = vpop.permute.xlu0 %4558
    %4560 = vset.pattern.permute.xlu0 0
    %4561 = vperm.xlu0 %4560, %v4106
    %v4562 = vpop.permute.xlu0 %4561
    %4563 = vset.pattern.permute.xlu0 0
    %4564 = vperm.xlu0 %4563, %v4108
    %v4565 = vpop.permute.xlu0 %4564
    %4566 = vset.pattern.permute.xlu0 0
    %4567 = vperm.xlu0 %4566, %v4110
    %v4568 = vpop.permute.xlu0 %4567
    %4569 = vset.pattern.permute.xlu0 0
    %4570 = vperm.xlu0 %4569, %v4112
    %v4571 = vpop.permute.xlu0 %4570
    %4572 = vset.pattern.permute.xlu0 0
    %4573 = vperm.xlu0 %4572, %v4114
    %v4574 = vpop.permute.xlu0 %4573
    %4575 = vset.pattern.permute.xlu0 0
    %4576 = vperm.xlu0 %4575, %v4116
    %v4577 = vpop.permute.xlu0 %4576
    %4578 = vset.pattern.permute.xlu0 0
    %4579 = vperm.xlu0 %4578, %v4118
    %v4580 = vpop.permute.xlu0 %4579
    %4581 = vset.pattern.permute.xlu0 0
    %4582 = vperm.xlu0 %4581, %v4120
    %v4583 = vpop.permute.xlu0 %4582
    %4584 = vset.pattern.permute.xlu0 0
    %4585 = vperm.xlu0 %4584, %v4122
    %v4586 = vpop.permute.xlu0 %4585
    %4587 = vset.pattern.permute.xlu0 0
    %4588 = vperm.xlu0 %4587, %v4124
    %v4589 = vpop.permute.xlu0 %4588
    %4590 = vset.pattern.permute.xlu0 0
    %4591 = vperm.xlu0 %4590, %v4126
    %v4592 = vpop.permute.xlu0 %4591
    %4593 = vset.pattern.permute.xlu0 0
    %4594 = vperm.xlu0 %4593, %v4128
    %v4595 = vpop.permute.xlu0 %4594
    %4596 = vset.pattern.permute.xlu0 0
    %4597 = vperm.xlu0 %4596, %v4130
    %v4598 = vpop.permute.xlu0 %4597
    %4599 = vset.pattern.permute.xlu0 0
    %4600 = vperm.xlu0 %4599, %v4132
    %v4601 = vpop.permute.xlu0 %4600
    %4602 = vset.pattern.permute.xlu0 0
    %4603 = vperm.xlu0 %4602, %v4134
    %v4604 = vpop.permute.xlu0 %4603
    %4605 = vset.pattern.permute.xlu0 0
    %4606 = vperm.xlu0 %4605, %v4136
    %v4607 = vpop.permute.xlu0 %4606
    %4608 = vset.pattern.permute.xlu0 0
    %4609 = vperm.xlu0 %4608, %v4138
    %v4610 = vpop.permute.xlu0 %4609
    %4611 = vset.pattern.permute.xlu0 0
    %4612 = vperm.xlu0 %4611, %v4140
    %v4613 = vpop.permute.xlu0 %4612
    %4614 = vset.pattern.permute.xlu0 0
    %4615 = vperm.xlu0 %4614, %v4142
    %v4616 = vpop.permute.xlu0 %4615
    %4617 = vset.pattern.permute.xlu0 0
    %4618 = vperm.xlu0 %4617, %v4144
    %v4619 = vpop.permute.xlu0 %4618
    %4620 = vset.pattern.permute.xlu0 0
    %4621 = vperm.xlu0 %4620, %v4146
    %v4622 = vpop.permute.xlu0 %4621
    %4623 = vset.pattern.permute.xlu0 0
    %4624 = vperm.xlu0 %4623, %v4148
    %v4625 = vpop.permute.xlu0 %4624
    %4626 = vset.pattern.permute.xlu0 0
    %4627 = vperm.xlu0 %4626, %v4150
    %v4628 = vpop.permute.xlu0 %4627
    %4629 = vset.pattern.permute.xlu0 0
    %4630 = vperm.xlu0 %4629, %v4152
    %v4631 = vpop.permute.xlu0 %4630
    %4632 = vset.pattern.permute.xlu0 0
    %4633 = vperm.xlu0 %4632, %v4154
    %v4634 = vpop.permute.xlu0 %4633
    %4635 = vset.pattern.permute.xlu0 0
    %4636 = vperm.xlu0 %4635, %v4156
    %v4637 = vpop.permute.xlu0 %4636
    %4638 = vset.pattern.permute.xlu0 0
    %4639 = vperm.xlu0 %4638, %v4158
    %v4640 = vpop.permute.xlu0 %4639
    %4641 = vset.pattern.permute.xlu0 0
    %4642 = vperm.xlu0 %4641, %v4160
    %v4643 = vpop.permute.xlu0 %4642
    %4644 = vset.pattern.permute.xlu0 0
    %4645 = vperm.xlu0 %4644, %v4162
    %v4646 = vpop.permute.xlu0 %4645
    %4647 = vset.pattern.permute.xlu0 0
    %4648 = vperm.xlu0 %4647, %v4164
    %v4649 = vpop.permute.xlu0 %4648
    %4650 = vset.pattern.permute.xlu0 0
    %4651 = vperm.xlu0 %4650, %v4166
    %v4652 = vpop.permute.xlu0 %4651
    %4653 = vset.pattern.permute.xlu0 0
    %4654 = vperm.xlu0 %4653, %v4168
    %v4655 = vpop.permute.xlu0 %4654
    %4656 = vset.pattern.permute.xlu0 0
    %4657 = vperm.xlu0 %4656, %v4170
    %v4658 = vpop.permute.xlu0 %4657
    %4659 = vset.pattern.permute.xlu0 0
    %4660 = vperm.xlu0 %4659, %v4172
    %v4661 = vpop.permute.xlu0 %4660
    %4662 = vset.pattern.permute.xlu0 0
    %4663 = vperm.xlu0 %4662, %v4174
    %v4664 = vpop.permute.xlu0 %4663
    %4665 = vset.pattern.permute.xlu0 0
    %4666 = vperm.xlu0 %4665, %v4176
    %v4667 = vpop.permute.xlu0 %4666
    %4668 = vset.pattern.permute.xlu0 0
    %4669 = vperm.xlu0 %4668, %v4178
    %v4670 = vpop.permute.xlu0 %4669
    %4671 = vset.pattern.permute.xlu0 0
    %4672 = vperm.xlu0 %4671, %v4180
    %v4673 = vpop.permute.xlu0 %4672
    %4674 = vset.pattern.permute.xlu0 0
    %4675 = vperm.xlu0 %4674, %v4182
    %v4676 = vpop.permute.xlu0 %4675
    %4677 = vset.pattern.permute.xlu0 0
    %4678 = vperm.xlu0 %4677, %v4184
    %v4679 = vpop.permute.xlu0 %4678
    %4680 = vset.pattern.permute.xlu0 0
    %4681 = vperm.xlu0 %4680, %v4186
    %v4682 = vpop.permute.xlu0 %4681
    %4683 = vset.pattern.permute.xlu0 0
    %4684 = vperm.xlu0 %4683, %v4188
    %v4685 = vpop.permute.xlu0 %4684
    %4686 = vset.pattern.permute.xlu0 0
    %4687 = vperm.xlu0 %4686, %v4190
    %v4688 = vpop.permute.xlu0 %4687
    %4689 = vset.pattern.permute.xlu0 0
    %4690 = vperm.xlu0 %4689, %v4192
    %v4691 = vpop.permute.xlu0 %4690
    %4692 = vset.pattern.permute.xlu0 0
    %4693 = vperm.xlu0 %4692, %v4194
    %v4694 = vpop.permute.xlu0 %4693
    %4695 = vset.pattern.permute.xlu0 0
    %4696 = vperm.xlu0 %4695, %v4196
    %v4697 = vpop.permute.xlu0 %4696
    %4698 = vset.pattern.permute.xlu0 0
    %4699 = vperm.xlu0 %4698, %v4198
    %v4700 = vpop.permute.xlu0 %4699
    %4701 = vset.pattern.permute.xlu0 0
    %4702 = vperm.xlu0 %4701, %v4200
    %v4703 = vpop.permute.xlu0 %4702
    %4704 = vset.pattern.permute.xlu0 0
    %4705 = vperm.xlu0 %4704, %v4202
    %v4706 = vpop.permute.xlu0 %4705
    %4707 = vset.pattern.permute.xlu0 0
    %4708 = vperm.xlu0 %4707, %v4204
    %v4709 = vpop.permute.xlu0 %4708
    %4710 = vset.pattern.permute.xlu0 0
    %4711 = vperm.xlu0 %4710, %v4206
    %v4712 = vpop.permute.xlu0 %4711
    %4713 = vset.pattern.permute.xlu0 0
    %4714 = vperm.xlu0 %4713, %v4208
    %v4715 = vpop.permute.xlu0 %4714
    %4716 = vset.pattern.permute.xlu0 0
    %4717 = vperm.xlu0 %4716, %v4210
    %v4718 = vpop.permute.xlu0 %4717
    %4719 = vset.pattern.permute.xlu0 0
    %4720 = vperm.xlu0 %4719, %v4212
    %v4721 = vpop.permute.xlu0 %4720
    %4722 = vset.pattern.permute.xlu0 0
    %4723 = vperm.xlu0 %4722, %v4214
    %v4724 = vpop.permute.xlu0 %4723
    %4725 = vset.pattern.permute.xlu0 0
    %4726 = vperm.xlu0 %4725, %v4216
    %v4727 = vpop.permute.xlu0 %4726
    %4728 = vset.pattern.permute.xlu0 0
    %4729 = vperm.xlu0 %4728, %v4218
    %v4730 = vpop.permute.xlu0 %4729
    %4731 = vset.pattern.permute.xlu0 0
    %4732 = vperm.xlu0 %4731, %v4220
    %v4733 = vpop.permute.xlu0 %4732
    %4734 = vset.pattern.permute.xlu0 0
    %4735 = vperm.xlu0 %4734, %v4222
    %v4736 = vpop.permute.xlu0 %4735
    %4737 = vset.pattern.permute.xlu0 0
    %4738 = vperm.xlu0 %4737, %v4224
    %v4739 = vpop.permute.xlu0 %4738
    %4740 = vset.pattern.permute.xlu0 0
    %4741 = vperm.xlu0 %4740, %v4226
    %v4742 = vpop.permute.xlu0 %4741
    %4743 = vset.pattern.permute.xlu0 0
    %4744 = vperm.xlu0 %4743, %v4228
    %v4745 = vpop.permute.xlu0 %4744
    %4746 = vset.pattern.permute.xlu0 0
    %4747 = vperm.xlu0 %4746, %v4230
    %v4748 = vpop.permute.xlu0 %4747
    %4749 = vset.pattern.permute.xlu0 0
    %4750 = vperm.xlu0 %4749, %v4232
    %v4751 = vpop.permute.xlu0 %4750
    %4752 = vset.pattern.permute.xlu0 0
    %4753 = vperm.xlu0 %4752, %v4234
    %v4754 = vpop.permute.xlu0 %4753
    %4755 = vset.pattern.permute.xlu0 0
    %4756 = vperm.xlu0 %4755, %v4236
    %v4757 = vpop.permute.xlu0 %4756
    %4758 = vset.pattern.permute.xlu0 0
    %4759 = vperm.xlu0 %4758, %v4238
    %v4760 = vpop.permute.xlu0 %4759
    %4761 = vset.pattern.permute.xlu0 0
    %4762 = vperm.xlu0 %4761, %v4240
    %v4763 = vpop.permute.xlu0 %4762
    %4764 = vset.pattern.permute.xlu0 0
    %4765 = vperm.xlu0 %4764, %v4242
    %v4766 = vpop.permute.xlu0 %4765
    %4767 = vset.pattern.permute.xlu0 0
    %4768 = vperm.xlu0 %4767, %v4244
    %v4769 = vpop.permute.xlu0 %4768
    %4770 = vset.pattern.permute.xlu0 0
    %4771 = vperm.xlu0 %4770, %v4246
    %v4772 = vpop.permute.xlu0 %4771
    %4773 = vset.pattern.permute.xlu0 0
    %4774 = vperm.xlu0 %4773, %v4248
    %v4775 = vpop.permute.xlu0 %4774
    %4776 = vset.pattern.permute.xlu0 0
    %4777 = vperm.xlu0 %4776, %v4250
    %v4778 = vpop.permute.xlu0 %4777
    %4779 = vset.pattern.permute.xlu0 0
    %4780 = vperm.xlu0 %4779, %v4252
    %v4781 = vpop.permute.xlu0 %4780
    %4782 = vset.pattern.permute.xlu0 0
    %4783 = vperm.xlu0 %4782, %v4254
    %v4784 = vpop.permute.xlu0 %4783
    %4785 = vset.pattern.permute.xlu0 0
    %4786 = vperm.xlu0 %4785, %v4256
    %v4787 = vpop.permute.xlu0 %4786
    %4788 = vset.pattern.permute.xlu0 0
    %4789 = vperm.xlu0 %4788, %v4258
    %v4790 = vpop.permute.xlu0 %4789
    %4791 = vset.pattern.permute.xlu0 0
    %4792 = vperm.xlu0 %4791, %v4260
    %v4793 = vpop.permute.xlu0 %4792
    %4794 = vset.pattern.permute.xlu0 0
    %4795 = vperm.xlu0 %4794, %v4262
    %v4796 = vpop.permute.xlu0 %4795
    %4797 = vset.pattern.permute.xlu0 0
    %4798 = vperm.xlu0 %4797, %v4264
    %v4799 = vpop.permute.xlu0 %4798
    %4800 = vset.pattern.permute.xlu0 0
    %4801 = vperm.xlu0 %4800, %v4266
    %v4802 = vpop.permute.xlu0 %4801
    %4803 = vset.pattern.permute.xlu0 0
    %4804 = vperm.xlu0 %4803, %v4268
    %v4805 = vpop.permute.xlu0 %4804
    %4806 = vset.pattern.permute.xlu0 0
    %4807 = vperm.xlu0 %4806, %v4270
    %v4808 = vpop.permute.xlu0 %4807
    %4809 = vset.pattern.permute.xlu0 0
    %4810 = vperm.xlu0 %4809, %v4272
    %v4811 = vpop.permute.xlu0 %4810
    %4812 = vset.pattern.permute.xlu0 0
    %4813 = vperm.xlu0 %4812, %v4274
    %v4814 = vpop.permute.xlu0 %4813
    %4815 = vset.pattern.permute.xlu0 0
    %4816 = vperm.xlu0 %4815, %v4276
    %v4817 = vpop.permute.xlu0 %4816
    %4818 = vset.pattern.permute.xlu0 0
    %4819 = vperm.xlu0 %4818, %v4278
    %v4820 = vpop.permute.xlu0 %4819
    %4821 = vset.pattern.permute.xlu0 0
    %4822 = vperm.xlu0 %4821, %v4280
    %v4823 = vpop.permute.xlu0 %4822
    %4824 = vset.pattern.permute.xlu0 0
    %4825 = vperm.xlu0 %4824, %v4282
    %v4826 = vpop.permute.xlu0 %4825
    %4827 = vset.pattern.permute.xlu0 0
    %4828 = vperm.xlu0 %4827, %v4284
    %v4829 = vpop.permute.xlu0 %4828
    %4830 = vset.pattern.permute.xlu0 0
    %4831 = vperm.xlu0 %4830, %v4286
    %v4832 = vpop.permute.xlu0 %4831
    %4833 = vset.pattern.permute.xlu0 0
    %4834 = vperm.xlu0 %4833, %v4288
    %v4835 = vpop.permute.xlu0 %4834
    %4836 = vset.pattern.permute.xlu0 0
    %4837 = vperm.xlu0 %4836, %v4290
    %v4838 = vpop.permute.xlu0 %4837
    %4839 = vset.pattern.permute.xlu0 0
    %4840 = vperm.xlu0 %4839, %v4292
    %v4841 = vpop.permute.xlu0 %4840
    %4842 = vset.pattern.permute.xlu0 0
    %4843 = vperm.xlu0 %4842, %v4294
    %v4844 = vpop.permute.xlu0 %4843
    %4845 = vset.pattern.permute.xlu0 0
    %4846 = vperm.xlu0 %4845, %v4296
    %v4847 = vpop.permute.xlu0 %4846
    %4848 = vset.pattern.permute.xlu0 0
    %4849 = vperm.xlu0 %4848, %v4298
    %v4850 = vpop.permute.xlu0 %4849
    %4851 = vset.pattern.permute.xlu0 0
    %4852 = vperm.xlu0 %4851, %v4300
    %v4853 = vpop.permute.xlu0 %4852
    %4854 = vset.pattern.permute.xlu0 0
    %4855 = vperm.xlu0 %4854, %v4302
    %v4856 = vpop.permute.xlu0 %4855
    %4857 = vset.pattern.permute.xlu0 0
    %4858 = vperm.xlu0 %4857, %v4304
    %v4859 = vpop.permute.xlu0 %4858
    %4860 = vset.pattern.permute.xlu0 0
    %4861 = vperm.xlu0 %4860, %v4306
    %v4862 = vpop.permute.xlu0 %4861
    %4863 = vset.pattern.permute.xlu0 0
    %4864 = vperm.xlu0 %4863, %v4308
    %v4865 = vpop.permute.xlu0 %4864
    %4866 = vset.pattern.permute.xlu0 0
    %4867 = vperm.xlu0 %4866, %v4310
    %v4868 = vpop.permute.xlu0 %4867
    %4869 = vset.pattern.permute.xlu0 0
    %4870 = vperm.xlu0 %4869, %v4312
    %v4871 = vpop.permute.xlu0 %4870
    %4872 = vset.pattern.permute.xlu0 0
    %4873 = vperm.xlu0 %4872, %v4314
    %v4874 = vpop.permute.xlu0 %4873
    %4875 = vset.pattern.permute.xlu0 0
    %4876 = vperm.xlu0 %4875, %v4316
    %v4877 = vpop.permute.xlu0 %4876
    %4878 = vset.pattern.permute.xlu0 0
    %4879 = vperm.xlu0 %4878, %v4318
    %v4880 = vpop.permute.xlu0 %4879
    %4881 = vset.pattern.permute.xlu0 0
    %4882 = vperm.xlu0 %4881, %v4320
    %v4883 = vpop.permute.xlu0 %4882
    %4884 = vset.pattern.permute.xlu0 0
    %4885 = vperm.xlu0 %4884, %v4322
    %v4886 = vpop.permute.xlu0 %4885
    %4887 = vset.pattern.permute.xlu0 0
    %4888 = vperm.xlu0 %4887, %v4324
    %v4889 = vpop.permute.xlu0 %4888
    %4890 = vset.pattern.permute.xlu0 0
    %4891 = vperm.xlu0 %4890, %v4326
    %v4892 = vpop.permute.xlu0 %4891
    %4893 = vset.pattern.permute.xlu0 0
    %4894 = vperm.xlu0 %4893, %v4328
    %v4895 = vpop.permute.xlu0 %4894
    %4896 = vset.pattern.permute.xlu0 0
    %4897 = vperm.xlu0 %4896, %v4330
    %v4898 = vpop.permute.xlu0 %4897
    %4899 = vset.pattern.permute.xlu0 0
    %4900 = vperm.xlu0 %4899, %v4332
    %v4901 = vpop.permute.xlu0 %4900
    %4902 = vset.pattern.permute.xlu0 0
    %4903 = vperm.xlu0 %4902, %v4334
    %v4904 = vpop.permute.xlu0 %4903
    %4905 = vset.pattern.permute.xlu0 0
    %4906 = vperm.xlu0 %4905, %v4336
    %v4907 = vpop.permute.xlu0 %4906
    %4908 = vset.pattern.permute.xlu0 0
    %4909 = vperm.xlu0 %4908, %v4338
    %v4910 = vpop.permute.xlu0 %4909
    %4911 = vset.pattern.permute.xlu0 0
    %4912 = vperm.xlu0 %4911, %v4340
    %v4913 = vpop.permute.xlu0 %4912
    %4914 = vset.pattern.permute.xlu0 0
    %4915 = vperm.xlu0 %4914, %v4342
    %v4916 = vpop.permute.xlu0 %4915
    %4917 = vset.pattern.permute.xlu0 0
    %4918 = vperm.xlu0 %4917, %v4344
    %v4919 = vpop.permute.xlu0 %4918
    %4920 = vset.pattern.permute.xlu0 0
    %4921 = vperm.xlu0 %4920, %v4346
    %v4922 = vpop.permute.xlu0 %4921
    %4923 = vset.pattern.permute.xlu0 0
    %4924 = vperm.xlu0 %4923, %v4348
    %v4925 = vpop.permute.xlu0 %4924
    %4926 = vset.pattern.permute.xlu0 0
    %4927 = vperm.xlu0 %4926, %v4350
    %v4928 = vpop.permute.xlu0 %4927
    %4929 = vset.pattern.permute.xlu0 0
    %4930 = vperm.xlu0 %4929, %v4352
    %v4931 = vpop.permute.xlu0 %4930
    %4932 = vset.pattern.permute.xlu0 0
    %4933 = vperm.xlu0 %4932, %v4354
    %v4934 = vpop.permute.xlu0 %4933
    %v4935 = vlaneseq
    %v4936 = vand.u32 %v4935, 127
    %v4937 = vperm.slane %v4553, %v4936
    %v4938 = vadd.s32 %v4936, 4294967288
    %v4939 = vperm.slane %v4556, %v4938
    %vm4940 = vcmask 130112
    %v4941 = vsel %vm4940, %v4939, %v4937
    %v4942 = vadd.s32 %v4936, 4294967280
    %v4943 = vperm.slane %v4559, %v4942
    %vm4944 = vcmask 195712
    %v4945 = vsel %vm4944, %v4943, %v4941
    %v4946 = vadd.s32 %v4936, 4294967272
    %v4947 = vperm.slane %v4562, %v4946
    %vm4948 = vcmask 261312
    %v4949 = vsel %vm4948, %v4947, %v4945
    %v4950 = vadd.s32 %v4936, 4294967264
    %v4951 = vperm.slane %v4565, %v4950
    %vm4952 = vcmask 326912
    %v4953 = vsel %vm4952, %v4951, %v4949
    %v4954 = vadd.s32 %v4936, 4294967256
    %v4955 = vperm.slane %v4568, %v4954
    %vm4956 = vcmask 392512
    %v4957 = vsel %vm4956, %v4955, %v4953
    %v4958 = vadd.s32 %v4936, 4294967248
    %v4959 = vperm.slane %v4571, %v4958
    %vm4960 = vcmask 458112
    %v4961 = vsel %vm4960, %v4959, %v4957
    %v4962 = vadd.s32 %v4936, 4294967240
    %v4963 = vperm.slane %v4574, %v4962
    %vm4964 = vcmask 523712
    %v4965 = vsel %vm4964, %v4963, %v4961
    %v4966 = vadd.s32 %v4936, 4294967232
    %v4967 = vperm.slane %v4577, %v4966
    %vm4968 = vcmask 589312
    %v4969 = vsel %vm4968, %v4967, %v4965
    %v4970 = vadd.s32 %v4936, 4294967224
    %v4971 = vperm.slane %v4580, %v4970
    %vm4972 = vcmask 654912
    %v4973 = vsel %vm4972, %v4971, %v4969
    %v4974 = vadd.s32 %v4936, 4294967216
    %v4975 = vperm.slane %v4583, %v4974
    %vm4976 = vcmask 720512
    %v4977 = vsel %vm4976, %v4975, %v4973
    %v4978 = vadd.s32 %v4936, 4294967208
    %v4979 = vperm.slane %v4586, %v4978
    %vm4980 = vcmask 786112
    %v4981 = vsel %vm4980, %v4979, %v4977
    %v4982 = vadd.s32 %v4936, 4294967200
    %v4983 = vperm.slane %v4589, %v4982
    %vm4984 = vcmask 851712
    %v4985 = vsel %vm4984, %v4983, %v4981
    %v4986 = vadd.s32 %v4936, 4294967192
    %v4987 = vperm.slane %v4592, %v4986
    %vm4988 = vcmask 917312
    %v4989 = vsel %vm4988, %v4987, %v4985
    %v4990 = vadd.s32 %v4936, 4294967184
    %v4991 = vperm.slane %v4595, %v4990
    %vm4992 = vcmask 982912
    %v4993 = vsel %vm4992, %v4991, %v4989
    %v4994 = vadd.s32 %v4936, 4294967176
    %v4995 = vperm.slane %v4598, %v4994
    %vm4996 = vcmask 1048512
    %v4997 = vsel %vm4996, %v4995, %v4993
    %v4998 = vperm.slane %v4601, %v4936
    %v4999 = vperm.slane %v4604, %v4938
    %v5000 = vsel %vm4940, %v4999, %v4998
    %v5001 = vperm.slane %v4607, %v4942
    %v5002 = vsel %vm4944, %v5001, %v5000
    %v5003 = vperm.slane %v4610, %v4946
    %v5004 = vsel %vm4948, %v5003, %v5002
    %v5005 = vperm.slane %v4613, %v4950
    %v5006 = vsel %vm4952, %v5005, %v5004
    %v5007 = vperm.slane %v4616, %v4954
    %v5008 = vsel %vm4956, %v5007, %v5006
    %v5009 = vperm.slane %v4619, %v4958
    %v5010 = vsel %vm4960, %v5009, %v5008
    %v5011 = vperm.slane %v4622, %v4962
    %v5012 = vsel %vm4964, %v5011, %v5010
    %v5013 = vperm.slane %v4625, %v4966
    %v5014 = vsel %vm4968, %v5013, %v5012
    %v5015 = vperm.slane %v4628, %v4970
    %v5016 = vsel %vm4972, %v5015, %v5014
    %v5017 = vperm.slane %v4631, %v4974
    %v5018 = vsel %vm4976, %v5017, %v5016
    %v5019 = vperm.slane %v4634, %v4978
    %v5020 = vsel %vm4980, %v5019, %v5018
    %v5021 = vperm.slane %v4637, %v4982
    %v5022 = vsel %vm4984, %v5021, %v5020
    %v5023 = vperm.slane %v4640, %v4986
    %v5024 = vsel %vm4988, %v5023, %v5022
    %v5025 = vperm.slane %v4643, %v4990
    %v5026 = vsel %vm4992, %v5025, %v5024
    %v5027 = vperm.slane %v4646, %v4994
    %v5028 = vsel %vm4996, %v5027, %v5026
    %v5029 = vperm.slane %v4649, %v4936
    %v5030 = vperm.slane %v4652, %v4938
    %v5031 = vsel %vm4940, %v5030, %v5029
    %v5032 = vperm.slane %v4655, %v4942
    %v5033 = vsel %vm4944, %v5032, %v5031
    %v5034 = vperm.slane %v4658, %v4946
    %v5035 = vsel %vm4948, %v5034, %v5033
    %v5036 = vperm.slane %v4661, %v4950
    %v5037 = vsel %vm4952, %v5036, %v5035
    %v5038 = vperm.slane %v4664, %v4954
    %v5039 = vsel %vm4956, %v5038, %v5037
    %v5040 = vperm.slane %v4667, %v4958
    %v5041 = vsel %vm4960, %v5040, %v5039
    %v5042 = vperm.slane %v4670, %v4962
    %v5043 = vsel %vm4964, %v5042, %v5041
    %v5044 = vperm.slane %v4673, %v4966
    %v5045 = vsel %vm4968, %v5044, %v5043
    %v5046 = vperm.slane %v4676, %v4970
    %v5047 = vsel %vm4972, %v5046, %v5045
    %v5048 = vperm.slane %v4679, %v4974
    %v5049 = vsel %vm4976, %v5048, %v5047
    %v5050 = vperm.slane %v4682, %v4978
    %v5051 = vsel %vm4980, %v5050, %v5049
    %v5052 = vperm.slane %v4685, %v4982
    %v5053 = vsel %vm4984, %v5052, %v5051
    %v5054 = vperm.slane %v4688, %v4986
    %v5055 = vsel %vm4988, %v5054, %v5053
    %v5056 = vperm.slane %v4691, %v4990
    %v5057 = vsel %vm4992, %v5056, %v5055
    %v5058 = vperm.slane %v4694, %v4994
    %v5059 = vsel %vm4996, %v5058, %v5057
    %v5060 = vperm.slane %v4697, %v4936
    %v5061 = vperm.slane %v4700, %v4938
    %v5062 = vsel %vm4940, %v5061, %v5060
    %v5063 = vperm.slane %v4703, %v4942
    %v5064 = vsel %vm4944, %v5063, %v5062
    %v5065 = vperm.slane %v4706, %v4946
    %v5066 = vsel %vm4948, %v5065, %v5064
    %v5067 = vperm.slane %v4709, %v4950
    %v5068 = vsel %vm4952, %v5067, %v5066
    %v5069 = vperm.slane %v4712, %v4954
    %v5070 = vsel %vm4956, %v5069, %v5068
    %v5071 = vperm.slane %v4715, %v4958
    %v5072 = vsel %vm4960, %v5071, %v5070
    %v5073 = vperm.slane %v4718, %v4962
    %v5074 = vsel %vm4964, %v5073, %v5072
    %v5075 = vperm.slane %v4721, %v4966
    %v5076 = vsel %vm4968, %v5075, %v5074
    %v5077 = vperm.slane %v4724, %v4970
    %v5078 = vsel %vm4972, %v5077, %v5076
    %v5079 = vperm.slane %v4727, %v4974
    %v5080 = vsel %vm4976, %v5079, %v5078
    %v5081 = vperm.slane %v4730, %v4978
    %v5082 = vsel %vm4980, %v5081, %v5080
    %v5083 = vperm.slane %v4733, %v4982
    %v5084 = vsel %vm4984, %v5083, %v5082
    %v5085 = vperm.slane %v4736, %v4986
    %v5086 = vsel %vm4988, %v5085, %v5084
    %v5087 = vperm.slane %v4739, %v4990
    %v5088 = vsel %vm4992, %v5087, %v5086
    %v5089 = vperm.slane %v4742, %v4994
    %v5090 = vsel %vm4996, %v5089, %v5088
    %v5091 = vperm.slane %v4745, %v4936
    %v5092 = vperm.slane %v4748, %v4938
    %v5093 = vsel %vm4940, %v5092, %v5091
    %v5094 = vperm.slane %v4751, %v4942
    %v5095 = vsel %vm4944, %v5094, %v5093
    %v5096 = vperm.slane %v4754, %v4946
    %v5097 = vsel %vm4948, %v5096, %v5095
    %v5098 = vperm.slane %v4757, %v4950
    %v5099 = vsel %vm4952, %v5098, %v5097
    %v5100 = vperm.slane %v4760, %v4954
    %v5101 = vsel %vm4956, %v5100, %v5099
    %v5102 = vperm.slane %v4763, %v4958
    %v5103 = vsel %vm4960, %v5102, %v5101
    %v5104 = vperm.slane %v4766, %v4962
    %v5105 = vsel %vm4964, %v5104, %v5103
    %v5106 = vperm.slane %v4769, %v4966
    %v5107 = vsel %vm4968, %v5106, %v5105
    %v5108 = vperm.slane %v4772, %v4970
    %v5109 = vsel %vm4972, %v5108, %v5107
    %v5110 = vperm.slane %v4775, %v4974
    %v5111 = vsel %vm4976, %v5110, %v5109
    %v5112 = vperm.slane %v4778, %v4978
    %v5113 = vsel %vm4980, %v5112, %v5111
    %v5114 = vperm.slane %v4781, %v4982
    %v5115 = vsel %vm4984, %v5114, %v5113
    %v5116 = vperm.slane %v4784, %v4986
    %v5117 = vsel %vm4988, %v5116, %v5115
    %v5118 = vperm.slane %v4787, %v4990
    %v5119 = vsel %vm4992, %v5118, %v5117
    %v5120 = vperm.slane %v4790, %v4994
    %v5121 = vsel %vm4996, %v5120, %v5119
    %v5122 = vperm.slane %v4793, %v4936
    %v5123 = vperm.slane %v4796, %v4938
    %v5124 = vsel %vm4940, %v5123, %v5122
    %v5125 = vperm.slane %v4799, %v4942
    %v5126 = vsel %vm4944, %v5125, %v5124
    %v5127 = vperm.slane %v4802, %v4946
    %v5128 = vsel %vm4948, %v5127, %v5126
    %v5129 = vperm.slane %v4805, %v4950
    %v5130 = vsel %vm4952, %v5129, %v5128
    %v5131 = vperm.slane %v4808, %v4954
    %v5132 = vsel %vm4956, %v5131, %v5130
    %v5133 = vperm.slane %v4811, %v4958
    %v5134 = vsel %vm4960, %v5133, %v5132
    %v5135 = vperm.slane %v4814, %v4962
    %v5136 = vsel %vm4964, %v5135, %v5134
    %v5137 = vperm.slane %v4817, %v4966
    %v5138 = vsel %vm4968, %v5137, %v5136
    %v5139 = vperm.slane %v4820, %v4970
    %v5140 = vsel %vm4972, %v5139, %v5138
    %v5141 = vperm.slane %v4823, %v4974
    %v5142 = vsel %vm4976, %v5141, %v5140
    %v5143 = vperm.slane %v4826, %v4978
    %v5144 = vsel %vm4980, %v5143, %v5142
    %v5145 = vperm.slane %v4829, %v4982
    %v5146 = vsel %vm4984, %v5145, %v5144
    %v5147 = vperm.slane %v4832, %v4986
    %v5148 = vsel %vm4988, %v5147, %v5146
    %v5149 = vperm.slane %v4835, %v4990
    %v5150 = vsel %vm4992, %v5149, %v5148
    %v5151 = vperm.slane %v4838, %v4994
    %v5152 = vsel %vm4996, %v5151, %v5150
    %v5153 = vperm.slane %v4841, %v4936
    %v5154 = vperm.slane %v4844, %v4938
    %v5155 = vsel %vm4940, %v5154, %v5153
    %v5156 = vperm.slane %v4847, %v4942
    %v5157 = vsel %vm4944, %v5156, %v5155
    %v5158 = vperm.slane %v4850, %v4946
    %v5159 = vsel %vm4948, %v5158, %v5157
    %v5160 = vperm.slane %v4853, %v4950
    %v5161 = vsel %vm4952, %v5160, %v5159
    %v5162 = vperm.slane %v4856, %v4954
    %v5163 = vsel %vm4956, %v5162, %v5161
    %v5164 = vperm.slane %v4859, %v4958
    %v5165 = vsel %vm4960, %v5164, %v5163
    %v5166 = vperm.slane %v4862, %v4962
    %v5167 = vsel %vm4964, %v5166, %v5165
    %v5168 = vperm.slane %v4865, %v4966
    %v5169 = vsel %vm4968, %v5168, %v5167
    %v5170 = vperm.slane %v4868, %v4970
    %v5171 = vsel %vm4972, %v5170, %v5169
    %v5172 = vperm.slane %v4871, %v4974
    %v5173 = vsel %vm4976, %v5172, %v5171
    %v5174 = vperm.slane %v4874, %v4978
    %v5175 = vsel %vm4980, %v5174, %v5173
    %v5176 = vperm.slane %v4877, %v4982
    %v5177 = vsel %vm4984, %v5176, %v5175
    %v5178 = vperm.slane %v4880, %v4986
    %v5179 = vsel %vm4988, %v5178, %v5177
    %v5180 = vperm.slane %v4883, %v4990
    %v5181 = vsel %vm4992, %v5180, %v5179
    %v5182 = vperm.slane %v4886, %v4994
    %v5183 = vsel %vm4996, %v5182, %v5181
    %v5184 = vperm.slane %v4889, %v4936
    %v5185 = vperm.slane %v4892, %v4938
    %v5186 = vsel %vm4940, %v5185, %v5184
    %v5187 = vperm.slane %v4895, %v4942
    %v5188 = vsel %vm4944, %v5187, %v5186
    %v5189 = vperm.slane %v4898, %v4946
    %v5190 = vsel %vm4948, %v5189, %v5188
    %v5191 = vperm.slane %v4901, %v4950
    %v5192 = vsel %vm4952, %v5191, %v5190
    %v5193 = vperm.slane %v4904, %v4954
    %v5194 = vsel %vm4956, %v5193, %v5192
    %v5195 = vperm.slane %v4907, %v4958
    %v5196 = vsel %vm4960, %v5195, %v5194
    %v5197 = vperm.slane %v4910, %v4962
    %v5198 = vsel %vm4964, %v5197, %v5196
    %v5199 = vperm.slane %v4913, %v4966
    %v5200 = vsel %vm4968, %v5199, %v5198
    %v5201 = vperm.slane %v4916, %v4970
    %v5202 = vsel %vm4972, %v5201, %v5200
    %v5203 = vperm.slane %v4919, %v4974
    %v5204 = vsel %vm4976, %v5203, %v5202
    %v5205 = vperm.slane %v4922, %v4978
    %v5206 = vsel %vm4980, %v5205, %v5204
    %v5207 = vperm.slane %v4925, %v4982
    %v5208 = vsel %vm4984, %v5207, %v5206
    %v5209 = vperm.slane %v4928, %v4986
    %v5210 = vsel %vm4988, %v5209, %v5208
    %v5211 = vperm.slane %v4931, %v4990
    %v5212 = vsel %vm4992, %v5211, %v5210
    %v5213 = vperm.slane %v4934, %v4994
    %v5214 = vsel %vm4996, %v5213, %v5212
    %vm5215 = vcmask 1041409
    %v5216 = vsel %vm5215, %v5121, %v4997
    %v5217 = vsel %vm5215, %v5152, %v5028
    %v5218 = vsel %vm5215, %v5183, %v5059
    %v5219 = vsel %vm5215, %v5214, %v5090
    %5224 = vmatpush.msra.mxu0 %v4370
    %5225 = vmatpush.msra.mxu0 %v4369
    %5226 = vmatpush.msra.mxu0 %v4368
    %5227 = vmatpush.msra.mxu0 %v4367
    %5228 = vmatpush.msra.mxu0 %v4366
    %5229 = vmatpush.msra.mxu0 %v4365
    %5230 = vmatpush.msra.mxu0 %v4364
    %5231 = vmatpush.msra.mxu0 %v4363
    %5232 = vmatpush.msra.mxu0 %v4362
    %5233 = vmatpush.msra.mxu0 %v4361
    %5234 = vmatpush.msra.mxu0 %v4360
    %5235 = vmatpush.msra.mxu0 %v4359
    %5236 = vmatpush.msra.mxu0 %v4358
    %5237 = vmatpush.msra.mxu0 %v4357
    %5238 = vmatpush.msra.mxu0 %v4356
    %5239 = vmatpush.msra.mxu0 %v4355
    %5240 = vmatmul.f32.gmra.mxu0 %v5216
    %v5241 = vpop.f32.mrf.mxu0
    %v5242 = vadd.f32 %v4421, %v5241
    %5243 = vdwg.mxu0
    %5244 = vmatpush.msra.mxu0 %v4386
    %5245 = vmatpush.msra.mxu0 %v4385
    %5246 = vmatpush.msra.mxu0 %v4384
    %5247 = vmatpush.msra.mxu0 %v4383
    %5248 = vmatpush.msra.mxu0 %v4382
    %5249 = vmatpush.msra.mxu0 %v4381
    %5250 = vmatpush.msra.mxu0 %v4380
    %5251 = vmatpush.msra.mxu0 %v4379
    %5252 = vmatpush.msra.mxu0 %v4378
    %5253 = vmatpush.msra.mxu0 %v4377
    %5254 = vmatpush.msra.mxu0 %v4376
    %5255 = vmatpush.msra.mxu0 %v4375
    %5256 = vmatpush.msra.mxu0 %v4374
    %5257 = vmatpush.msra.mxu0 %v4373
    %5258 = vmatpush.msra.mxu0 %v4372
    %5259 = vmatpush.msra.mxu0 %v4371
    %5260 = vmatmul.f32.gmra.mxu0 %v5217
    %v5261 = vpop.f32.mrf.mxu0
    %v5262 = vadd.f32 %v5242, %v5261
    %5263 = vdwg.mxu0
    %5264 = vmatpush.msra.mxu0 %v4402
    %5265 = vmatpush.msra.mxu0 %v4401
    %5266 = vmatpush.msra.mxu0 %v4400
    %5267 = vmatpush.msra.mxu0 %v4399
    %5268 = vmatpush.msra.mxu0 %v4398
    %5269 = vmatpush.msra.mxu0 %v4397
    %5270 = vmatpush.msra.mxu0 %v4396
    %5271 = vmatpush.msra.mxu0 %v4395
    %5272 = vmatpush.msra.mxu0 %v4394
    %5273 = vmatpush.msra.mxu0 %v4393
    %5274 = vmatpush.msra.mxu0 %v4392
    %5275 = vmatpush.msra.mxu0 %v4391
    %5276 = vmatpush.msra.mxu0 %v4390
    %5277 = vmatpush.msra.mxu0 %v4389
    %5278 = vmatpush.msra.mxu0 %v4388
    %5279 = vmatpush.msra.mxu0 %v4387
    %5280 = vmatmul.f32.gmra.mxu0 %v5218
    %v5281 = vpop.f32.mrf.mxu0
    %v5282 = vadd.f32 %v5262, %v5281
    %5283 = vdwg.mxu0
    %5284 = vmatpush.msra.mxu0 %v4418
    %5285 = vmatpush.msra.mxu0 %v4417
    %5286 = vmatpush.msra.mxu0 %v4416
    %5287 = vmatpush.msra.mxu0 %v4415
    %5288 = vmatpush.msra.mxu0 %v4414
    %5289 = vmatpush.msra.mxu0 %v4413
    %5290 = vmatpush.msra.mxu0 %v4412
    %5291 = vmatpush.msra.mxu0 %v4411
    %5292 = vmatpush.msra.mxu0 %v4410
    %5293 = vmatpush.msra.mxu0 %v4409
    %5294 = vmatpush.msra.mxu0 %v4408
    %5295 = vmatpush.msra.mxu0 %v4407
    %5296 = vmatpush.msra.mxu0 %v4406
    %5297 = vmatpush.msra.mxu0 %v4405
    %5298 = vmatpush.msra.mxu0 %v4404
    %5299 = vmatpush.msra.mxu0 %v4403
    %5300 = vmatmul.f32.gmra.mxu0 %v5219
    %v5301 = vpop.f32.mrf.mxu0
    %v5302 = vadd.f32 %v5282, %v5301
    %5303 = vdwg.mxu0
    %v5304 = vmul.f32 %v5302, %v5302
    %vm5305 = vcmask 1041408
    %v5306 = vsel %vm5305, %v5304, 0.0
    %5307 = vadd.xlane.f32.xlu0 %v5306
    %v5308 = vpop.xlane.xlu0 %5307
    %v5309 = vmax.f32 %v5308, 1e-24
    %v5310 = vrsqrt.pop %v5309
    %v5311 = vmul.f32 %v5310, %v5309
    %v5312 = vmul.f32 %v5311, %v5310
    %v5313 = vmul.f32 0.5, %v5312
    %v5314 = vsub.f32 1.5, %v5313
    %v5315 = vmul.f32 %v5310, %v5314
    %vm5316 = vweird.f32 %v5309
    %vm5317 = vweird.f32 %v5310
    %vm5318 = vmor %vm5316, %vm5317
    %v5319 = vsel %vm5318, %v5310, %v5315
    %v5320 = vmul.f32 %v5302, %v5319
    %5321 = vst [vmem:[#allocation3] sm:$0x3] %v5320
    // Predicated region
    $region22: #{tpu_custom_call.1} parent=1 // pred_check
      _
    $region23: #{tpu_custom_call.1} parent=1 // pred_check_branch
      %5323 = sbr.rel (0) target = $region25
    $region24: #{tpu_custom_call.1} parent=1 // pred_region
      %5325 = vsyncadd [#allocation4], 0
      %s5327 = sshll.u32 [#allocation3], 4
      %s5328 = int_to_ptr.vmem [resolvable:$true] %s5327
      %s5329 = sshll.u32 %s5, 4
      %s5330 = int_to_ptr.hbm [resolvable:$true] %s5329
      %5332 = dma.vmem_to_hbm [thread:$0]  %s5328, 32, %s5330, [#allocation4]
    $region25: #{tpu_custom_call.1} parent=1 // pred_fallthru
      _
    // Predicated region
    $region26: #{tpu_custom_call.1} parent=1 // pred_check
      _
    $region27: #{tpu_custom_call.1} parent=1 // pred_check_branch
      %5334 = sbr.rel (0) target = $region29
    $region28: #{tpu_custom_call.1} parent=1 // pred_region
      %5336 = dma.done [#allocation4], 32
    $region29: #{tpu_custom_call.1} parent=1 // pred_fallthru
      _
    %5337 = vsyncpa [#allocation4], 1

</llo_original>
